<compile_context>
chip_gen: v5e
topology: v5e:2x2
jax: 0.10.0
libtpu: 0.0.40
codegen_flags: <defaults>
</compile_context>

<pallas_src>
import math

import jax
import jax.numpy as jnp
from jax.experimental import pallas as pl
from jax.experimental.pallas import tpu as pltpu

# ----------------------------- model dims -----------------------------------
B = 2
C = 128            # backbone channels (stands in for 2048)
H = W = 8          # backbone spatial (stands in for 7x7)
HW = H * W
RATIO = 8
CR = C // RATIO
P = 8              # num patches (stands in for 196)
D = 64             # projection_dim (as in the module)
NUM_HEADS = 4
DH = D // NUM_HEADS
N_LAYERS = 4
FC1 = 128          # stands in for 512
NUM_CLASSES = 4
BP = B * P

_VMEM = pl.BlockSpec(memory_space=pltpu.MemorySpace.VMEM)


# ----------------------------- in-kernel helpers -----------------------------
def _sigmoid(x):
    return 1.0 / (1.0 + jnp.exp(-x))


def _layernorm(x, eps=1e-5):
    m = jnp.mean(x, axis=-1, keepdims=True)
    v = jnp.mean((x - m) ** 2, axis=-1, keepdims=True)
    return (x - m) * jax.lax.rsqrt(v + eps)


# --------------------------- fused forward kernel ----------------------------
def fused_forward_kernel(
    x_ref,
    # CBAM
    cb_w1t_ref, cb_b1_ref, cb_w2t_ref, cb_b2_ref, acat_ref, convb_ref,
    # vit_dense (per-patch weight slabs)
    wd3_ref, bd3_ref,
    # token-layout permutations (patch-major <-> batch-major)
    perm_bm_ref, perm_pm_ref,
    # ViT, stacked over layers
    wqt_ref, bq_ref, wkt_ref, bk_ref, wvt_ref, bv_ref,
    wot_ref, bo_ref, wft_ref, bf_ref,
    # per-head reduce / broadcast helpers
    hsum_ref, hbc_ref,
    # head
    w1at_ref, w1b3_ref, bfc1_ref, w2t_ref, bfc2_ref,
    # output
    o_ref,
):
    f32 = jnp.float32

    # ------------- CBAM channel attention (shared MLP batched) --------------
    w1t = cb_w1t_ref[...]
    b1 = cb_b1_ref[...]
    w2t = cb_w2t_ref[...]
    b2 = cb_b2_ref[...]
    acat = acat_ref[...]          # (HW, 2*HW)  precomputed conv-as-matmul op
    convb = convb_ref[...]        # (1, 1)      conv bias

    xs = [x_ref[b] for b in range(B)]                       # each (HW, C)
    pooled = jnp.concatenate(
        [jnp.mean(xb, axis=0, keepdims=True) for xb in xs]
        + [jnp.max(xb, axis=0, keepdims=True) for xb in xs], axis=0)  # (2B, C)
    hid = jnp.maximum(
        jnp.dot(pooled, w1t, preferred_element_type=f32) + b1, 0.0)   # (2B, CR)
    mlp = jnp.dot(hid, w2t, preferred_element_type=f32) + b2          # (2B, C)
    ch_att = _sigmoid(mlp[0:B] + mlp[B:2 * B])                        # (B, C)

    # ---- CBAM spatial attention + AdaptiveAvgPool2d((1,1)), per batch ------
    xr_rows = []
    for b in range(B):
        xca = xs[b] * ch_att[b:b + 1]                       # (HW, C)
        avg_s = jnp.mean(xca, axis=1, keepdims=True)        # (HW, 1)
        max_s = jnp.max(xca, axis=1, keepdims=True)         # (HW, 1)
        sm = jnp.concatenate([avg_s, max_s], axis=0)        # (2*HW, 1)
        # 7x7 reflect-pad Conv2d(2->1) applied as one precomputed matmul.
        logit = jnp.dot(acat, sm, preferred_element_type=f32) + convb
        y = xca * _sigmoid(logit)                           # (HW, C)
        xr_rows.append(jnp.mean(y, axis=0, keepdims=True))  # (1, C)
    x_resnet = jnp.concatenate(xr_rows, axis=0)             # (B, C)

    # ------------- vit_dense: (B, C) -> tokens (B*P, D) ---------------------
    # Per-patch weight slabs avoid an in-kernel (B, P*D)->(B*P, D) reshape.
    z_blocks = []
    for p in range(P):
        z_blocks.append(
            jnp.dot(x_resnet, wd3_ref[p], preferred_element_type=f32)
            + bd3_ref[p])                                   # (B, D)
    x_pm = jnp.concatenate(z_blocks, axis=0)                # (P*B, D) patch-major
    x_tok = jnp.dot(perm_bm_ref[...], x_pm,
                    preferred_element_type=f32)             # (B*P, D) batch-major

    # ------------------------------ ViT layers ------------------------------
    hsum = hsum_ref[...]    # (D, NUM_HEADS) block-diag ones: per-head reduce
    hbc = hbc_ref[...]      # (NUM_HEADS, D): per-head broadcast
    sc = 1.0 / math.sqrt(DH)

    # NOTE: nn.MultiheadAttention default batch_first=False, so the reference
    # model treats the leading axis of the (B, P, D) tensor as the *sequence*
    # axis and P as the batch axis.  We reproduce exactly that: attention runs
    # over the B axis, independently for each patch p.
    for l in range(N_LAYERS):
        x1 = _layernorm(x_tok)                               # (B*P, D)
        q = (jnp.dot(x1, wqt_ref[l], preferred_element_type=f32)
             + bq_ref[l]) * sc
        k = jnp.dot(x1, wkt_ref[l], preferred_element_type=f32) + bk_ref[l]
        v = jnp.dot(x1, wvt_ref[l], preferred_element_type=f32) + bv_ref[l]

        qs = [q[i * P:(i + 1) * P] for i in range(B)]        # (P, D) per seq pos
        ks = [k[i * P:(i + 1) * P] for i in range(B)]

        attn_rows = []
        for i in range(B):
            # per-head scores for all key positions j at once: (B*P, H)
            prod = jnp.concatenate([qs[i] * ks[j] for j in range(B)], axis=0)
            s_all = jnp.dot(prod, hsum, preferred_element_type=f32)
            scores = [s_all[j * P:(j + 1) * P] for j in range(B)]
            m = scores[0]
            for j in range(1, B):
                m = jnp.maximum(m, scores[j])
            exps = [jnp.exp(s - m) for s in scores]
            den = exps[0]
            for j in range(1, B):
                den = den + exps[j]
            inv_den = pl.reciprocal(den, approx=True)
            probs = jnp.concatenate([e * inv_den for e in exps], axis=0)
            wfull = jnp.dot(probs, hbc, preferred_element_type=f32)  # (B*P, D)
            weighted = wfull * v
            a_i = weighted[0:P]
            for j in range(1, B):
                a_i = a_i + weighted[j * P:(j + 1) * P]
            attn_rows.append(a_i)                            # (P, D)
        attn = jnp.concatenate(attn_rows, axis=0)            # (B*P, D)
        attn = jnp.dot(attn, wot_ref[l], preferred_element_type=f32) + bo_ref[l]

        x2 = x_tok + attn
        x2n = _layernorm(x2)
        f = jnp.maximum(
            jnp.dot(x2n, wft_ref[l], preferred_element_type=f32) + bf_ref[l],
            0.0)
        x_tok = f + x_tok            # residual with the ORIGINAL x (as in spec)

    # -------- head: fc1 split (no concat, no flatten) -> relu -> fc2 --------
    h = jnp.dot(x_resnet, w1at_ref[...], preferred_element_type=f32) \
        + bfc1_ref[...]                                      # (B, FC1)
    x_pm_out = jnp.dot(perm_pm_ref[...], x_tok,
                       preferred_element_type=f32)           # (P*B, D) patch-major
    for p in range(P):
        h = h + jnp.dot(x_pm_out[p * B:(p + 1) * B], w1b3_ref[p],
                        preferred_element_type=f32)          # (B, FC1)
    h = jnp.maximum(h, 0.0)
    # TODO(synk): nn.Dropout(0.5) is identity in eval mode; not applied here.
    out = jnp.dot(h, w2t_ref[...], preferred_element_type=f32) + bfc2_ref[...]
    o_ref[...] = out                                         # (B, NUM_CLASSES)


# ------------------- glue: CBAM spatial conv as a linear operator ------------
def build_spatial_conv_operator(conv_w):
    """Turn the 7x7 reflect-pad Conv2d(2->1) into a single (HW, 2*HW) matrix so
    the conv runs as one matmul inside the kernel (exact, since it is linear).
    Built once from the weights (parameter setup, not data path)."""
    def conv_lin(avg_map, max_map):
        inp = jnp.stack([avg_map, max_map])[None]                  # (1,2,H,W)
        inp = jnp.pad(inp, ((0, 0), (0, 0), (3, 3), (3, 3)), mode="reflect")
        out = jax.lax.conv_general_dilated(
            inp, conv_w, window_strides=(1, 1), padding="VALID",
            dimension_numbers=("NCHW", "OIHW", "NCHW"))
        return out[0, 0]                                           # (H, W)

    eye = jnp.eye(HW, dtype=jnp.float32).reshape(HW, H, W)
    zeros = jnp.zeros((H, W), jnp.float32)
    resp_avg = jax.vmap(lambda e: conv_lin(e, zeros))(eye)         # (HW, H, W)
    resp_max = jax.vmap(lambda e: conv_lin(zeros, e))(eye)
    a_avg = resp_avg.reshape(HW, HW).T
    a_max = resp_max.reshape(HW, HW).T
    return jnp.concatenate([a_avg, a_max], axis=1)                 # (HW, 2*HW)


# ----------------------------- parameters ------------------------------------
def init_params(key):
    """Random parameters, stored KERNEL-READY (pre-transposed / stacked /
    reshaped) so the hot path does no layout work."""
    ks = iter(jax.random.split(key, 64))

    def nrm(shape, scale=0.02):
        return scale * jax.random.normal(next(ks), shape, jnp.float32)

    p = {}
    # CBAM
    w1 = nrm((CR, C)); b1 = nrm((CR,))        # shared_dense_one (out, in)
    w2 = nrm((C, CR)); b2 = nrm((C,))         # shared_dense_two
    conv_w = nrm((1, 2, 7, 7))                # Conv2d(2, 1, 7, pad=3, reflect)
    conv_b = nrm((1,))
    p["cb_w1t"] = w1.T
    p["cb_b1"] = b1.reshape(1, -1)
    p["cb_w2t"] = w2.T
    p["cb_b2"] = b2.reshape(1, -1)
    p["acat"] = build_spatial_conv_operator(conv_w)
    p["convb"] = conv_b.reshape(1, 1)

    # vit_dense as per-patch slabs: wd3[p, c, d] = W[p*D+d, c]
    wd = nrm((P * D, C)); bd = nrm((P * D,))
    p["wd3"] = wd.reshape(P, D, C).transpose(0, 2, 1)      # (P, C, D)
    p["bd3"] = bd.reshape(P, 1, D)

    # token-layout permutation matrices (patch-major <-> batch-major)
    rows = jnp.arange(BP)
    cols = (rows % P) * B + rows // P
    perm_bm = (jnp.arange(BP)[None, :] == cols[:, None]).astype(jnp.float32)
    p["perm_bm"] = perm_bm
    p["perm_pm"] = perm_bm.T

    # ViT: stacked, pre-transposed per-layer weights
    wq, bq, wk, bk, wv, bv, wo, bo, wf, bf = ([] for _ in range(10))
    for _ in range(N_LAYERS):
        in_w = nrm((3 * D, D)); in_b = nrm((3 * D,))
        wq.append(in_w[:D].T);        bq.append(in_b[:D].reshape(1, D))
        wk.append(in_w[D:2 * D].T);   bk.append(in_b[D:2 * D].reshape(1, D))
        wv.append(in_w[2 * D:].T);    bv.append(in_b[2 * D:].reshape(1, D))
        ow = nrm((D, D)); ob = nrm((D,))
        wo.append(ow.T); bo.append(ob.reshape(1, D))
        fw = nrm((D, D)); fb = nrm((D,))
        wf.append(fw.T); bf.append(fb.reshape(1, D))
    for name, lst in [("wqt", wq), ("bq", bq), ("wkt", wk), ("bk", bk),
                      ("wvt", wv), ("bv", bv), ("wot", wo), ("bo", bo),
                      ("wft", wf), ("bf", bf)]:
        p[name] = jnp.stack(lst)

    # per-head reduce / broadcast helper matrices (constants)
    hsum = (jnp.arange(D)[:, None] // DH ==
            jnp.arange(NUM_HEADS)[None, :]).astype(jnp.float32)     # (D, H)
    p["hsum"] = hsum
    p["hbc"] = hsum.T

    # head: fc1 split into resnet / vit blocks (folds away the concat), fc2
    fc1_w = nrm((FC1, C + P * D)); fc1_b = nrm((FC1,))
    p["w1at"] = fc1_w[:, :C].T                              # (C, FC1)
    p["w1b3"] = fc1_w[:, C:].T.reshape(P, D, FC1)           # (P, D, FC1)
    p["bfc1"] = fc1_b.reshape(1, -1)
    fc2_w = nrm((NUM_CLASSES, FC1)); fc2_b = nrm((NUM_CLASSES,))
    p["w2t"] = fc2_w.T
    p["bfc2"] = fc2_b.reshape(1, -1)
    return p


_OPERAND_ORDER = (
    "cb_w1t", "cb_b1", "cb_w2t", "cb_b2", "acat", "convb",
    "wd3", "bd3", "perm_bm", "perm_pm",
    "wqt", "bq", "wkt", "bk", "wvt", "bv", "wot", "bo", "wft", "bf",
    "hsum", "hbc", "w1at", "w1b3", "bfc1", "w2t", "bfc2",
)


# ------------------------------ forward pass ---------------------------------
@jax.jit
def hybrid_forward(x_feat, params):
    # x_feat: (B, C, H, W) NCHW backbone feature map -> (B, HW, C).
    x_sc = jnp.transpose(x_feat, (0, 2, 3, 1)).reshape(B, HW, C)
    operands = (x_sc,) + tuple(params[k] for k in _OPERAND_ORDER)
    return pl.pallas_call(
        fused_forward_kernel,
        out_shape=jax.ShapeDtypeStruct((B, NUM_CLASSES), jnp.float32),
        in_specs=[_VMEM] * len(operands),
        out_specs=_VMEM,
    )(*operands)


if __name__ == "__main__":
    key = jax.random.PRNGKey(0)
    pkey, xkey = jax.random.split(key)
    params = init_params(pkey)
    x_feat = jax.random.normal(xkey, (B, C, H, W), jnp.float32)  # NCHW features
    out = hybrid_forward(x_feat, params)
    out = jax.block_until_ready(out)
    assert out.shape == (B, NUM_CLASSES)
    print("KERNEL_OK")
</pallas_src>

<mosaic_0001>
module attributes {stable_mosaic.version = 11 : i64} {
  func.func @fused_forward_kernel(%arg0: memref<2x64x128xf32, #tpu.memory_space<vmem>>, %arg1: memref<128x16xf32, #tpu.memory_space<vmem>>, %arg2: memref<1x16xf32, #tpu.memory_space<vmem>>, %arg3: memref<16x128xf32, #tpu.memory_space<vmem>>, %arg4: memref<1x128xf32, #tpu.memory_space<vmem>>, %arg5: memref<64x128xf32, #tpu.memory_space<vmem>>, %arg6: memref<1x1xf32, #tpu.memory_space<vmem>>, %arg7: memref<8x128x64xf32, #tpu.memory_space<vmem>>, %arg8: memref<8x1x64xf32, #tpu.memory_space<vmem>>, %arg9: memref<16x16xf32, #tpu.memory_space<vmem>>, %arg10: memref<16x16xf32, #tpu.memory_space<vmem>>, %arg11: memref<4x64x64xf32, #tpu.memory_space<vmem>>, %arg12: memref<4x1x64xf32, #tpu.memory_space<vmem>>, %arg13: memref<4x64x64xf32, #tpu.memory_space<vmem>>, %arg14: memref<4x1x64xf32, #tpu.memory_space<vmem>>, %arg15: memref<4x64x64xf32, #tpu.memory_space<vmem>>, %arg16: memref<4x1x64xf32, #tpu.memory_space<vmem>>, %arg17: memref<4x64x64xf32, #tpu.memory_space<vmem>>, %arg18: memref<4x1x64xf32, #tpu.memory_space<vmem>>, %arg19: memref<4x64x64xf32, #tpu.memory_space<vmem>>, %arg20: memref<4x1x64xf32, #tpu.memory_space<vmem>>, %arg21: memref<64x4xf32, #tpu.memory_space<vmem>>, %arg22: memref<4x64xf32, #tpu.memory_space<vmem>>, %arg23: memref<128x128xf32, #tpu.memory_space<vmem>>, %arg24: memref<8x64x128xf32, #tpu.memory_space<vmem>>, %arg25: memref<1x128xf32, #tpu.memory_space<vmem>>, %arg26: memref<128x4xf32, #tpu.memory_space<vmem>>, %arg27: memref<1x4xf32, #tpu.memory_space<vmem>>, %arg28: memref<2x4xf32, #tpu.memory_space<vmem>>) attributes {dimension_semantics = [], scalar_prefetch = 0 : i64, scratch_operands = 0 : i64, tpu.core_type = #tpu.core_type<tc>} {
    %c0 = arith.constant 0 : index
    %c0_0 = arith.constant 0 : index
    %0 = vector.load %arg1[%c0, %c0_0] : memref<128x16xf32, #tpu.memory_space<vmem>>, vector<128x16xf32>
    %c0_1 = arith.constant 0 : index
    %c0_2 = arith.constant 0 : index
    %1 = vector.load %arg2[%c0_1, %c0_2] : memref<1x16xf32, #tpu.memory_space<vmem>>, vector<1x16xf32>
    %c0_3 = arith.constant 0 : index
    %c0_4 = arith.constant 0 : index
    %2 = vector.load %arg3[%c0_3, %c0_4] : memref<16x128xf32, #tpu.memory_space<vmem>>, vector<16x128xf32>
    %c0_5 = arith.constant 0 : index
    %c0_6 = arith.constant 0 : index
    %3 = vector.load %arg4[%c0_5, %c0_6] : memref<1x128xf32, #tpu.memory_space<vmem>>, vector<1x128xf32>
    %c0_7 = arith.constant 0 : index
    %c0_8 = arith.constant 0 : index
    %4 = vector.load %arg5[%c0_7, %c0_8] : memref<64x128xf32, #tpu.memory_space<vmem>>, vector<64x128xf32>
    %c0_9 = arith.constant 0 : index
    %c0_10 = arith.constant 0 : index
    %5 = vector.load %arg6[%c0_9, %c0_10] : memref<1x1xf32, #tpu.memory_space<vmem>>, vector<1x1xf32>
    %c0_11 = arith.constant 0 : index
    %c0_12 = arith.constant 0 : index
    %c0_13 = arith.constant 0 : index
    %6 = vector.load %arg0[%c0_11, %c0_12, %c0_13] : memref<2x64x128xf32, #tpu.memory_space<vmem>>, vector<1x64x128xf32>
    %7 = vector.shape_cast %6 : vector<1x64x128xf32> to vector<64x128xf32>
    %c1 = arith.constant 1 : index
    %c0_14 = arith.constant 0 : index
    %c0_15 = arith.constant 0 : index
    %8 = vector.load %arg0[%c1, %c0_14, %c0_15] : memref<2x64x128xf32, #tpu.memory_space<vmem>>, vector<1x64x128xf32>
    %9 = vector.shape_cast %8 : vector<1x64x128xf32> to vector<64x128xf32>
    %cst = arith.constant dense<0.000000e+00> : vector<128xf32>
    %10 = vector.multi_reduction <add>, %7, %cst [0] : vector<64x128xf32> to vector<128xf32>
    %11 = vector.shape_cast %10 : vector<128xf32> to vector<1x128xf32>
    %cst_16 = arith.constant 6.400000e+01 : f32
    %12 = vector.broadcast %cst_16 : f32 to vector<1x128xf32>
    %13 = arith.divf %11, %12 : vector<1x128xf32>
    %cst_17 = arith.constant dense<0.000000e+00> : vector<128xf32>
    %14 = vector.multi_reduction <add>, %9, %cst_17 [0] : vector<64x128xf32> to vector<128xf32>
    %15 = vector.shape_cast %14 : vector<128xf32> to vector<1x128xf32>
    %cst_18 = arith.constant 6.400000e+01 : f32
    %16 = vector.broadcast %cst_18 : f32 to vector<1x128xf32>
    %17 = arith.divf %15, %16 : vector<1x128xf32>
    %cst_19 = arith.constant dense<0xFF800000> : vector<128xf32>
    %18 = vector.multi_reduction <maximumf>, %7, %cst_19 [0] : vector<64x128xf32> to vector<128xf32>
    %19 = vector.shape_cast %18 : vector<128xf32> to vector<1x128xf32>
    %cst_20 = arith.constant dense<0xFF800000> : vector<128xf32>
    %20 = vector.multi_reduction <maximumf>, %9, %cst_20 [0] : vector<64x128xf32> to vector<128xf32>
    %21 = vector.shape_cast %20 : vector<128xf32> to vector<1x128xf32>
    %22 = tpu.concatenate %13, %17, %19, %21 in 0 : vector<1x128xf32>, vector<1x128xf32>, vector<1x128xf32>, vector<1x128xf32> -> vector<4x128xf32>
    %cst_21 = arith.constant dense<0.000000e+00> : vector<4x16xf32>
    %23 = tpu.matmul %22, %0, %cst_21 {dimension_numbers = #tpu.dot_dimension_numbers<[1], [0], [0], [1], [0, 0, 1, 1], [], []>} : vector<4x128xf32>, vector<128x16xf32>, vector<4x16xf32> -> vector<4x16xf32>
    %24 = vector.broadcast %1 : vector<1x16xf32> to vector<4x16xf32>
    %25 = arith.addf %23, %24 : vector<4x16xf32>
    %cst_22 = arith.constant 0.000000e+00 : f32
    %26 = vector.broadcast %cst_22 : f32 to vector<4x16xf32>
    %27 = arith.maximumf %25, %26 : vector<4x16xf32>
    %cst_23 = arith.constant dense<0.000000e+00> : vector<4x128xf32>
    %28 = tpu.matmul %27, %2, %cst_23 {dimension_numbers = #tpu.dot_dimension_numbers<[1], [0], [0], [1], [0, 0, 1, 1], [], []>} : vector<4x16xf32>, vector<16x128xf32>, vector<4x128xf32> -> vector<4x128xf32>
    %29 = vector.broadcast %3 : vector<1x128xf32> to vector<4x128xf32>
    %30 = arith.addf %28, %29 : vector<4x128xf32>
    %31 = vector.extract_strided_slice %30 {offsets = [0, 0], sizes = [2, 128], strides = [1, 1]} : vector<4x128xf32> to vector<2x128xf32>
    %32 = vector.extract_strided_slice %30 {offsets = [2, 0], sizes = [2, 128], strides = [1, 1]} : vector<4x128xf32> to vector<2x128xf32>
    %33 = arith.addf %31, %32 : vector<2x128xf32>
    %cst_24 = arith.constant 0.000000e+00 : f32
    %34 = vector.broadcast %cst_24 : f32 to vector<2x128xf32>
    %35 = arith.subf %34, %33 : vector<2x128xf32>
    %36 = math.exp %35 : vector<2x128xf32>
    %cst_25 = arith.constant 1.000000e+00 : f32
    %37 = vector.broadcast %cst_25 : f32 to vector<2x128xf32>
    %38 = arith.addf %37, %36 : vector<2x128xf32>
    %cst_26 = arith.constant 1.000000e+00 : f32
    %39 = vector.broadcast %cst_26 : f32 to vector<2x128xf32>
    %40 = arith.divf %39, %38 : vector<2x128xf32>
    %41 = vector.extract_strided_slice %40 {offsets = [0, 0], sizes = [1, 128], strides = [1, 1]} : vector<2x128xf32> to vector<1x128xf32>
    %42 = vector.broadcast %41 : vector<1x128xf32> to vector<64x128xf32>
    %43 = arith.mulf %7, %42 : vector<64x128xf32>
    %cst_27 = arith.constant dense<0.000000e+00> : vector<64xf32>
    %44 = vector.multi_reduction <add>, %43, %cst_27 [1] : vector<64x128xf32> to vector<64xf32>
    %45 = vector.shape_cast %44 : vector<64xf32> to vector<64x1xf32>
    %cst_28 = arith.constant 1.280000e+02 : f32
    %46 = vector.broadcast %cst_28 : f32 to vector<64x1xf32>
    %47 = arith.divf %45, %46 : vector<64x1xf32>
    %cst_29 = arith.constant dense<0xFF800000> : vector<64xf32>
    %48 = vector.multi_reduction <maximumf>, %43, %cst_29 [1] : vector<64x128xf32> to vector<64xf32>
    %49 = vector.shape_cast %48 : vector<64xf32> to vector<64x1xf32>
    %50 = tpu.concatenate %47, %49 in 0 : vector<64x1xf32>, vector<64x1xf32> -> vector<128x1xf32>
    %cst_30 = arith.constant dense<0.000000e+00> : vector<64x1xf32>
    %51 = tpu.matmul %4, %50, %cst_30 {dimension_numbers = #tpu.dot_dimension_numbers<[1], [0], [0], [1], [0, 0, 1, 1], [], []>} : vector<64x128xf32>, vector<128x1xf32>, vector<64x1xf32> -> vector<64x1xf32>
    %52 = vector.broadcast %5 : vector<1x1xf32> to vector<64x1xf32>
    %53 = arith.addf %51, %52 : vector<64x1xf32>
    %cst_31 = arith.constant 0.000000e+00 : f32
    %54 = vector.broadcast %cst_31 : f32 to vector<64x1xf32>
    %55 = arith.subf %54, %53 : vector<64x1xf32>
    %56 = math.exp %55 : vector<64x1xf32>
    %cst_32 = arith.constant 1.000000e+00 : f32
    %57 = vector.broadcast %cst_32 : f32 to vector<64x1xf32>
    %58 = arith.addf %57, %56 : vector<64x1xf32>
    %cst_33 = arith.constant 1.000000e+00 : f32
    %59 = vector.broadcast %cst_33 : f32 to vector<64x1xf32>
    %60 = arith.divf %59, %58 : vector<64x1xf32>
    %61 = vector.broadcast %60 : vector<64x1xf32> to vector<64x128xf32>
    %62 = arith.mulf %43, %61 : vector<64x128xf32>
    %cst_34 = arith.constant dense<0.000000e+00> : vector<128xf32>
    %63 = vector.multi_reduction <add>, %62, %cst_34 [0] : vector<64x128xf32> to vector<128xf32>
    %64 = vector.shape_cast %63 : vector<128xf32> to vector<1x128xf32>
    %cst_35 = arith.constant 6.400000e+01 : f32
    %65 = vector.broadcast %cst_35 : f32 to vector<1x128xf32>
    %66 = arith.divf %64, %65 : vector<1x128xf32>
    %67 = vector.extract_strided_slice %40 {offsets = [1, 0], sizes = [1, 128], strides = [1, 1]} : vector<2x128xf32> to vector<1x128xf32>
    %68 = vector.broadcast %67 : vector<1x128xf32> to vector<64x128xf32>
    %69 = arith.mulf %9, %68 : vector<64x128xf32>
    %cst_36 = arith.constant dense<0.000000e+00> : vector<64xf32>
    %70 = vector.multi_reduction <add>, %69, %cst_36 [1] : vector<64x128xf32> to vector<64xf32>
    %71 = vector.shape_cast %70 : vector<64xf32> to vector<64x1xf32>
    %cst_37 = arith.constant 1.280000e+02 : f32
    %72 = vector.broadcast %cst_37 : f32 to vector<64x1xf32>
    %73 = arith.divf %71, %72 : vector<64x1xf32>
    %cst_38 = arith.constant dense<0xFF800000> : vector<64xf32>
    %74 = vector.multi_reduction <maximumf>, %69, %cst_38 [1] : vector<64x128xf32> to vector<64xf32>
    %75 = vector.shape_cast %74 : vector<64xf32> to vector<64x1xf32>
    %76 = tpu.concatenate %73, %75 in 0 : vector<64x1xf32>, vector<64x1xf32> -> vector<128x1xf32>
    %cst_39 = arith.constant dense<0.000000e+00> : vector<64x1xf32>
    %77 = tpu.matmul %4, %76, %cst_39 {dimension_numbers = #tpu.dot_dimension_numbers<[1], [0], [0], [1], [0, 0, 1, 1], [], []>} : vector<64x128xf32>, vector<128x1xf32>, vector<64x1xf32> -> vector<64x1xf32>
    %78 = vector.broadcast %5 : vector<1x1xf32> to vector<64x1xf32>
    %79 = arith.addf %77, %78 : vector<64x1xf32>
    %cst_40 = arith.constant 0.000000e+00 : f32
    %80 = vector.broadcast %cst_40 : f32 to vector<64x1xf32>
    %81 = arith.subf %80, %79 : vector<64x1xf32>
    %82 = math.exp %81 : vector<64x1xf32>
    %cst_41 = arith.constant 1.000000e+00 : f32
    %83 = vector.broadcast %cst_41 : f32 to vector<64x1xf32>
    %84 = arith.addf %83, %82 : vector<64x1xf32>
    %cst_42 = arith.constant 1.000000e+00 : f32
    %85 = vector.broadcast %cst_42 : f32 to vector<64x1xf32>
    %86 = arith.divf %85, %84 : vector<64x1xf32>
    %87 = vector.broadcast %86 : vector<64x1xf32> to vector<64x128xf32>
    %88 = arith.mulf %69, %87 : vector<64x128xf32>
    %cst_43 = arith.constant dense<0.000000e+00> : vector<128xf32>
    %89 = vector.multi_reduction <add>, %88, %cst_43 [0] : vector<64x128xf32> to vector<128xf32>
    %90 = vector.shape_cast %89 : vector<128xf32> to vector<1x128xf32>
    %cst_44 = arith.constant 6.400000e+01 : f32
    %91 = vector.broadcast %cst_44 : f32 to vector<1x128xf32>
    %92 = arith.divf %90, %91 : vector<1x128xf32>
    %93 = tpu.concatenate %66, %92 in 0 : vector<1x128xf32>, vector<1x128xf32> -> vector<2x128xf32>
    %c0_45 = arith.constant 0 : index
    %c0_46 = arith.constant 0 : index
    %c0_47 = arith.constant 0 : index
    %94 = vector.load %arg7[%c0_45, %c0_46, %c0_47] : memref<8x128x64xf32, #tpu.memory_space<vmem>>, vector<1x128x64xf32>
    %95 = vector.shape_cast %94 : vector<1x128x64xf32> to vector<128x64xf32>
    %cst_48 = arith.constant dense<0.000000e+00> : vector<2x64xf32>
    %96 = tpu.matmul %93, %95, %cst_48 {dimension_numbers = #tpu.dot_dimension_numbers<[1], [0], [0], [1], [0, 0, 1, 1], [], []>} : vector<2x128xf32>, vector<128x64xf32>, vector<2x64xf32> -> vector<2x64xf32>
    %c0_49 = arith.constant 0 : index
    %c0_50 = arith.constant 0 : index
    %c0_51 = arith.constant 0 : index
    %97 = vector.load %arg8[%c0_49, %c0_50, %c0_51] : memref<8x1x64xf32, #tpu.memory_space<vmem>>, vector<1x1x64xf32>
    %98 = vector.shape_cast %97 : vector<1x1x64xf32> to vector<1x64xf32>
    %99 = vector.broadcast %98 : vector<1x64xf32> to vector<2x64xf32>
    %100 = arith.addf %96, %99 : vector<2x64xf32>
    %c1_52 = arith.constant 1 : index
    %c0_53 = arith.constant 0 : index
    %c0_54 = arith.constant 0 : index
    %101 = vector.load %arg7[%c1_52, %c0_53, %c0_54] : memref<8x128x64xf32, #tpu.memory_space<vmem>>, vector<1x128x64xf32>
    %102 = vector.shape_cast %101 : vector<1x128x64xf32> to vector<128x64xf32>
    %cst_55 = arith.constant dense<0.000000e+00> : vector<2x64xf32>
    %103 = tpu.matmul %93, %102, %cst_55 {dimension_numbers = #tpu.dot_dimension_numbers<[1], [0], [0], [1], [0, 0, 1, 1], [], []>} : vector<2x128xf32>, vector<128x64xf32>, vector<2x64xf32> -> vector<2x64xf32>
    %c1_56 = arith.constant 1 : index
    %c0_57 = arith.constant 0 : index
    %c0_58 = arith.constant 0 : index
    %104 = vector.load %arg8[%c1_56, %c0_57, %c0_58] : memref<8x1x64xf32, #tpu.memory_space<vmem>>, vector<1x1x64xf32>
    %105 = vector.shape_cast %104 : vector<1x1x64xf32> to vector<1x64xf32>
    %106 = vector.broadcast %105 : vector<1x64xf32> to vector<2x64xf32>
    %107 = arith.addf %103, %106 : vector<2x64xf32>
    %c2 = arith.constant 2 : index
    %c0_59 = arith.constant 0 : index
    %c0_60 = arith.constant 0 : index
    %108 = vector.load %arg7[%c2, %c0_59, %c0_60] : memref<8x128x64xf32, #tpu.memory_space<vmem>>, vector<1x128x64xf32>
    %109 = vector.shape_cast %108 : vector<1x128x64xf32> to vector<128x64xf32>
    %cst_61 = arith.constant dense<0.000000e+00> : vector<2x64xf32>
    %110 = tpu.matmul %93, %109, %cst_61 {dimension_numbers = #tpu.dot_dimension_numbers<[1], [0], [0], [1], [0, 0, 1, 1], [], []>} : vector<2x128xf32>, vector<128x64xf32>, vector<2x64xf32> -> vector<2x64xf32>
    %c2_62 = arith.constant 2 : index
    %c0_63 = arith.constant 0 : index
    %c0_64 = arith.constant 0 : index
    %111 = vector.load %arg8[%c2_62, %c0_63, %c0_64] : memref<8x1x64xf32, #tpu.memory_space<vmem>>, vector<1x1x64xf32>
    %112 = vector.shape_cast %111 : vector<1x1x64xf32> to vector<1x64xf32>
    %113 = vector.broadcast %112 : vector<1x64xf32> to vector<2x64xf32>
    %114 = arith.addf %110, %113 : vector<2x64xf32>
    %c3 = arith.constant 3 : index
    %c0_65 = arith.constant 0 : index
    %c0_66 = arith.constant 0 : index
    %115 = vector.load %arg7[%c3, %c0_65, %c0_66] : memref<8x128x64xf32, #tpu.memory_space<vmem>>, vector<1x128x64xf32>
    %116 = vector.shape_cast %115 : vector<1x128x64xf32> to vector<128x64xf32>
    %cst_67 = arith.constant dense<0.000000e+00> : vector<2x64xf32>
    %117 = tpu.matmul %93, %116, %cst_67 {dimension_numbers = #tpu.dot_dimension_numbers<[1], [0], [0], [1], [0, 0, 1, 1], [], []>} : vector<2x128xf32>, vector<128x64xf32>, vector<2x64xf32> -> vector<2x64xf32>
    %c3_68 = arith.constant 3 : index
    %c0_69 = arith.constant 0 : index
    %c0_70 = arith.constant 0 : index
    %118 = vector.load %arg8[%c3_68, %c0_69, %c0_70] : memref<8x1x64xf32, #tpu.memory_space<vmem>>, vector<1x1x64xf32>
    %119 = vector.shape_cast %118 : vector<1x1x64xf32> to vector<1x64xf32>
    %120 = vector.broadcast %119 : vector<1x64xf32> to vector<2x64xf32>
    %121 = arith.addf %117, %120 : vector<2x64xf32>
    %c4 = arith.constant 4 : index
    %c0_71 = arith.constant 0 : index
    %c0_72 = arith.constant 0 : index
    %122 = vector.load %arg7[%c4, %c0_71, %c0_72] : memref<8x128x64xf32, #tpu.memory_space<vmem>>, vector<1x128x64xf32>
    %123 = vector.shape_cast %122 : vector<1x128x64xf32> to vector<128x64xf32>
    %cst_73 = arith.constant dense<0.000000e+00> : vector<2x64xf32>
    %124 = tpu.matmul %93, %123, %cst_73 {dimension_numbers = #tpu.dot_dimension_numbers<[1], [0], [0], [1], [0, 0, 1, 1], [], []>} : vector<2x128xf32>, vector<128x64xf32>, vector<2x64xf32> -> vector<2x64xf32>
    %c4_74 = arith.constant 4 : index
    %c0_75 = arith.constant 0 : index
    %c0_76 = arith.constant 0 : index
    %125 = vector.load %arg8[%c4_74, %c0_75, %c0_76] : memref<8x1x64xf32, #tpu.memory_space<vmem>>, vector<1x1x64xf32>
    %126 = vector.shape_cast %125 : vector<1x1x64xf32> to vector<1x64xf32>
    %127 = vector.broadcast %126 : vector<1x64xf32> to vector<2x64xf32>
    %128 = arith.addf %124, %127 : vector<2x64xf32>
    %c5 = arith.constant 5 : index
    %c0_77 = arith.constant 0 : index
    %c0_78 = arith.constant 0 : index
    %129 = vector.load %arg7[%c5, %c0_77, %c0_78] : memref<8x128x64xf32, #tpu.memory_space<vmem>>, vector<1x128x64xf32>
    %130 = vector.shape_cast %129 : vector<1x128x64xf32> to vector<128x64xf32>
    %cst_79 = arith.constant dense<0.000000e+00> : vector<2x64xf32>
    %131 = tpu.matmul %93, %130, %cst_79 {dimension_numbers = #tpu.dot_dimension_numbers<[1], [0], [0], [1], [0, 0, 1, 1], [], []>} : vector<2x128xf32>, vector<128x64xf32>, vector<2x64xf32> -> vector<2x64xf32>
    %c5_80 = arith.constant 5 : index
    %c0_81 = arith.constant 0 : index
    %c0_82 = arith.constant 0 : index
    %132 = vector.load %arg8[%c5_80, %c0_81, %c0_82] : memref<8x1x64xf32, #tpu.memory_space<vmem>>, vector<1x1x64xf32>
    %133 = vector.shape_cast %132 : vector<1x1x64xf32> to vector<1x64xf32>
    %134 = vector.broadcast %133 : vector<1x64xf32> to vector<2x64xf32>
    %135 = arith.addf %131, %134 : vector<2x64xf32>
    %c6 = arith.constant 6 : index
    %c0_83 = arith.constant 0 : index
    %c0_84 = arith.constant 0 : index
    %136 = vector.load %arg7[%c6, %c0_83, %c0_84] : memref<8x128x64xf32, #tpu.memory_space<vmem>>, vector<1x128x64xf32>
    %137 = vector.shape_cast %136 : vector<1x128x64xf32> to vector<128x64xf32>
    %cst_85 = arith.constant dense<0.000000e+00> : vector<2x64xf32>
    %138 = tpu.matmul %93, %137, %cst_85 {dimension_numbers = #tpu.dot_dimension_numbers<[1], [0], [0], [1], [0, 0, 1, 1], [], []>} : vector<2x128xf32>, vector<128x64xf32>, vector<2x64xf32> -> vector<2x64xf32>
    %c6_86 = arith.constant 6 : index
    %c0_87 = arith.constant 0 : index
    %c0_88 = arith.constant 0 : index
    %139 = vector.load %arg8[%c6_86, %c0_87, %c0_88] : memref<8x1x64xf32, #tpu.memory_space<vmem>>, vector<1x1x64xf32>
    %140 = vector.shape_cast %139 : vector<1x1x64xf32> to vector<1x64xf32>
    %141 = vector.broadcast %140 : vector<1x64xf32> to vector<2x64xf32>
    %142 = arith.addf %138, %141 : vector<2x64xf32>
    %c7 = arith.constant 7 : index
    %c0_89 = arith.constant 0 : index
    %c0_90 = arith.constant 0 : index
    %143 = vector.load %arg7[%c7, %c0_89, %c0_90] : memref<8x128x64xf32, #tpu.memory_space<vmem>>, vector<1x128x64xf32>
    %144 = vector.shape_cast %143 : vector<1x128x64xf32> to vector<128x64xf32>
    %cst_91 = arith.constant dense<0.000000e+00> : vector<2x64xf32>
    %145 = tpu.matmul %93, %144, %cst_91 {dimension_numbers = #tpu.dot_dimension_numbers<[1], [0], [0], [1], [0, 0, 1, 1], [], []>} : vector<2x128xf32>, vector<128x64xf32>, vector<2x64xf32> -> vector<2x64xf32>
    %c7_92 = arith.constant 7 : index
    %c0_93 = arith.constant 0 : index
    %c0_94 = arith.constant 0 : index
    %146 = vector.load %arg8[%c7_92, %c0_93, %c0_94] : memref<8x1x64xf32, #tpu.memory_space<vmem>>, vector<1x1x64xf32>
    %147 = vector.shape_cast %146 : vector<1x1x64xf32> to vector<1x64xf32>
    %148 = vector.broadcast %147 : vector<1x64xf32> to vector<2x64xf32>
    %149 = arith.addf %145, %148 : vector<2x64xf32>
    %150 = tpu.concatenate %100, %107, %114, %121, %128, %135, %142, %149 in 0 : vector<2x64xf32>, vector<2x64xf32>, vector<2x64xf32>, vector<2x64xf32>, vector<2x64xf32>, vector<2x64xf32>, vector<2x64xf32>, vector<2x64xf32> -> vector<16x64xf32>
    %c0_95 = arith.constant 0 : index
    %c0_96 = arith.constant 0 : index
    %151 = vector.load %arg9[%c0_95, %c0_96] : memref<16x16xf32, #tpu.memory_space<vmem>>, vector<16x16xf32>
    %cst_97 = arith.constant dense<0.000000e+00> : vector<16x64xf32>
    %152 = tpu.matmul %151, %150, %cst_97 {dimension_numbers = #tpu.dot_dimension_numbers<[1], [0], [0], [1], [0, 0, 1, 1], [], []>} : vector<16x16xf32>, vector<16x64xf32>, vector<16x64xf32> -> vector<16x64xf32>
    %c0_98 = arith.constant 0 : index
    %c0_99 = arith.constant 0 : index
    %153 = vector.load %arg21[%c0_98, %c0_99] : memref<64x4xf32, #tpu.memory_space<vmem>>, vector<64x4xf32>
    %c0_100 = arith.constant 0 : index
    %c0_101 = arith.constant 0 : index
    %154 = vector.load %arg22[%c0_100, %c0_101] : memref<4x64xf32, #tpu.memory_space<vmem>>, vector<4x64xf32>
    %cst_102 = arith.constant dense<0.000000e+00> : vector<16xf32>
    %155 = vector.multi_reduction <add>, %152, %cst_102 [1] : vector<16x64xf32> to vector<16xf32>
    %156 = vector.shape_cast %155 : vector<16xf32> to vector<16x1xf32>
    %cst_103 = arith.constant 6.400000e+01 : f32
    %157 = vector.broadcast %cst_103 : f32 to vector<16x1xf32>
    %158 = arith.divf %156, %157 : vector<16x1xf32>
    %159 = vector.broadcast %158 : vector<16x1xf32> to vector<16x64xf32>
    %160 = arith.subf %152, %159 : vector<16x64xf32>
    %161 = arith.mulf %160, %160 : vector<16x64xf32>
    %cst_104 = arith.constant dense<0.000000e+00> : vector<16xf32>
    %162 = vector.multi_reduction <add>, %161, %cst_104 [1] : vector<16x64xf32> to vector<16xf32>
    %163 = vector.shape_cast %162 : vector<16xf32> to vector<16x1xf32>
    %cst_105 = arith.constant 6.400000e+01 : f32
    %164 = vector.broadcast %cst_105 : f32 to vector<16x1xf32>
    %165 = arith.divf %163, %164 : vector<16x1xf32>
    %166 = vector.broadcast %158 : vector<16x1xf32> to vector<16x64xf32>
    %167 = arith.subf %152, %166 : vector<16x64xf32>
    %cst_106 = arith.constant 9.99999974E-6 : f32
    %168 = vector.broadcast %cst_106 : f32 to vector<16x1xf32>
    %169 = arith.addf %165, %168 : vector<16x1xf32>
    %170 = math.rsqrt %169 : vector<16x1xf32>
    %171 = vector.broadcast %170 : vector<16x1xf32> to vector<16x64xf32>
    %172 = arith.mulf %167, %171 : vector<16x64xf32>
    %c0_107 = arith.constant 0 : index
    %c0_108 = arith.constant 0 : index
    %c0_109 = arith.constant 0 : index
    %173 = vector.load %arg11[%c0_107, %c0_108, %c0_109] : memref<4x64x64xf32, #tpu.memory_space<vmem>>, vector<1x64x64xf32>
    %174 = vector.shape_cast %173 : vector<1x64x64xf32> to vector<64x64xf32>
    %cst_110 = arith.constant dense<0.000000e+00> : vector<16x64xf32>
    %175 = tpu.matmul %172, %174, %cst_110 {dimension_numbers = #tpu.dot_dimension_numbers<[1], [0], [0], [1], [0, 0, 1, 1], [], []>} : vector<16x64xf32>, vector<64x64xf32>, vector<16x64xf32> -> vector<16x64xf32>
    %c0_111 = arith.constant 0 : index
    %c0_112 = arith.constant 0 : index
    %c0_113 = arith.constant 0 : index
    %176 = vector.load %arg12[%c0_111, %c0_112, %c0_113] : memref<4x1x64xf32, #tpu.memory_space<vmem>>, vector<1x1x64xf32>
    %177 = vector.shape_cast %176 : vector<1x1x64xf32> to vector<1x64xf32>
    %178 = vector.broadcast %177 : vector<1x64xf32> to vector<16x64xf32>
    %179 = arith.addf %175, %178 : vector<16x64xf32>
    %cst_114 = arith.constant 2.500000e-01 : f32
    %180 = vector.broadcast %cst_114 : f32 to vector<16x64xf32>
    %181 = arith.mulf %179, %180 : vector<16x64xf32>
    %c0_115 = arith.constant 0 : index
    %c0_116 = arith.constant 0 : index
    %c0_117 = arith.constant 0 : index
    %182 = vector.load %arg13[%c0_115, %c0_116, %c0_117] : memref<4x64x64xf32, #tpu.memory_space<vmem>>, vector<1x64x64xf32>
    %183 = vector.shape_cast %182 : vector<1x64x64xf32> to vector<64x64xf32>
    %cst_118 = arith.constant dense<0.000000e+00> : vector<16x64xf32>
    %184 = tpu.matmul %172, %183, %cst_118 {dimension_numbers = #tpu.dot_dimension_numbers<[1], [0], [0], [1], [0, 0, 1, 1], [], []>} : vector<16x64xf32>, vector<64x64xf32>, vector<16x64xf32> -> vector<16x64xf32>
    %c0_119 = arith.constant 0 : index
    %c0_120 = arith.constant 0 : index
    %c0_121 = arith.constant 0 : index
    %185 = vector.load %arg14[%c0_119, %c0_120, %c0_121] : memref<4x1x64xf32, #tpu.memory_space<vmem>>, vector<1x1x64xf32>
    %186 = vector.shape_cast %185 : vector<1x1x64xf32> to vector<1x64xf32>
    %187 = vector.broadcast %186 : vector<1x64xf32> to vector<16x64xf32>
    %188 = arith.addf %184, %187 : vector<16x64xf32>
    %c0_122 = arith.constant 0 : index
    %c0_123 = arith.constant 0 : index
    %c0_124 = arith.constant 0 : index
    %189 = vector.load %arg15[%c0_122, %c0_123, %c0_124] : memref<4x64x64xf32, #tpu.memory_space<vmem>>, vector<1x64x64xf32>
    %190 = vector.shape_cast %189 : vector<1x64x64xf32> to vector<64x64xf32>
    %cst_125 = arith.constant dense<0.000000e+00> : vector<16x64xf32>
    %191 = tpu.matmul %172, %190, %cst_125 {dimension_numbers = #tpu.dot_dimension_numbers<[1], [0], [0], [1], [0, 0, 1, 1], [], []>} : vector<16x64xf32>, vector<64x64xf32>, vector<16x64xf32> -> vector<16x64xf32>
    %c0_126 = arith.constant 0 : index
    %c0_127 = arith.constant 0 : index
    %c0_128 = arith.constant 0 : index
    %192 = vector.load %arg16[%c0_126, %c0_127, %c0_128] : memref<4x1x64xf32, #tpu.memory_space<vmem>>, vector<1x1x64xf32>
    %193 = vector.shape_cast %192 : vector<1x1x64xf32> to vector<1x64xf32>
    %194 = vector.broadcast %193 : vector<1x64xf32> to vector<16x64xf32>
    %195 = arith.addf %191, %194 : vector<16x64xf32>
    %196 = vector.extract_strided_slice %181 {offsets = [0, 0], sizes = [8, 64], strides = [1, 1]} : vector<16x64xf32> to vector<8x64xf32>
    %197 = vector.extract_strided_slice %181 {offsets = [8, 0], sizes = [8, 64], strides = [1, 1]} : vector<16x64xf32> to vector<8x64xf32>
    %198 = vector.extract_strided_slice %188 {offsets = [0, 0], sizes = [8, 64], strides = [1, 1]} : vector<16x64xf32> to vector<8x64xf32>
    %199 = vector.extract_strided_slice %188 {offsets = [8, 0], sizes = [8, 64], strides = [1, 1]} : vector<16x64xf32> to vector<8x64xf32>
    %200 = arith.mulf %196, %198 : vector<8x64xf32>
    %201 = arith.mulf %196, %199 : vector<8x64xf32>
    %202 = tpu.concatenate %200, %201 in 0 : vector<8x64xf32>, vector<8x64xf32> -> vector<16x64xf32>
    %cst_129 = arith.constant dense<0.000000e+00> : vector<16x4xf32>
    %203 = tpu.matmul %202, %153, %cst_129 {dimension_numbers = #tpu.dot_dimension_numbers<[1], [0], [0], [1], [0, 0, 1, 1], [], []>} : vector<16x64xf32>, vector<64x4xf32>, vector<16x4xf32> -> vector<16x4xf32>
    %204 = vector.extract_strided_slice %203 {offsets = [0, 0], sizes = [8, 4], strides = [1, 1]} : vector<16x4xf32> to vector<8x4xf32>
    %205 = vector.extract_strided_slice %203 {offsets = [8, 0], sizes = [8, 4], strides = [1, 1]} : vector<16x4xf32> to vector<8x4xf32>
    %206 = arith.maximumf %204, %205 : vector<8x4xf32>
    %207 = arith.subf %204, %206 : vector<8x4xf32>
    %208 = math.exp %207 : vector<8x4xf32>
    %209 = arith.subf %205, %206 : vector<8x4xf32>
    %210 = math.exp %209 : vector<8x4xf32>
    %211 = arith.addf %208, %210 : vector<8x4xf32>
    %212 = tpu.reciprocal %211 {approx = true} : vector<8x4xf32> -> vector<8x4xf32>
    %213 = arith.mulf %208, %212 : vector<8x4xf32>
    %214 = arith.mulf %210, %212 : vector<8x4xf32>
    %215 = tpu.concatenate %213, %214 in 0 : vector<8x4xf32>, vector<8x4xf32> -> vector<16x4xf32>
    %cst_130 = arith.constant dense<0.000000e+00> : vector<16x64xf32>
    %216 = tpu.matmul %215, %154, %cst_130 {dimension_numbers = #tpu.dot_dimension_numbers<[1], [0], [0], [1], [0, 0, 1, 1], [], []>} : vector<16x4xf32>, vector<4x64xf32>, vector<16x64xf32> -> vector<16x64xf32>
    %217 = arith.mulf %216, %195 : vector<16x64xf32>
    %218 = vector.extract_strided_slice %217 {offsets = [0, 0], sizes = [8, 64], strides = [1, 1]} : vector<16x64xf32> to vector<8x64xf32>
    %219 = vector.extract_strided_slice %217 {offsets = [8, 0], sizes = [8, 64], strides = [1, 1]} : vector<16x64xf32> to vector<8x64xf32>
    %220 = arith.addf %218, %219 : vector<8x64xf32>
    %221 = arith.mulf %197, %198 : vector<8x64xf32>
    %222 = arith.mulf %197, %199 : vector<8x64xf32>
    %223 = tpu.concatenate %221, %222 in 0 : vector<8x64xf32>, vector<8x64xf32> -> vector<16x64xf32>
    %cst_131 = arith.constant dense<0.000000e+00> : vector<16x4xf32>
    %224 = tpu.matmul %223, %153, %cst_131 {dimension_numbers = #tpu.dot_dimension_numbers<[1], [0], [0], [1], [0, 0, 1, 1], [], []>} : vector<16x64xf32>, vector<64x4xf32>, vector<16x4xf32> -> vector<16x4xf32>
    %225 = vector.extract_strided_slice %224 {offsets = [0, 0], sizes = [8, 4], strides = [1, 1]} : vector<16x4xf32> to vector<8x4xf32>
    %226 = vector.extract_strided_slice %224 {offsets = [8, 0], sizes = [8, 4], strides = [1, 1]} : vector<16x4xf32> to vector<8x4xf32>
    %227 = arith.maximumf %225, %226 : vector<8x4xf32>
    %228 = arith.subf %225, %227 : vector<8x4xf32>
    %229 = math.exp %228 : vector<8x4xf32>
    %230 = arith.subf %226, %227 : vector<8x4xf32>
    %231 = math.exp %230 : vector<8x4xf32>
    %232 = arith.addf %229, %231 : vector<8x4xf32>
    %233 = tpu.reciprocal %232 {approx = true} : vector<8x4xf32> -> vector<8x4xf32>
    %234 = arith.mulf %229, %233 : vector<8x4xf32>
    %235 = arith.mulf %231, %233 : vector<8x4xf32>
    %236 = tpu.concatenate %234, %235 in 0 : vector<8x4xf32>, vector<8x4xf32> -> vector<16x4xf32>
    %cst_132 = arith.constant dense<0.000000e+00> : vector<16x64xf32>
    %237 = tpu.matmul %236, %154, %cst_132 {dimension_numbers = #tpu.dot_dimension_numbers<[1], [0], [0], [1], [0, 0, 1, 1], [], []>} : vector<16x4xf32>, vector<4x64xf32>, vector<16x64xf32> -> vector<16x64xf32>
    %238 = arith.mulf %237, %195 : vector<16x64xf32>
    %239 = vector.extract_strided_slice %238 {offsets = [0, 0], sizes = [8, 64], strides = [1, 1]} : vector<16x64xf32> to vector<8x64xf32>
    %240 = vector.extract_strided_slice %238 {offsets = [8, 0], sizes = [8, 64], strides = [1, 1]} : vector<16x64xf32> to vector<8x64xf32>
    %241 = arith.addf %239, %240 : vector<8x64xf32>
    %242 = tpu.concatenate %220, %241 in 0 : vector<8x64xf32>, vector<8x64xf32> -> vector<16x64xf32>
    %c0_133 = arith.constant 0 : index
    %c0_134 = arith.constant 0 : index
    %c0_135 = arith.constant 0 : index
    %243 = vector.load %arg17[%c0_133, %c0_134, %c0_135] : memref<4x64x64xf32, #tpu.memory_space<vmem>>, vector<1x64x64xf32>
    %244 = vector.shape_cast %243 : vector<1x64x64xf32> to vector<64x64xf32>
    %cst_136 = arith.constant dense<0.000000e+00> : vector<16x64xf32>
    %245 = tpu.matmul %242, %244, %cst_136 {dimension_numbers = #tpu.dot_dimension_numbers<[1], [0], [0], [1], [0, 0, 1, 1], [], []>} : vector<16x64xf32>, vector<64x64xf32>, vector<16x64xf32> -> vector<16x64xf32>
    %c0_137 = arith.constant 0 : index
    %c0_138 = arith.constant 0 : index
    %c0_139 = arith.constant 0 : index
    %246 = vector.load %arg18[%c0_137, %c0_138, %c0_139] : memref<4x1x64xf32, #tpu.memory_space<vmem>>, vector<1x1x64xf32>
    %247 = vector.shape_cast %246 : vector<1x1x64xf32> to vector<1x64xf32>
    %248 = vector.broadcast %247 : vector<1x64xf32> to vector<16x64xf32>
    %249 = arith.addf %245, %248 : vector<16x64xf32>
    %250 = arith.addf %152, %249 : vector<16x64xf32>
    %cst_140 = arith.constant dense<0.000000e+00> : vector<16xf32>
    %251 = vector.multi_reduction <add>, %250, %cst_140 [1] : vector<16x64xf32> to vector<16xf32>
    %252 = vector.shape_cast %251 : vector<16xf32> to vector<16x1xf32>
    %cst_141 = arith.constant 6.400000e+01 : f32
    %253 = vector.broadcast %cst_141 : f32 to vector<16x1xf32>
    %254 = arith.divf %252, %253 : vector<16x1xf32>
    %255 = vector.broadcast %254 : vector<16x1xf32> to vector<16x64xf32>
    %256 = arith.subf %250, %255 : vector<16x64xf32>
    %257 = arith.mulf %256, %256 : vector<16x64xf32>
    %cst_142 = arith.constant dense<0.000000e+00> : vector<16xf32>
    %258 = vector.multi_reduction <add>, %257, %cst_142 [1] : vector<16x64xf32> to vector<16xf32>
    %259 = vector.shape_cast %258 : vector<16xf32> to vector<16x1xf32>
    %cst_143 = arith.constant 6.400000e+01 : f32
    %260 = vector.broadcast %cst_143 : f32 to vector<16x1xf32>
    %261 = arith.divf %259, %260 : vector<16x1xf32>
    %262 = vector.broadcast %254 : vector<16x1xf32> to vector<16x64xf32>
    %263 = arith.subf %250, %262 : vector<16x64xf32>
    %cst_144 = arith.constant 9.99999974E-6 : f32
    %264 = vector.broadcast %cst_144 : f32 to vector<16x1xf32>
    %265 = arith.addf %261, %264 : vector<16x1xf32>
    %266 = math.rsqrt %265 : vector<16x1xf32>
    %267 = vector.broadcast %266 : vector<16x1xf32> to vector<16x64xf32>
    %268 = arith.mulf %263, %267 : vector<16x64xf32>
    %c0_145 = arith.constant 0 : index
    %c0_146 = arith.constant 0 : index
    %c0_147 = arith.constant 0 : index
    %269 = vector.load %arg19[%c0_145, %c0_146, %c0_147] : memref<4x64x64xf32, #tpu.memory_space<vmem>>, vector<1x64x64xf32>
    %270 = vector.shape_cast %269 : vector<1x64x64xf32> to vector<64x64xf32>
    %cst_148 = arith.constant dense<0.000000e+00> : vector<16x64xf32>
    %271 = tpu.matmul %268, %270, %cst_148 {dimension_numbers = #tpu.dot_dimension_numbers<[1], [0], [0], [1], [0, 0, 1, 1], [], []>} : vector<16x64xf32>, vector<64x64xf32>, vector<16x64xf32> -> vector<16x64xf32>
    %c0_149 = arith.constant 0 : index
    %c0_150 = arith.constant 0 : index
    %c0_151 = arith.constant 0 : index
    %272 = vector.load %arg20[%c0_149, %c0_150, %c0_151] : memref<4x1x64xf32, #tpu.memory_space<vmem>>, vector<1x1x64xf32>
    %273 = vector.shape_cast %272 : vector<1x1x64xf32> to vector<1x64xf32>
    %274 = vector.broadcast %273 : vector<1x64xf32> to vector<16x64xf32>
    %275 = arith.addf %271, %274 : vector<16x64xf32>
    %cst_152 = arith.constant 0.000000e+00 : f32
    %276 = vector.broadcast %cst_152 : f32 to vector<16x64xf32>
    %277 = arith.maximumf %275, %276 : vector<16x64xf32>
    %278 = arith.addf %277, %152 : vector<16x64xf32>
    %cst_153 = arith.constant dense<0.000000e+00> : vector<16xf32>
    %279 = vector.multi_reduction <add>, %278, %cst_153 [1] : vector<16x64xf32> to vector<16xf32>
    %280 = vector.shape_cast %279 : vector<16xf32> to vector<16x1xf32>
    %cst_154 = arith.constant 6.400000e+01 : f32
    %281 = vector.broadcast %cst_154 : f32 to vector<16x1xf32>
    %282 = arith.divf %280, %281 : vector<16x1xf32>
    %283 = vector.broadcast %282 : vector<16x1xf32> to vector<16x64xf32>
    %284 = arith.subf %278, %283 : vector<16x64xf32>
    %285 = arith.mulf %284, %284 : vector<16x64xf32>
    %cst_155 = arith.constant dense<0.000000e+00> : vector<16xf32>
    %286 = vector.multi_reduction <add>, %285, %cst_155 [1] : vector<16x64xf32> to vector<16xf32>
    %287 = vector.shape_cast %286 : vector<16xf32> to vector<16x1xf32>
    %cst_156 = arith.constant 6.400000e+01 : f32
    %288 = vector.broadcast %cst_156 : f32 to vector<16x1xf32>
    %289 = arith.divf %287, %288 : vector<16x1xf32>
    %290 = vector.broadcast %282 : vector<16x1xf32> to vector<16x64xf32>
    %291 = arith.subf %278, %290 : vector<16x64xf32>
    %cst_157 = arith.constant 9.99999974E-6 : f32
    %292 = vector.broadcast %cst_157 : f32 to vector<16x1xf32>
    %293 = arith.addf %289, %292 : vector<16x1xf32>
    %294 = math.rsqrt %293 : vector<16x1xf32>
    %295 = vector.broadcast %294 : vector<16x1xf32> to vector<16x64xf32>
    %296 = arith.mulf %291, %295 : vector<16x64xf32>
    %c1_158 = arith.constant 1 : index
    %c0_159 = arith.constant 0 : index
    %c0_160 = arith.constant 0 : index
    %297 = vector.load %arg11[%c1_158, %c0_159, %c0_160] : memref<4x64x64xf32, #tpu.memory_space<vmem>>, vector<1x64x64xf32>
    %298 = vector.shape_cast %297 : vector<1x64x64xf32> to vector<64x64xf32>
    %cst_161 = arith.constant dense<0.000000e+00> : vector<16x64xf32>
    %299 = tpu.matmul %296, %298, %cst_161 {dimension_numbers = #tpu.dot_dimension_numbers<[1], [0], [0], [1], [0, 0, 1, 1], [], []>} : vector<16x64xf32>, vector<64x64xf32>, vector<16x64xf32> -> vector<16x64xf32>
    %c1_162 = arith.constant 1 : index
    %c0_163 = arith.constant 0 : index
    %c0_164 = arith.constant 0 : index
    %300 = vector.load %arg12[%c1_162, %c0_163, %c0_164] : memref<4x1x64xf32, #tpu.memory_space<vmem>>, vector<1x1x64xf32>
    %301 = vector.shape_cast %300 : vector<1x1x64xf32> to vector<1x64xf32>
    %302 = vector.broadcast %301 : vector<1x64xf32> to vector<16x64xf32>
    %303 = arith.addf %299, %302 : vector<16x64xf32>
    %cst_165 = arith.constant 2.500000e-01 : f32
    %304 = vector.broadcast %cst_165 : f32 to vector<16x64xf32>
    %305 = arith.mulf %303, %304 : vector<16x64xf32>
    %c1_166 = arith.constant 1 : index
    %c0_167 = arith.constant 0 : index
    %c0_168 = arith.constant 0 : index
    %306 = vector.load %arg13[%c1_166, %c0_167, %c0_168] : memref<4x64x64xf32, #tpu.memory_space<vmem>>, vector<1x64x64xf32>
    %307 = vector.shape_cast %306 : vector<1x64x64xf32> to vector<64x64xf32>
    %cst_169 = arith.constant dense<0.000000e+00> : vector<16x64xf32>
    %308 = tpu.matmul %296, %307, %cst_169 {dimension_numbers = #tpu.dot_dimension_numbers<[1], [0], [0], [1], [0, 0, 1, 1], [], []>} : vector<16x64xf32>, vector<64x64xf32>, vector<16x64xf32> -> vector<16x64xf32>
    %c1_170 = arith.constant 1 : index
    %c0_171 = arith.constant 0 : index
    %c0_172 = arith.constant 0 : index
    %309 = vector.load %arg14[%c1_170, %c0_171, %c0_172] : memref<4x1x64xf32, #tpu.memory_space<vmem>>, vector<1x1x64xf32>
    %310 = vector.shape_cast %309 : vector<1x1x64xf32> to vector<1x64xf32>
    %311 = vector.broadcast %310 : vector<1x64xf32> to vector<16x64xf32>
    %312 = arith.addf %308, %311 : vector<16x64xf32>
    %c1_173 = arith.constant 1 : index
    %c0_174 = arith.constant 0 : index
    %c0_175 = arith.constant 0 : index
    %313 = vector.load %arg15[%c1_173, %c0_174, %c0_175] : memref<4x64x64xf32, #tpu.memory_space<vmem>>, vector<1x64x64xf32>
    %314 = vector.shape_cast %313 : vector<1x64x64xf32> to vector<64x64xf32>
    %cst_176 = arith.constant dense<0.000000e+00> : vector<16x64xf32>
    %315 = tpu.matmul %296, %314, %cst_176 {dimension_numbers = #tpu.dot_dimension_numbers<[1], [0], [0], [1], [0, 0, 1, 1], [], []>} : vector<16x64xf32>, vector<64x64xf32>, vector<16x64xf32> -> vector<16x64xf32>
    %c1_177 = arith.constant 1 : index
    %c0_178 = arith.constant 0 : index
    %c0_179 = arith.constant 0 : index
    %316 = vector.load %arg16[%c1_177, %c0_178, %c0_179] : memref<4x1x64xf32, #tpu.memory_space<vmem>>, vector<1x1x64xf32>
    %317 = vector.shape_cast %316 : vector<1x1x64xf32> to vector<1x64xf32>
    %318 = vector.broadcast %317 : vector<1x64xf32> to vector<16x64xf32>
    %319 = arith.addf %315, %318 : vector<16x64xf32>
    %320 = vector.extract_strided_slice %305 {offsets = [0, 0], sizes = [8, 64], strides = [1, 1]} : vector<16x64xf32> to vector<8x64xf32>
    %321 = vector.extract_strided_slice %305 {offsets = [8, 0], sizes = [8, 64], strides = [1, 1]} : vector<16x64xf32> to vector<8x64xf32>
    %322 = vector.extract_strided_slice %312 {offsets = [0, 0], sizes = [8, 64], strides = [1, 1]} : vector<16x64xf32> to vector<8x64xf32>
    %323 = vector.extract_strided_slice %312 {offsets = [8, 0], sizes = [8, 64], strides = [1, 1]} : vector<16x64xf32> to vector<8x64xf32>
    %324 = arith.mulf %320, %322 : vector<8x64xf32>
    %325 = arith.mulf %320, %323 : vector<8x64xf32>
    %326 = tpu.concatenate %324, %325 in 0 : vector<8x64xf32>, vector<8x64xf32> -> vector<16x64xf32>
    %cst_180 = arith.constant dense<0.000000e+00> : vector<16x4xf32>
    %327 = tpu.matmul %326, %153, %cst_180 {dimension_numbers = #tpu.dot_dimension_numbers<[1], [0], [0], [1], [0, 0, 1, 1], [], []>} : vector<16x64xf32>, vector<64x4xf32>, vector<16x4xf32> -> vector<16x4xf32>
    %328 = vector.extract_strided_slice %327 {offsets = [0, 0], sizes = [8, 4], strides = [1, 1]} : vector<16x4xf32> to vector<8x4xf32>
    %329 = vector.extract_strided_slice %327 {offsets = [8, 0], sizes = [8, 4], strides = [1, 1]} : vector<16x4xf32> to vector<8x4xf32>
    %330 = arith.maximumf %328, %329 : vector<8x4xf32>
    %331 = arith.subf %328, %330 : vector<8x4xf32>
    %332 = math.exp %331 : vector<8x4xf32>
    %333 = arith.subf %329, %330 : vector<8x4xf32>
    %334 = math.exp %333 : vector<8x4xf32>
    %335 = arith.addf %332, %334 : vector<8x4xf32>
    %336 = tpu.reciprocal %335 {approx = true} : vector<8x4xf32> -> vector<8x4xf32>
    %337 = arith.mulf %332, %336 : vector<8x4xf32>
    %338 = arith.mulf %334, %336 : vector<8x4xf32>
    %339 = tpu.concatenate %337, %338 in 0 : vector<8x4xf32>, vector<8x4xf32> -> vector<16x4xf32>
    %cst_181 = arith.constant dense<0.000000e+00> : vector<16x64xf32>
    %340 = tpu.matmul %339, %154, %cst_181 {dimension_numbers = #tpu.dot_dimension_numbers<[1], [0], [0], [1], [0, 0, 1, 1], [], []>} : vector<16x4xf32>, vector<4x64xf32>, vector<16x64xf32> -> vector<16x64xf32>
    %341 = arith.mulf %340, %319 : vector<16x64xf32>
    %342 = vector.extract_strided_slice %341 {offsets = [0, 0], sizes = [8, 64], strides = [1, 1]} : vector<16x64xf32> to vector<8x64xf32>
    %343 = vector.extract_strided_slice %341 {offsets = [8, 0], sizes = [8, 64], strides = [1, 1]} : vector<16x64xf32> to vector<8x64xf32>
    %344 = arith.addf %342, %343 : vector<8x64xf32>
    %345 = arith.mulf %321, %322 : vector<8x64xf32>
    %346 = arith.mulf %321, %323 : vector<8x64xf32>
    %347 = tpu.concatenate %345, %346 in 0 : vector<8x64xf32>, vector<8x64xf32> -> vector<16x64xf32>
    %cst_182 = arith.constant dense<0.000000e+00> : vector<16x4xf32>
    %348 = tpu.matmul %347, %153, %cst_182 {dimension_numbers = #tpu.dot_dimension_numbers<[1], [0], [0], [1], [0, 0, 1, 1], [], []>} : vector<16x64xf32>, vector<64x4xf32>, vector<16x4xf32> -> vector<16x4xf32>
    %349 = vector.extract_strided_slice %348 {offsets = [0, 0], sizes = [8, 4], strides = [1, 1]} : vector<16x4xf32> to vector<8x4xf32>
    %350 = vector.extract_strided_slice %348 {offsets = [8, 0], sizes = [8, 4], strides = [1, 1]} : vector<16x4xf32> to vector<8x4xf32>
    %351 = arith.maximumf %349, %350 : vector<8x4xf32>
    %352 = arith.subf %349, %351 : vector<8x4xf32>
    %353 = math.exp %352 : vector<8x4xf32>
    %354 = arith.subf %350, %351 : vector<8x4xf32>
    %355 = math.exp %354 : vector<8x4xf32>
    %356 = arith.addf %353, %355 : vector<8x4xf32>
    %357 = tpu.reciprocal %356 {approx = true} : vector<8x4xf32> -> vector<8x4xf32>
    %358 = arith.mulf %353, %357 : vector<8x4xf32>
    %359 = arith.mulf %355, %357 : vector<8x4xf32>
    %360 = tpu.concatenate %358, %359 in 0 : vector<8x4xf32>, vector<8x4xf32> -> vector<16x4xf32>
    %cst_183 = arith.constant dense<0.000000e+00> : vector<16x64xf32>
    %361 = tpu.matmul %360, %154, %cst_183 {dimension_numbers = #tpu.dot_dimension_numbers<[1], [0], [0], [1], [0, 0, 1, 1], [], []>} : vector<16x4xf32>, vector<4x64xf32>, vector<16x64xf32> -> vector<16x64xf32>
    %362 = arith.mulf %361, %319 : vector<16x64xf32>
    %363 = vector.extract_strided_slice %362 {offsets = [0, 0], sizes = [8, 64], strides = [1, 1]} : vector<16x64xf32> to vector<8x64xf32>
    %364 = vector.extract_strided_slice %362 {offsets = [8, 0], sizes = [8, 64], strides = [1, 1]} : vector<16x64xf32> to vector<8x64xf32>
    %365 = arith.addf %363, %364 : vector<8x64xf32>
    %366 = tpu.concatenate %344, %365 in 0 : vector<8x64xf32>, vector<8x64xf32> -> vector<16x64xf32>
    %c1_184 = arith.constant 1 : index
    %c0_185 = arith.constant 0 : index
    %c0_186 = arith.constant 0 : index
    %367 = vector.load %arg17[%c1_184, %c0_185, %c0_186] : memref<4x64x64xf32, #tpu.memory_space<vmem>>, vector<1x64x64xf32>
    %368 = vector.shape_cast %367 : vector<1x64x64xf32> to vector<64x64xf32>
    %cst_187 = arith.constant dense<0.000000e+00> : vector<16x64xf32>
    %369 = tpu.matmul %366, %368, %cst_187 {dimension_numbers = #tpu.dot_dimension_numbers<[1], [0], [0], [1], [0, 0, 1, 1], [], []>} : vector<16x64xf32>, vector<64x64xf32>, vector<16x64xf32> -> vector<16x64xf32>
    %c1_188 = arith.constant 1 : index
    %c0_189 = arith.constant 0 : index
    %c0_190 = arith.constant 0 : index
    %370 = vector.load %arg18[%c1_188, %c0_189, %c0_190] : memref<4x1x64xf32, #tpu.memory_space<vmem>>, vector<1x1x64xf32>
    %371 = vector.shape_cast %370 : vector<1x1x64xf32> to vector<1x64xf32>
    %372 = vector.broadcast %371 : vector<1x64xf32> to vector<16x64xf32>
    %373 = arith.addf %369, %372 : vector<16x64xf32>
    %374 = arith.addf %278, %373 : vector<16x64xf32>
    %cst_191 = arith.constant dense<0.000000e+00> : vector<16xf32>
    %375 = vector.multi_reduction <add>, %374, %cst_191 [1] : vector<16x64xf32> to vector<16xf32>
    %376 = vector.shape_cast %375 : vector<16xf32> to vector<16x1xf32>
    %cst_192 = arith.constant 6.400000e+01 : f32
    %377 = vector.broadcast %cst_192 : f32 to vector<16x1xf32>
    %378 = arith.divf %376, %377 : vector<16x1xf32>
    %379 = vector.broadcast %378 : vector<16x1xf32> to vector<16x64xf32>
    %380 = arith.subf %374, %379 : vector<16x64xf32>
    %381 = arith.mulf %380, %380 : vector<16x64xf32>
    %cst_193 = arith.constant dense<0.000000e+00> : vector<16xf32>
    %382 = vector.multi_reduction <add>, %381, %cst_193 [1] : vector<16x64xf32> to vector<16xf32>
    %383 = vector.shape_cast %382 : vector<16xf32> to vector<16x1xf32>
    %cst_194 = arith.constant 6.400000e+01 : f32
    %384 = vector.broadcast %cst_194 : f32 to vector<16x1xf32>
    %385 = arith.divf %383, %384 : vector<16x1xf32>
    %386 = vector.broadcast %378 : vector<16x1xf32> to vector<16x64xf32>
    %387 = arith.subf %374, %386 : vector<16x64xf32>
    %cst_195 = arith.constant 9.99999974E-6 : f32
    %388 = vector.broadcast %cst_195 : f32 to vector<16x1xf32>
    %389 = arith.addf %385, %388 : vector<16x1xf32>
    %390 = math.rsqrt %389 : vector<16x1xf32>
    %391 = vector.broadcast %390 : vector<16x1xf32> to vector<16x64xf32>
    %392 = arith.mulf %387, %391 : vector<16x64xf32>
    %c1_196 = arith.constant 1 : index
    %c0_197 = arith.constant 0 : index
    %c0_198 = arith.constant 0 : index
    %393 = vector.load %arg19[%c1_196, %c0_197, %c0_198] : memref<4x64x64xf32, #tpu.memory_space<vmem>>, vector<1x64x64xf32>
    %394 = vector.shape_cast %393 : vector<1x64x64xf32> to vector<64x64xf32>
    %cst_199 = arith.constant dense<0.000000e+00> : vector<16x64xf32>
    %395 = tpu.matmul %392, %394, %cst_199 {dimension_numbers = #tpu.dot_dimension_numbers<[1], [0], [0], [1], [0, 0, 1, 1], [], []>} : vector<16x64xf32>, vector<64x64xf32>, vector<16x64xf32> -> vector<16x64xf32>
    %c1_200 = arith.constant 1 : index
    %c0_201 = arith.constant 0 : index
    %c0_202 = arith.constant 0 : index
    %396 = vector.load %arg20[%c1_200, %c0_201, %c0_202] : memref<4x1x64xf32, #tpu.memory_space<vmem>>, vector<1x1x64xf32>
    %397 = vector.shape_cast %396 : vector<1x1x64xf32> to vector<1x64xf32>
    %398 = vector.broadcast %397 : vector<1x64xf32> to vector<16x64xf32>
    %399 = arith.addf %395, %398 : vector<16x64xf32>
    %cst_203 = arith.constant 0.000000e+00 : f32
    %400 = vector.broadcast %cst_203 : f32 to vector<16x64xf32>
    %401 = arith.maximumf %399, %400 : vector<16x64xf32>
    %402 = arith.addf %401, %278 : vector<16x64xf32>
    %cst_204 = arith.constant dense<0.000000e+00> : vector<16xf32>
    %403 = vector.multi_reduction <add>, %402, %cst_204 [1] : vector<16x64xf32> to vector<16xf32>
    %404 = vector.shape_cast %403 : vector<16xf32> to vector<16x1xf32>
    %cst_205 = arith.constant 6.400000e+01 : f32
    %405 = vector.broadcast %cst_205 : f32 to vector<16x1xf32>
    %406 = arith.divf %404, %405 : vector<16x1xf32>
    %407 = vector.broadcast %406 : vector<16x1xf32> to vector<16x64xf32>
    %408 = arith.subf %402, %407 : vector<16x64xf32>
    %409 = arith.mulf %408, %408 : vector<16x64xf32>
    %cst_206 = arith.constant dense<0.000000e+00> : vector<16xf32>
    %410 = vector.multi_reduction <add>, %409, %cst_206 [1] : vector<16x64xf32> to vector<16xf32>
    %411 = vector.shape_cast %410 : vector<16xf32> to vector<16x1xf32>
    %cst_207 = arith.constant 6.400000e+01 : f32
    %412 = vector.broadcast %cst_207 : f32 to vector<16x1xf32>
    %413 = arith.divf %411, %412 : vector<16x1xf32>
    %414 = vector.broadcast %406 : vector<16x1xf32> to vector<16x64xf32>
    %415 = arith.subf %402, %414 : vector<16x64xf32>
    %cst_208 = arith.constant 9.99999974E-6 : f32
    %416 = vector.broadcast %cst_208 : f32 to vector<16x1xf32>
    %417 = arith.addf %413, %416 : vector<16x1xf32>
    %418 = math.rsqrt %417 : vector<16x1xf32>
    %419 = vector.broadcast %418 : vector<16x1xf32> to vector<16x64xf32>
    %420 = arith.mulf %415, %419 : vector<16x64xf32>
    %c2_209 = arith.constant 2 : index
    %c0_210 = arith.constant 0 : index
    %c0_211 = arith.constant 0 : index
    %421 = vector.load %arg11[%c2_209, %c0_210, %c0_211] : memref<4x64x64xf32, #tpu.memory_space<vmem>>, vector<1x64x64xf32>
    %422 = vector.shape_cast %421 : vector<1x64x64xf32> to vector<64x64xf32>
    %cst_212 = arith.constant dense<0.000000e+00> : vector<16x64xf32>
    %423 = tpu.matmul %420, %422, %cst_212 {dimension_numbers = #tpu.dot_dimension_numbers<[1], [0], [0], [1], [0, 0, 1, 1], [], []>} : vector<16x64xf32>, vector<64x64xf32>, vector<16x64xf32> -> vector<16x64xf32>
    %c2_213 = arith.constant 2 : index
    %c0_214 = arith.constant 0 : index
    %c0_215 = arith.constant 0 : index
    %424 = vector.load %arg12[%c2_213, %c0_214, %c0_215] : memref<4x1x64xf32, #tpu.memory_space<vmem>>, vector<1x1x64xf32>
    %425 = vector.shape_cast %424 : vector<1x1x64xf32> to vector<1x64xf32>
    %426 = vector.broadcast %425 : vector<1x64xf32> to vector<16x64xf32>
    %427 = arith.addf %423, %426 : vector<16x64xf32>
    %cst_216 = arith.constant 2.500000e-01 : f32
    %428 = vector.broadcast %cst_216 : f32 to vector<16x64xf32>
    %429 = arith.mulf %427, %428 : vector<16x64xf32>
    %c2_217 = arith.constant 2 : index
    %c0_218 = arith.constant 0 : index
    %c0_219 = arith.constant 0 : index
    %430 = vector.load %arg13[%c2_217, %c0_218, %c0_219] : memref<4x64x64xf32, #tpu.memory_space<vmem>>, vector<1x64x64xf32>
    %431 = vector.shape_cast %430 : vector<1x64x64xf32> to vector<64x64xf32>
    %cst_220 = arith.constant dense<0.000000e+00> : vector<16x64xf32>
    %432 = tpu.matmul %420, %431, %cst_220 {dimension_numbers = #tpu.dot_dimension_numbers<[1], [0], [0], [1], [0, 0, 1, 1], [], []>} : vector<16x64xf32>, vector<64x64xf32>, vector<16x64xf32> -> vector<16x64xf32>
    %c2_221 = arith.constant 2 : index
    %c0_222 = arith.constant 0 : index
    %c0_223 = arith.constant 0 : index
    %433 = vector.load %arg14[%c2_221, %c0_222, %c0_223] : memref<4x1x64xf32, #tpu.memory_space<vmem>>, vector<1x1x64xf32>
    %434 = vector.shape_cast %433 : vector<1x1x64xf32> to vector<1x64xf32>
    %435 = vector.broadcast %434 : vector<1x64xf32> to vector<16x64xf32>
    %436 = arith.addf %432, %435 : vector<16x64xf32>
    %c2_224 = arith.constant 2 : index
    %c0_225 = arith.constant 0 : index
    %c0_226 = arith.constant 0 : index
    %437 = vector.load %arg15[%c2_224, %c0_225, %c0_226] : memref<4x64x64xf32, #tpu.memory_space<vmem>>, vector<1x64x64xf32>
    %438 = vector.shape_cast %437 : vector<1x64x64xf32> to vector<64x64xf32>
    %cst_227 = arith.constant dense<0.000000e+00> : vector<16x64xf32>
    %439 = tpu.matmul %420, %438, %cst_227 {dimension_numbers = #tpu.dot_dimension_numbers<[1], [0], [0], [1], [0, 0, 1, 1], [], []>} : vector<16x64xf32>, vector<64x64xf32>, vector<16x64xf32> -> vector<16x64xf32>
    %c2_228 = arith.constant 2 : index
    %c0_229 = arith.constant 0 : index
    %c0_230 = arith.constant 0 : index
    %440 = vector.load %arg16[%c2_228, %c0_229, %c0_230] : memref<4x1x64xf32, #tpu.memory_space<vmem>>, vector<1x1x64xf32>
    %441 = vector.shape_cast %440 : vector<1x1x64xf32> to vector<1x64xf32>
    %442 = vector.broadcast %441 : vector<1x64xf32> to vector<16x64xf32>
    %443 = arith.addf %439, %442 : vector<16x64xf32>
    %444 = vector.extract_strided_slice %429 {offsets = [0, 0], sizes = [8, 64], strides = [1, 1]} : vector<16x64xf32> to vector<8x64xf32>
    %445 = vector.extract_strided_slice %429 {offsets = [8, 0], sizes = [8, 64], strides = [1, 1]} : vector<16x64xf32> to vector<8x64xf32>
    %446 = vector.extract_strided_slice %436 {offsets = [0, 0], sizes = [8, 64], strides = [1, 1]} : vector<16x64xf32> to vector<8x64xf32>
    %447 = vector.extract_strided_slice %436 {offsets = [8, 0], sizes = [8, 64], strides = [1, 1]} : vector<16x64xf32> to vector<8x64xf32>
    %448 = arith.mulf %444, %446 : vector<8x64xf32>
    %449 = arith.mulf %444, %447 : vector<8x64xf32>
    %450 = tpu.concatenate %448, %449 in 0 : vector<8x64xf32>, vector<8x64xf32> -> vector<16x64xf32>
    %cst_231 = arith.constant dense<0.000000e+00> : vector<16x4xf32>
    %451 = tpu.matmul %450, %153, %cst_231 {dimension_numbers = #tpu.dot_dimension_numbers<[1], [0], [0], [1], [0, 0, 1, 1], [], []>} : vector<16x64xf32>, vector<64x4xf32>, vector<16x4xf32> -> vector<16x4xf32>
    %452 = vector.extract_strided_slice %451 {offsets = [0, 0], sizes = [8, 4], strides = [1, 1]} : vector<16x4xf32> to vector<8x4xf32>
    %453 = vector.extract_strided_slice %451 {offsets = [8, 0], sizes = [8, 4], strides = [1, 1]} : vector<16x4xf32> to vector<8x4xf32>
    %454 = arith.maximumf %452, %453 : vector<8x4xf32>
    %455 = arith.subf %452, %454 : vector<8x4xf32>
    %456 = math.exp %455 : vector<8x4xf32>
    %457 = arith.subf %453, %454 : vector<8x4xf32>
    %458 = math.exp %457 : vector<8x4xf32>
    %459 = arith.addf %456, %458 : vector<8x4xf32>
    %460 = tpu.reciprocal %459 {approx = true} : vector<8x4xf32> -> vector<8x4xf32>
    %461 = arith.mulf %456, %460 : vector<8x4xf32>
    %462 = arith.mulf %458, %460 : vector<8x4xf32>
    %463 = tpu.concatenate %461, %462 in 0 : vector<8x4xf32>, vector<8x4xf32> -> vector<16x4xf32>
    %cst_232 = arith.constant dense<0.000000e+00> : vector<16x64xf32>
    %464 = tpu.matmul %463, %154, %cst_232 {dimension_numbers = #tpu.dot_dimension_numbers<[1], [0], [0], [1], [0, 0, 1, 1], [], []>} : vector<16x4xf32>, vector<4x64xf32>, vector<16x64xf32> -> vector<16x64xf32>
    %465 = arith.mulf %464, %443 : vector<16x64xf32>
    %466 = vector.extract_strided_slice %465 {offsets = [0, 0], sizes = [8, 64], strides = [1, 1]} : vector<16x64xf32> to vector<8x64xf32>
    %467 = vector.extract_strided_slice %465 {offsets = [8, 0], sizes = [8, 64], strides = [1, 1]} : vector<16x64xf32> to vector<8x64xf32>
    %468 = arith.addf %466, %467 : vector<8x64xf32>
    %469 = arith.mulf %445, %446 : vector<8x64xf32>
    %470 = arith.mulf %445, %447 : vector<8x64xf32>
    %471 = tpu.concatenate %469, %470 in 0 : vector<8x64xf32>, vector<8x64xf32> -> vector<16x64xf32>
    %cst_233 = arith.constant dense<0.000000e+00> : vector<16x4xf32>
    %472 = tpu.matmul %471, %153, %cst_233 {dimension_numbers = #tpu.dot_dimension_numbers<[1], [0], [0], [1], [0, 0, 1, 1], [], []>} : vector<16x64xf32>, vector<64x4xf32>, vector<16x4xf32> -> vector<16x4xf32>
    %473 = vector.extract_strided_slice %472 {offsets = [0, 0], sizes = [8, 4], strides = [1, 1]} : vector<16x4xf32> to vector<8x4xf32>
    %474 = vector.extract_strided_slice %472 {offsets = [8, 0], sizes = [8, 4], strides = [1, 1]} : vector<16x4xf32> to vector<8x4xf32>
    %475 = arith.maximumf %473, %474 : vector<8x4xf32>
    %476 = arith.subf %473, %475 : vector<8x4xf32>
    %477 = math.exp %476 : vector<8x4xf32>
    %478 = arith.subf %474, %475 : vector<8x4xf32>
    %479 = math.exp %478 : vector<8x4xf32>
    %480 = arith.addf %477, %479 : vector<8x4xf32>
    %481 = tpu.reciprocal %480 {approx = true} : vector<8x4xf32> -> vector<8x4xf32>
    %482 = arith.mulf %477, %481 : vector<8x4xf32>
    %483 = arith.mulf %479, %481 : vector<8x4xf32>
    %484 = tpu.concatenate %482, %483 in 0 : vector<8x4xf32>, vector<8x4xf32> -> vector<16x4xf32>
    %cst_234 = arith.constant dense<0.000000e+00> : vector<16x64xf32>
    %485 = tpu.matmul %484, %154, %cst_234 {dimension_numbers = #tpu.dot_dimension_numbers<[1], [0], [0], [1], [0, 0, 1, 1], [], []>} : vector<16x4xf32>, vector<4x64xf32>, vector<16x64xf32> -> vector<16x64xf32>
    %486 = arith.mulf %485, %443 : vector<16x64xf32>
    %487 = vector.extract_strided_slice %486 {offsets = [0, 0], sizes = [8, 64], strides = [1, 1]} : vector<16x64xf32> to vector<8x64xf32>
    %488 = vector.extract_strided_slice %486 {offsets = [8, 0], sizes = [8, 64], strides = [1, 1]} : vector<16x64xf32> to vector<8x64xf32>
    %489 = arith.addf %487, %488 : vector<8x64xf32>
    %490 = tpu.concatenate %468, %489 in 0 : vector<8x64xf32>, vector<8x64xf32> -> vector<16x64xf32>
    %c2_235 = arith.constant 2 : index
    %c0_236 = arith.constant 0 : index
    %c0_237 = arith.constant 0 : index
    %491 = vector.load %arg17[%c2_235, %c0_236, %c0_237] : memref<4x64x64xf32, #tpu.memory_space<vmem>>, vector<1x64x64xf32>
    %492 = vector.shape_cast %491 : vector<1x64x64xf32> to vector<64x64xf32>
    %cst_238 = arith.constant dense<0.000000e+00> : vector<16x64xf32>
    %493 = tpu.matmul %490, %492, %cst_238 {dimension_numbers = #tpu.dot_dimension_numbers<[1], [0], [0], [1], [0, 0, 1, 1], [], []>} : vector<16x64xf32>, vector<64x64xf32>, vector<16x64xf32> -> vector<16x64xf32>
    %c2_239 = arith.constant 2 : index
    %c0_240 = arith.constant 0 : index
    %c0_241 = arith.constant 0 : index
    %494 = vector.load %arg18[%c2_239, %c0_240, %c0_241] : memref<4x1x64xf32, #tpu.memory_space<vmem>>, vector<1x1x64xf32>
    %495 = vector.shape_cast %494 : vector<1x1x64xf32> to vector<1x64xf32>
    %496 = vector.broadcast %495 : vector<1x64xf32> to vector<16x64xf32>
    %497 = arith.addf %493, %496 : vector<16x64xf32>
    %498 = arith.addf %402, %497 : vector<16x64xf32>
    %cst_242 = arith.constant dense<0.000000e+00> : vector<16xf32>
    %499 = vector.multi_reduction <add>, %498, %cst_242 [1] : vector<16x64xf32> to vector<16xf32>
    %500 = vector.shape_cast %499 : vector<16xf32> to vector<16x1xf32>
    %cst_243 = arith.constant 6.400000e+01 : f32
    %501 = vector.broadcast %cst_243 : f32 to vector<16x1xf32>
    %502 = arith.divf %500, %501 : vector<16x1xf32>
    %503 = vector.broadcast %502 : vector<16x1xf32> to vector<16x64xf32>
    %504 = arith.subf %498, %503 : vector<16x64xf32>
    %505 = arith.mulf %504, %504 : vector<16x64xf32>
    %cst_244 = arith.constant dense<0.000000e+00> : vector<16xf32>
    %506 = vector.multi_reduction <add>, %505, %cst_244 [1] : vector<16x64xf32> to vector<16xf32>
    %507 = vector.shape_cast %506 : vector<16xf32> to vector<16x1xf32>
    %cst_245 = arith.constant 6.400000e+01 : f32
    %508 = vector.broadcast %cst_245 : f32 to vector<16x1xf32>
    %509 = arith.divf %507, %508 : vector<16x1xf32>
    %510 = vector.broadcast %502 : vector<16x1xf32> to vector<16x64xf32>
    %511 = arith.subf %498, %510 : vector<16x64xf32>
    %cst_246 = arith.constant 9.99999974E-6 : f32
    %512 = vector.broadcast %cst_246 : f32 to vector<16x1xf32>
    %513 = arith.addf %509, %512 : vector<16x1xf32>
    %514 = math.rsqrt %513 : vector<16x1xf32>
    %515 = vector.broadcast %514 : vector<16x1xf32> to vector<16x64xf32>
    %516 = arith.mulf %511, %515 : vector<16x64xf32>
    %c2_247 = arith.constant 2 : index
    %c0_248 = arith.constant 0 : index
    %c0_249 = arith.constant 0 : index
    %517 = vector.load %arg19[%c2_247, %c0_248, %c0_249] : memref<4x64x64xf32, #tpu.memory_space<vmem>>, vector<1x64x64xf32>
    %518 = vector.shape_cast %517 : vector<1x64x64xf32> to vector<64x64xf32>
    %cst_250 = arith.constant dense<0.000000e+00> : vector<16x64xf32>
    %519 = tpu.matmul %516, %518, %cst_250 {dimension_numbers = #tpu.dot_dimension_numbers<[1], [0], [0], [1], [0, 0, 1, 1], [], []>} : vector<16x64xf32>, vector<64x64xf32>, vector<16x64xf32> -> vector<16x64xf32>
    %c2_251 = arith.constant 2 : index
    %c0_252 = arith.constant 0 : index
    %c0_253 = arith.constant 0 : index
    %520 = vector.load %arg20[%c2_251, %c0_252, %c0_253] : memref<4x1x64xf32, #tpu.memory_space<vmem>>, vector<1x1x64xf32>
    %521 = vector.shape_cast %520 : vector<1x1x64xf32> to vector<1x64xf32>
    %522 = vector.broadcast %521 : vector<1x64xf32> to vector<16x64xf32>
    %523 = arith.addf %519, %522 : vector<16x64xf32>
    %cst_254 = arith.constant 0.000000e+00 : f32
    %524 = vector.broadcast %cst_254 : f32 to vector<16x64xf32>
    %525 = arith.maximumf %523, %524 : vector<16x64xf32>
    %526 = arith.addf %525, %402 : vector<16x64xf32>
    %cst_255 = arith.constant dense<0.000000e+00> : vector<16xf32>
    %527 = vector.multi_reduction <add>, %526, %cst_255 [1] : vector<16x64xf32> to vector<16xf32>
    %528 = vector.shape_cast %527 : vector<16xf32> to vector<16x1xf32>
    %cst_256 = arith.constant 6.400000e+01 : f32
    %529 = vector.broadcast %cst_256 : f32 to vector<16x1xf32>
    %530 = arith.divf %528, %529 : vector<16x1xf32>
    %531 = vector.broadcast %530 : vector<16x1xf32> to vector<16x64xf32>
    %532 = arith.subf %526, %531 : vector<16x64xf32>
    %533 = arith.mulf %532, %532 : vector<16x64xf32>
    %cst_257 = arith.constant dense<0.000000e+00> : vector<16xf32>
    %534 = vector.multi_reduction <add>, %533, %cst_257 [1] : vector<16x64xf32> to vector<16xf32>
    %535 = vector.shape_cast %534 : vector<16xf32> to vector<16x1xf32>
    %cst_258 = arith.constant 6.400000e+01 : f32
    %536 = vector.broadcast %cst_258 : f32 to vector<16x1xf32>
    %537 = arith.divf %535, %536 : vector<16x1xf32>
    %538 = vector.broadcast %530 : vector<16x1xf32> to vector<16x64xf32>
    %539 = arith.subf %526, %538 : vector<16x64xf32>
    %cst_259 = arith.constant 9.99999974E-6 : f32
    %540 = vector.broadcast %cst_259 : f32 to vector<16x1xf32>
    %541 = arith.addf %537, %540 : vector<16x1xf32>
    %542 = math.rsqrt %541 : vector<16x1xf32>
    %543 = vector.broadcast %542 : vector<16x1xf32> to vector<16x64xf32>
    %544 = arith.mulf %539, %543 : vector<16x64xf32>
    %c3_260 = arith.constant 3 : index
    %c0_261 = arith.constant 0 : index
    %c0_262 = arith.constant 0 : index
    %545 = vector.load %arg11[%c3_260, %c0_261, %c0_262] : memref<4x64x64xf32, #tpu.memory_space<vmem>>, vector<1x64x64xf32>
    %546 = vector.shape_cast %545 : vector<1x64x64xf32> to vector<64x64xf32>
    %cst_263 = arith.constant dense<0.000000e+00> : vector<16x64xf32>
    %547 = tpu.matmul %544, %546, %cst_263 {dimension_numbers = #tpu.dot_dimension_numbers<[1], [0], [0], [1], [0, 0, 1, 1], [], []>} : vector<16x64xf32>, vector<64x64xf32>, vector<16x64xf32> -> vector<16x64xf32>
    %c3_264 = arith.constant 3 : index
    %c0_265 = arith.constant 0 : index
    %c0_266 = arith.constant 0 : index
    %548 = vector.load %arg12[%c3_264, %c0_265, %c0_266] : memref<4x1x64xf32, #tpu.memory_space<vmem>>, vector<1x1x64xf32>
    %549 = vector.shape_cast %548 : vector<1x1x64xf32> to vector<1x64xf32>
    %550 = vector.broadcast %549 : vector<1x64xf32> to vector<16x64xf32>
    %551 = arith.addf %547, %550 : vector<16x64xf32>
    %cst_267 = arith.constant 2.500000e-01 : f32
    %552 = vector.broadcast %cst_267 : f32 to vector<16x64xf32>
    %553 = arith.mulf %551, %552 : vector<16x64xf32>
    %c3_268 = arith.constant 3 : index
    %c0_269 = arith.constant 0 : index
    %c0_270 = arith.constant 0 : index
    %554 = vector.load %arg13[%c3_268, %c0_269, %c0_270] : memref<4x64x64xf32, #tpu.memory_space<vmem>>, vector<1x64x64xf32>
    %555 = vector.shape_cast %554 : vector<1x64x64xf32> to vector<64x64xf32>
    %cst_271 = arith.constant dense<0.000000e+00> : vector<16x64xf32>
    %556 = tpu.matmul %544, %555, %cst_271 {dimension_numbers = #tpu.dot_dimension_numbers<[1], [0], [0], [1], [0, 0, 1, 1], [], []>} : vector<16x64xf32>, vector<64x64xf32>, vector<16x64xf32> -> vector<16x64xf32>
    %c3_272 = arith.constant 3 : index
    %c0_273 = arith.constant 0 : index
    %c0_274 = arith.constant 0 : index
    %557 = vector.load %arg14[%c3_272, %c0_273, %c0_274] : memref<4x1x64xf32, #tpu.memory_space<vmem>>, vector<1x1x64xf32>
    %558 = vector.shape_cast %557 : vector<1x1x64xf32> to vector<1x64xf32>
    %559 = vector.broadcast %558 : vector<1x64xf32> to vector<16x64xf32>
    %560 = arith.addf %556, %559 : vector<16x64xf32>
    %c3_275 = arith.constant 3 : index
    %c0_276 = arith.constant 0 : index
    %c0_277 = arith.constant 0 : index
    %561 = vector.load %arg15[%c3_275, %c0_276, %c0_277] : memref<4x64x64xf32, #tpu.memory_space<vmem>>, vector<1x64x64xf32>
    %562 = vector.shape_cast %561 : vector<1x64x64xf32> to vector<64x64xf32>
    %cst_278 = arith.constant dense<0.000000e+00> : vector<16x64xf32>
    %563 = tpu.matmul %544, %562, %cst_278 {dimension_numbers = #tpu.dot_dimension_numbers<[1], [0], [0], [1], [0, 0, 1, 1], [], []>} : vector<16x64xf32>, vector<64x64xf32>, vector<16x64xf32> -> vector<16x64xf32>
    %c3_279 = arith.constant 3 : index
    %c0_280 = arith.constant 0 : index
    %c0_281 = arith.constant 0 : index
    %564 = vector.load %arg16[%c3_279, %c0_280, %c0_281] : memref<4x1x64xf32, #tpu.memory_space<vmem>>, vector<1x1x64xf32>
    %565 = vector.shape_cast %564 : vector<1x1x64xf32> to vector<1x64xf32>
    %566 = vector.broadcast %565 : vector<1x64xf32> to vector<16x64xf32>
    %567 = arith.addf %563, %566 : vector<16x64xf32>
    %568 = vector.extract_strided_slice %553 {offsets = [0, 0], sizes = [8, 64], strides = [1, 1]} : vector<16x64xf32> to vector<8x64xf32>
    %569 = vector.extract_strided_slice %553 {offsets = [8, 0], sizes = [8, 64], strides = [1, 1]} : vector<16x64xf32> to vector<8x64xf32>
    %570 = vector.extract_strided_slice %560 {offsets = [0, 0], sizes = [8, 64], strides = [1, 1]} : vector<16x64xf32> to vector<8x64xf32>
    %571 = vector.extract_strided_slice %560 {offsets = [8, 0], sizes = [8, 64], strides = [1, 1]} : vector<16x64xf32> to vector<8x64xf32>
    %572 = arith.mulf %568, %570 : vector<8x64xf32>
    %573 = arith.mulf %568, %571 : vector<8x64xf32>
    %574 = tpu.concatenate %572, %573 in 0 : vector<8x64xf32>, vector<8x64xf32> -> vector<16x64xf32>
    %cst_282 = arith.constant dense<0.000000e+00> : vector<16x4xf32>
    %575 = tpu.matmul %574, %153, %cst_282 {dimension_numbers = #tpu.dot_dimension_numbers<[1], [0], [0], [1], [0, 0, 1, 1], [], []>} : vector<16x64xf32>, vector<64x4xf32>, vector<16x4xf32> -> vector<16x4xf32>
    %576 = vector.extract_strided_slice %575 {offsets = [0, 0], sizes = [8, 4], strides = [1, 1]} : vector<16x4xf32> to vector<8x4xf32>
    %577 = vector.extract_strided_slice %575 {offsets = [8, 0], sizes = [8, 4], strides = [1, 1]} : vector<16x4xf32> to vector<8x4xf32>
    %578 = arith.maximumf %576, %577 : vector<8x4xf32>
    %579 = arith.subf %576, %578 : vector<8x4xf32>
    %580 = math.exp %579 : vector<8x4xf32>
    %581 = arith.subf %577, %578 : vector<8x4xf32>
    %582 = math.exp %581 : vector<8x4xf32>
    %583 = arith.addf %580, %582 : vector<8x4xf32>
    %584 = tpu.reciprocal %583 {approx = true} : vector<8x4xf32> -> vector<8x4xf32>
    %585 = arith.mulf %580, %584 : vector<8x4xf32>
    %586 = arith.mulf %582, %584 : vector<8x4xf32>
    %587 = tpu.concatenate %585, %586 in 0 : vector<8x4xf32>, vector<8x4xf32> -> vector<16x4xf32>
    %cst_283 = arith.constant dense<0.000000e+00> : vector<16x64xf32>
    %588 = tpu.matmul %587, %154, %cst_283 {dimension_numbers = #tpu.dot_dimension_numbers<[1], [0], [0], [1], [0, 0, 1, 1], [], []>} : vector<16x4xf32>, vector<4x64xf32>, vector<16x64xf32> -> vector<16x64xf32>
    %589 = arith.mulf %588, %567 : vector<16x64xf32>
    %590 = vector.extract_strided_slice %589 {offsets = [0, 0], sizes = [8, 64], strides = [1, 1]} : vector<16x64xf32> to vector<8x64xf32>
    %591 = vector.extract_strided_slice %589 {offsets = [8, 0], sizes = [8, 64], strides = [1, 1]} : vector<16x64xf32> to vector<8x64xf32>
    %592 = arith.addf %590, %591 : vector<8x64xf32>
    %593 = arith.mulf %569, %570 : vector<8x64xf32>
    %594 = arith.mulf %569, %571 : vector<8x64xf32>
    %595 = tpu.concatenate %593, %594 in 0 : vector<8x64xf32>, vector<8x64xf32> -> vector<16x64xf32>
    %cst_284 = arith.constant dense<0.000000e+00> : vector<16x4xf32>
    %596 = tpu.matmul %595, %153, %cst_284 {dimension_numbers = #tpu.dot_dimension_numbers<[1], [0], [0], [1], [0, 0, 1, 1], [], []>} : vector<16x64xf32>, vector<64x4xf32>, vector<16x4xf32> -> vector<16x4xf32>
    %597 = vector.extract_strided_slice %596 {offsets = [0, 0], sizes = [8, 4], strides = [1, 1]} : vector<16x4xf32> to vector<8x4xf32>
    %598 = vector.extract_strided_slice %596 {offsets = [8, 0], sizes = [8, 4], strides = [1, 1]} : vector<16x4xf32> to vector<8x4xf32>
    %599 = arith.maximumf %597, %598 : vector<8x4xf32>
    %600 = arith.subf %597, %599 : vector<8x4xf32>
    %601 = math.exp %600 : vector<8x4xf32>
    %602 = arith.subf %598, %599 : vector<8x4xf32>
    %603 = math.exp %602 : vector<8x4xf32>
    %604 = arith.addf %601, %603 : vector<8x4xf32>
    %605 = tpu.reciprocal %604 {approx = true} : vector<8x4xf32> -> vector<8x4xf32>
    %606 = arith.mulf %601, %605 : vector<8x4xf32>
    %607 = arith.mulf %603, %605 : vector<8x4xf32>
    %608 = tpu.concatenate %606, %607 in 0 : vector<8x4xf32>, vector<8x4xf32> -> vector<16x4xf32>
    %cst_285 = arith.constant dense<0.000000e+00> : vector<16x64xf32>
    %609 = tpu.matmul %608, %154, %cst_285 {dimension_numbers = #tpu.dot_dimension_numbers<[1], [0], [0], [1], [0, 0, 1, 1], [], []>} : vector<16x4xf32>, vector<4x64xf32>, vector<16x64xf32> -> vector<16x64xf32>
    %610 = arith.mulf %609, %567 : vector<16x64xf32>
    %611 = vector.extract_strided_slice %610 {offsets = [0, 0], sizes = [8, 64], strides = [1, 1]} : vector<16x64xf32> to vector<8x64xf32>
    %612 = vector.extract_strided_slice %610 {offsets = [8, 0], sizes = [8, 64], strides = [1, 1]} : vector<16x64xf32> to vector<8x64xf32>
    %613 = arith.addf %611, %612 : vector<8x64xf32>
    %614 = tpu.concatenate %592, %613 in 0 : vector<8x64xf32>, vector<8x64xf32> -> vector<16x64xf32>
    %c3_286 = arith.constant 3 : index
    %c0_287 = arith.constant 0 : index
    %c0_288 = arith.constant 0 : index
    %615 = vector.load %arg17[%c3_286, %c0_287, %c0_288] : memref<4x64x64xf32, #tpu.memory_space<vmem>>, vector<1x64x64xf32>
    %616 = vector.shape_cast %615 : vector<1x64x64xf32> to vector<64x64xf32>
    %cst_289 = arith.constant dense<0.000000e+00> : vector<16x64xf32>
    %617 = tpu.matmul %614, %616, %cst_289 {dimension_numbers = #tpu.dot_dimension_numbers<[1], [0], [0], [1], [0, 0, 1, 1], [], []>} : vector<16x64xf32>, vector<64x64xf32>, vector<16x64xf32> -> vector<16x64xf32>
    %c3_290 = arith.constant 3 : index
    %c0_291 = arith.constant 0 : index
    %c0_292 = arith.constant 0 : index
    %618 = vector.load %arg18[%c3_290, %c0_291, %c0_292] : memref<4x1x64xf32, #tpu.memory_space<vmem>>, vector<1x1x64xf32>
    %619 = vector.shape_cast %618 : vector<1x1x64xf32> to vector<1x64xf32>
    %620 = vector.broadcast %619 : vector<1x64xf32> to vector<16x64xf32>
    %621 = arith.addf %617, %620 : vector<16x64xf32>
    %622 = arith.addf %526, %621 : vector<16x64xf32>
    %cst_293 = arith.constant dense<0.000000e+00> : vector<16xf32>
    %623 = vector.multi_reduction <add>, %622, %cst_293 [1] : vector<16x64xf32> to vector<16xf32>
    %624 = vector.shape_cast %623 : vector<16xf32> to vector<16x1xf32>
    %cst_294 = arith.constant 6.400000e+01 : f32
    %625 = vector.broadcast %cst_294 : f32 to vector<16x1xf32>
    %626 = arith.divf %624, %625 : vector<16x1xf32>
    %627 = vector.broadcast %626 : vector<16x1xf32> to vector<16x64xf32>
    %628 = arith.subf %622, %627 : vector<16x64xf32>
    %629 = arith.mulf %628, %628 : vector<16x64xf32>
    %cst_295 = arith.constant dense<0.000000e+00> : vector<16xf32>
    %630 = vector.multi_reduction <add>, %629, %cst_295 [1] : vector<16x64xf32> to vector<16xf32>
    %631 = vector.shape_cast %630 : vector<16xf32> to vector<16x1xf32>
    %cst_296 = arith.constant 6.400000e+01 : f32
    %632 = vector.broadcast %cst_296 : f32 to vector<16x1xf32>
    %633 = arith.divf %631, %632 : vector<16x1xf32>
    %634 = vector.broadcast %626 : vector<16x1xf32> to vector<16x64xf32>
    %635 = arith.subf %622, %634 : vector<16x64xf32>
    %cst_297 = arith.constant 9.99999974E-6 : f32
    %636 = vector.broadcast %cst_297 : f32 to vector<16x1xf32>
    %637 = arith.addf %633, %636 : vector<16x1xf32>
    %638 = math.rsqrt %637 : vector<16x1xf32>
    %639 = vector.broadcast %638 : vector<16x1xf32> to vector<16x64xf32>
    %640 = arith.mulf %635, %639 : vector<16x64xf32>
    %c3_298 = arith.constant 3 : index
    %c0_299 = arith.constant 0 : index
    %c0_300 = arith.constant 0 : index
    %641 = vector.load %arg19[%c3_298, %c0_299, %c0_300] : memref<4x64x64xf32, #tpu.memory_space<vmem>>, vector<1x64x64xf32>
    %642 = vector.shape_cast %641 : vector<1x64x64xf32> to vector<64x64xf32>
    %cst_301 = arith.constant dense<0.000000e+00> : vector<16x64xf32>
    %643 = tpu.matmul %640, %642, %cst_301 {dimension_numbers = #tpu.dot_dimension_numbers<[1], [0], [0], [1], [0, 0, 1, 1], [], []>} : vector<16x64xf32>, vector<64x64xf32>, vector<16x64xf32> -> vector<16x64xf32>
    %c3_302 = arith.constant 3 : index
    %c0_303 = arith.constant 0 : index
    %c0_304 = arith.constant 0 : index
    %644 = vector.load %arg20[%c3_302, %c0_303, %c0_304] : memref<4x1x64xf32, #tpu.memory_space<vmem>>, vector<1x1x64xf32>
    %645 = vector.shape_cast %644 : vector<1x1x64xf32> to vector<1x64xf32>
    %646 = vector.broadcast %645 : vector<1x64xf32> to vector<16x64xf32>
    %647 = arith.addf %643, %646 : vector<16x64xf32>
    %cst_305 = arith.constant 0.000000e+00 : f32
    %648 = vector.broadcast %cst_305 : f32 to vector<16x64xf32>
    %649 = arith.maximumf %647, %648 : vector<16x64xf32>
    %650 = arith.addf %649, %526 : vector<16x64xf32>
    %c0_306 = arith.constant 0 : index
    %c0_307 = arith.constant 0 : index
    %651 = vector.load %arg23[%c0_306, %c0_307] : memref<128x128xf32, #tpu.memory_space<vmem>>, vector<128x128xf32>
    %cst_308 = arith.constant dense<0.000000e+00> : vector<2x128xf32>
    %652 = tpu.matmul %93, %651, %cst_308 {dimension_numbers = #tpu.dot_dimension_numbers<[1], [0], [0], [1], [0, 0, 1, 1], [], []>} : vector<2x128xf32>, vector<128x128xf32>, vector<2x128xf32> -> vector<2x128xf32>
    %c0_309 = arith.constant 0 : index
    %c0_310 = arith.constant 0 : index
    %653 = vector.load %arg25[%c0_309, %c0_310] : memref<1x128xf32, #tpu.memory_space<vmem>>, vector<1x128xf32>
    %654 = vector.broadcast %653 : vector<1x128xf32> to vector<2x128xf32>
    %655 = arith.addf %652, %654 : vector<2x128xf32>
    %c0_311 = arith.constant 0 : index
    %c0_312 = arith.constant 0 : index
    %656 = vector.load %arg10[%c0_311, %c0_312] : memref<16x16xf32, #tpu.memory_space<vmem>>, vector<16x16xf32>
    %cst_313 = arith.constant dense<0.000000e+00> : vector<16x64xf32>
    %657 = tpu.matmul %656, %650, %cst_313 {dimension_numbers = #tpu.dot_dimension_numbers<[1], [0], [0], [1], [0, 0, 1, 1], [], []>} : vector<16x16xf32>, vector<16x64xf32>, vector<16x64xf32> -> vector<16x64xf32>
    %658 = vector.extract_strided_slice %657 {offsets = [0, 0], sizes = [2, 64], strides = [1, 1]} : vector<16x64xf32> to vector<2x64xf32>
    %c0_314 = arith.constant 0 : index
    %c0_315 = arith.constant 0 : index
    %c0_316 = arith.constant 0 : index
    %659 = vector.load %arg24[%c0_314, %c0_315, %c0_316] : memref<8x64x128xf32, #tpu.memory_space<vmem>>, vector<1x64x128xf32>
    %660 = vector.shape_cast %659 : vector<1x64x128xf32> to vector<64x128xf32>
    %cst_317 = arith.constant dense<0.000000e+00> : vector<2x128xf32>
    %661 = tpu.matmul %658, %660, %cst_317 {dimension_numbers = #tpu.dot_dimension_numbers<[1], [0], [0], [1], [0, 0, 1, 1], [], []>} : vector<2x64xf32>, vector<64x128xf32>, vector<2x128xf32> -> vector<2x128xf32>
    %662 = arith.addf %655, %661 : vector<2x128xf32>
    %663 = vector.extract_strided_slice %657 {offsets = [2, 0], sizes = [2, 64], strides = [1, 1]} : vector<16x64xf32> to vector<2x64xf32>
    %c1_318 = arith.constant 1 : index
    %c0_319 = arith.constant 0 : index
    %c0_320 = arith.constant 0 : index
    %664 = vector.load %arg24[%c1_318, %c0_319, %c0_320] : memref<8x64x128xf32, #tpu.memory_space<vmem>>, vector<1x64x128xf32>
    %665 = vector.shape_cast %664 : vector<1x64x128xf32> to vector<64x128xf32>
    %cst_321 = arith.constant dense<0.000000e+00> : vector<2x128xf32>
    %666 = tpu.matmul %663, %665, %cst_321 {dimension_numbers = #tpu.dot_dimension_numbers<[1], [0], [0], [1], [0, 0, 1, 1], [], []>} : vector<2x64xf32>, vector<64x128xf32>, vector<2x128xf32> -> vector<2x128xf32>
    %667 = arith.addf %662, %666 : vector<2x128xf32>
    %668 = vector.extract_strided_slice %657 {offsets = [4, 0], sizes = [2, 64], strides = [1, 1]} : vector<16x64xf32> to vector<2x64xf32>
    %c2_322 = arith.constant 2 : index
    %c0_323 = arith.constant 0 : index
    %c0_324 = arith.constant 0 : index
    %669 = vector.load %arg24[%c2_322, %c0_323, %c0_324] : memref<8x64x128xf32, #tpu.memory_space<vmem>>, vector<1x64x128xf32>
    %670 = vector.shape_cast %669 : vector<1x64x128xf32> to vector<64x128xf32>
    %cst_325 = arith.constant dense<0.000000e+00> : vector<2x128xf32>
    %671 = tpu.matmul %668, %670, %cst_325 {dimension_numbers = #tpu.dot_dimension_numbers<[1], [0], [0], [1], [0, 0, 1, 1], [], []>} : vector<2x64xf32>, vector<64x128xf32>, vector<2x128xf32> -> vector<2x128xf32>
    %672 = arith.addf %667, %671 : vector<2x128xf32>
    %673 = vector.extract_strided_slice %657 {offsets = [6, 0], sizes = [2, 64], strides = [1, 1]} : vector<16x64xf32> to vector<2x64xf32>
    %c3_326 = arith.constant 3 : index
    %c0_327 = arith.constant 0 : index
    %c0_328 = arith.constant 0 : index
    %674 = vector.load %arg24[%c3_326, %c0_327, %c0_328] : memref<8x64x128xf32, #tpu.memory_space<vmem>>, vector<1x64x128xf32>
    %675 = vector.shape_cast %674 : vector<1x64x128xf32> to vector<64x128xf32>
    %cst_329 = arith.constant dense<0.000000e+00> : vector<2x128xf32>
    %676 = tpu.matmul %673, %675, %cst_329 {dimension_numbers = #tpu.dot_dimension_numbers<[1], [0], [0], [1], [0, 0, 1, 1], [], []>} : vector<2x64xf32>, vector<64x128xf32>, vector<2x128xf32> -> vector<2x128xf32>
    %677 = arith.addf %672, %676 : vector<2x128xf32>
    %678 = vector.extract_strided_slice %657 {offsets = [8, 0], sizes = [2, 64], strides = [1, 1]} : vector<16x64xf32> to vector<2x64xf32>
    %c4_330 = arith.constant 4 : index
    %c0_331 = arith.constant 0 : index
    %c0_332 = arith.constant 0 : index
    %679 = vector.load %arg24[%c4_330, %c0_331, %c0_332] : memref<8x64x128xf32, #tpu.memory_space<vmem>>, vector<1x64x128xf32>
    %680 = vector.shape_cast %679 : vector<1x64x128xf32> to vector<64x128xf32>
    %cst_333 = arith.constant dense<0.000000e+00> : vector<2x128xf32>
    %681 = tpu.matmul %678, %680, %cst_333 {dimension_numbers = #tpu.dot_dimension_numbers<[1], [0], [0], [1], [0, 0, 1, 1], [], []>} : vector<2x64xf32>, vector<64x128xf32>, vector<2x128xf32> -> vector<2x128xf32>
    %682 = arith.addf %677, %681 : vector<2x128xf32>
    %683 = vector.extract_strided_slice %657 {offsets = [10, 0], sizes = [2, 64], strides = [1, 1]} : vector<16x64xf32> to vector<2x64xf32>
    %c5_334 = arith.constant 5 : index
    %c0_335 = arith.constant 0 : index
    %c0_336 = arith.constant 0 : index
    %684 = vector.load %arg24[%c5_334, %c0_335, %c0_336] : memref<8x64x128xf32, #tpu.memory_space<vmem>>, vector<1x64x128xf32>
    %685 = vector.shape_cast %684 : vector<1x64x128xf32> to vector<64x128xf32>
    %cst_337 = arith.constant dense<0.000000e+00> : vector<2x128xf32>
    %686 = tpu.matmul %683, %685, %cst_337 {dimension_numbers = #tpu.dot_dimension_numbers<[1], [0], [0], [1], [0, 0, 1, 1], [], []>} : vector<2x64xf32>, vector<64x128xf32>, vector<2x128xf32> -> vector<2x128xf32>
    %687 = arith.addf %682, %686 : vector<2x128xf32>
    %688 = vector.extract_strided_slice %657 {offsets = [12, 0], sizes = [2, 64], strides = [1, 1]} : vector<16x64xf32> to vector<2x64xf32>
    %c6_338 = arith.constant 6 : index
    %c0_339 = arith.constant 0 : index
    %c0_340 = arith.constant 0 : index
    %689 = vector.load %arg24[%c6_338, %c0_339, %c0_340] : memref<8x64x128xf32, #tpu.memory_space<vmem>>, vector<1x64x128xf32>
    %690 = vector.shape_cast %689 : vector<1x64x128xf32> to vector<64x128xf32>
    %cst_341 = arith.constant dense<0.000000e+00> : vector<2x128xf32>
    %691 = tpu.matmul %688, %690, %cst_341 {dimension_numbers = #tpu.dot_dimension_numbers<[1], [0], [0], [1], [0, 0, 1, 1], [], []>} : vector<2x64xf32>, vector<64x128xf32>, vector<2x128xf32> -> vector<2x128xf32>
    %692 = arith.addf %687, %691 : vector<2x128xf32>
    %693 = vector.extract_strided_slice %657 {offsets = [14, 0], sizes = [2, 64], strides = [1, 1]} : vector<16x64xf32> to vector<2x64xf32>
    %c7_342 = arith.constant 7 : index
    %c0_343 = arith.constant 0 : index
    %c0_344 = arith.constant 0 : index
    %694 = vector.load %arg24[%c7_342, %c0_343, %c0_344] : memref<8x64x128xf32, #tpu.memory_space<vmem>>, vector<1x64x128xf32>
    %695 = vector.shape_cast %694 : vector<1x64x128xf32> to vector<64x128xf32>
    %cst_345 = arith.constant dense<0.000000e+00> : vector<2x128xf32>
    %696 = tpu.matmul %693, %695, %cst_345 {dimension_numbers = #tpu.dot_dimension_numbers<[1], [0], [0], [1], [0, 0, 1, 1], [], []>} : vector<2x64xf32>, vector<64x128xf32>, vector<2x128xf32> -> vector<2x128xf32>
    %697 = arith.addf %692, %696 : vector<2x128xf32>
    %cst_346 = arith.constant 0.000000e+00 : f32
    %698 = vector.broadcast %cst_346 : f32 to vector<2x128xf32>
    %699 = arith.maximumf %697, %698 : vector<2x128xf32>
    %c0_347 = arith.constant 0 : index
    %c0_348 = arith.constant 0 : index
    %700 = vector.load %arg26[%c0_347, %c0_348] : memref<128x4xf32, #tpu.memory_space<vmem>>, vector<128x4xf32>
    %cst_349 = arith.constant dense<0.000000e+00> : vector<2x4xf32>
    %701 = tpu.matmul %699, %700, %cst_349 {dimension_numbers = #tpu.dot_dimension_numbers<[1], [0], [0], [1], [0, 0, 1, 1], [], []>} : vector<2x128xf32>, vector<128x4xf32>, vector<2x4xf32> -> vector<2x4xf32>
    %c0_350 = arith.constant 0 : index
    %c0_351 = arith.constant 0 : index
    %702 = vector.load %arg27[%c0_350, %c0_351] : memref<1x4xf32, #tpu.memory_space<vmem>>, vector<1x4xf32>
    %703 = vector.broadcast %702 : vector<1x4xf32> to vector<2x4xf32>
    %704 = arith.addf %701, %703 : vector<2x4xf32>
    %c0_352 = arith.constant 0 : index
    %c0_353 = arith.constant 0 : index
    %705 = vector.load %arg28[%c0_352, %c0_353] : memref<2x4xf32, #tpu.memory_space<vmem>>, vector<2x4xf32>
    tpu.vector_store %arg28[%c0_352, %c0_353], %704 {strides = array<i32>} : memref<2x4xf32, #tpu.memory_space<vmem>>, vector<2x4xf32>,
    return
  }
}

</mosaic_0001>

<llo_original>
// kernel: hybrid_forward.1
$region0: #{hybrid_forward.1}
  #allocation0 [shape = 'u32[]', space=smem, size = 0x4, offset = 0x4, fixed_abs, tag = 'smem constant byte address 0x4 - core index']
  #allocation1 [shape = 'u32[72,128]{1,0:T(1,128)}', space=vmem, size = 0x9000, scoped, tag = 'internal scratch']
  #allocation2 [shape = 'f32[1,1]{1,0:T(1,128)S(1)}', space=vmem, size = 0x200, scoped, tag = 'scoped memory for hybrid_forward.1']
  %s0 = inlined_call_operand.hbm [shape: f32[2,64,128], index: 0, kind: input, shape index: {}]
  %s1 = inlined_call_operand.vmem [shape: f32[128,16], index: 1, kind: input, shape index: {}]
  %s2 = inlined_call_operand.hbm [shape: f32[1,16], index: 2, kind: input, shape index: {}]
  %s3 = inlined_call_operand.hbm [shape: f32[16,128], index: 3, kind: input, shape index: {}]
  %s4 = inlined_call_operand.hbm [shape: f32[1,128], index: 4, kind: input, shape index: {}]
  %s5 = inlined_call_operand.vmem [shape: f32[64,128], index: 5, kind: input, shape index: {}]
  %s6 = inlined_call_operand.<no memory space> [shape: f32[1,1], index: 6, kind: input, shape index: {}]
  %s7 = inlined_call_operand.vmem [shape: f32[8,128,64], index: 7, kind: input, shape index: {}]
  %s8 = inlined_call_operand.hbm [shape: f32[8,1,64], index: 8, kind: input, shape index: {}]
  %s9 = inlined_call_operand.hbm [shape: f32[16,16], index: 9, kind: input, shape index: {}]
  %s10 = inlined_call_operand.hbm [shape: f32[16,16], index: 10, kind: input, shape index: {}]
  %s11 = inlined_call_operand.vmem [shape: f32[4,64,64], index: 11, kind: input, shape index: {}]
  %s12 = inlined_call_operand.vmem [shape: f32[4,1,64], index: 12, kind: input, shape index: {}]
  %s13 = inlined_call_operand.vmem [shape: f32[4,64,64], index: 13, kind: input, shape index: {}]
  %s14 = inlined_call_operand.hbm [shape: f32[4,1,64], index: 14, kind: input, shape index: {}]
  %s15 = inlined_call_operand.vmem [shape: f32[4,64,64], index: 15, kind: input, shape index: {}]
  %s16 = inlined_call_operand.hbm [shape: f32[4,1,64], index: 16, kind: input, shape index: {}]
  %s17 = inlined_call_operand.vmem [shape: f32[4,64,64], index: 17, kind: input, shape index: {}]
  %s18 = inlined_call_operand.hbm [shape: f32[4,1,64], index: 18, kind: input, shape index: {}]
  %s19 = inlined_call_operand.vmem [shape: f32[4,64,64], index: 19, kind: input, shape index: {}]
  %s20 = inlined_call_operand.hbm [shape: f32[4,1,64], index: 20, kind: input, shape index: {}]
  %s21 = inlined_call_operand.vmem [shape: f32[64,4], index: 21, kind: input, shape index: {}]
  %s22 = inlined_call_operand.hbm [shape: f32[4,64], index: 22, kind: input, shape index: {}]
  %s23 = inlined_call_operand.hbm [shape: f32[128,128], index: 23, kind: input, shape index: {}]
  %s24 = inlined_call_operand.vmem [shape: f32[8,64,128], index: 24, kind: input, shape index: {}]
  %s25 = inlined_call_operand.hbm [shape: f32[1,128], index: 25, kind: input, shape index: {}]
  %s26 = inlined_call_operand.vmem [shape: f32[128,4], index: 26, kind: input, shape index: {}]
  %s27 = inlined_call_operand.hbm [shape: f32[1,4], index: 27, kind: input, shape index: {}]
  %s28 = inlined_call_operand.hbm [shape: f32[2,4], index: 28, kind: output, shape index: {}]
  %s29 = sld [smem:[#allocation0]]
  $region182: #{hybrid_forward.1} parent=0
    _
  %s31 = ssub.s32 1, %s29
  %s32 = scalar_select 0, %s31, %s29
  %v33 = vstv %s6
  %34 = vst [vmem:[#allocation2] sm:$0x1] %v33
  $region1: #{hybrid_forward.1} parent=0
    #allocation3 [shape = 'u8[65536]{0}', space=vmem, size = 0x10000, scoped, tag = 'input window, operand 0, single buffered']
    #allocation4 [shape = 's32[1]{0}', space=sflag, size = 0x4, scoped, tag = 'scoped memory for hybrid_forward.1']
    #allocation5 [shape = 's32[1]{0}', space=sflag, size = 0x4, scoped, tag = 'scoped memory for hybrid_forward.1']
    #allocation6 [shape = 'u8[512]{0}', space=vmem, size = 0x400, scoped, tag = 'input window, operand 2, single buffered']
    #allocation7 [shape = 's32[1]{0}', space=sflag, size = 0x4, scoped, tag = 'scoped memory for hybrid_forward.1']
    #allocation8 [shape = 'u8[8192]{0}', space=vmem, size = 0x2000, scoped, tag = 'input window, operand 3, single buffered']
    #allocation9 [shape = 'u8[512]{0}', space=vmem, size = 0x400, scoped, tag = 'input window, operand 4, single buffered']
    #allocation10 [shape = 's32[1]{0}', space=sflag, size = 0x4, scoped, tag = 'scoped memory for hybrid_forward.1']
    #allocation11 [shape = 'u8[4096]{0}', space=vmem, size = 0x1000, scoped, tag = 'input window, operand 8, single buffered']
    #allocation12 [shape = 'u8[8192]{0}', space=vmem, size = 0x2000, scoped, tag = 'input window, operand 9, single buffered']
    #allocation13 [shape = 's32[1]{0}', space=sflag, size = 0x4, scoped, tag = 'scoped memory for hybrid_forward.1']
    #allocation14 [shape = 'u8[8192]{0}', space=vmem, size = 0x2000, scoped, tag = 'input window, operand 10, single buffered']
    #allocation15 [shape = 'u8[2048]{0}', space=vmem, size = 0x800, scoped, tag = 'input window, operand 14, single buffered']
    #allocation16 [shape = 's32[1]{0}', space=sflag, size = 0x4, scoped, tag = 'scoped memory for hybrid_forward.1']
    #allocation17 [shape = 'u8[2048]{0}', space=vmem, size = 0x800, scoped, tag = 'input window, operand 16, single buffered']
    #allocation18 [shape = 'u8[2048]{0}', space=vmem, size = 0x800, scoped, tag = 'input window, operand 18, single buffered']
    #allocation19 [shape = 's32[1]{0}', space=sflag, size = 0x4, scoped, tag = 'scoped memory for hybrid_forward.1']
    #allocation20 [shape = 'u8[2048]{0}', space=vmem, size = 0x800, scoped, tag = 'input window, operand 20, single buffered']
    #allocation21 [shape = 'u8[2048]{0}', space=vmem, size = 0x800, scoped, tag = 'input window, operand 22, single buffered']
    #allocation22 [shape = 's32[1]{0}', space=sflag, size = 0x4, scoped, tag = 'scoped memory for hybrid_forward.1']
    #allocation23 [shape = 'u8[65536]{0}', space=vmem, size = 0x10000, scoped, tag = 'input window, operand 23, single buffered']
    #allocation24 [shape = 'u8[512]{0}', space=vmem, size = 0x400, scoped, tag = 'input window, operand 25, single buffered']
    #allocation25 [shape = 's32[1]{0}', space=sflag, size = 0x4, scoped, tag = 'scoped memory for hybrid_forward.1']
    #allocation26 [shape = 'u8[512]{0}', space=vmem, size = 0x400, scoped, tag = 'input window, operand 27, single buffered']
    #allocation27 [shape = 'u8[1024]{0}', space=vmem, size = 0x400, scoped, tag = 'output window, operand 0, single buffered']
    %35 = vsyncpa [#allocation4], 0
    %36 = vsyncpa [#allocation7], 0
    %37 = vsyncpa [#allocation10], 0
    %38 = vsyncpa [#allocation13], 0
    %39 = vsyncpa [#allocation16], 0
    %40 = vsyncpa [#allocation19], 0
    %41 = vsyncpa [#allocation22], 0
    %42 = vsyncpa [#allocation25], 0
    %43 = vsyncpa [#allocation5], 0
    // Predicated region
    $region2: #{hybrid_forward.1} parent=1 // pred_check
      _
    $region3: #{hybrid_forward.1} parent=1 // pred_check_branch
      %45 = sbr.rel (0) target = $region5
    $region4: #{hybrid_forward.1} parent=1 // pred_region
      %47 = vsyncadd [#allocation4], 0
      %s48 = sshll.u32 %s0, 4
      %s49 = int_to_ptr.hbm [resolvable:$true] %s48
      %s50 = sshll.u32 [#allocation3], 4
      %s51 = int_to_ptr.vmem [resolvable:$true] %s50
      %56 = dma.hbm_to_vmem [thread:$0]  %s49, 2048, %s51, [#allocation4], 128, 128, 8
    $region5: #{hybrid_forward.1} parent=1 // pred_fallthru
      _
    // Predicated region
    $region6: #{hybrid_forward.1} parent=1 // pred_check
      _
    $region7: #{hybrid_forward.1} parent=1 // pred_check_branch
      %58 = sbr.rel (0) target = $region9
    $region8: #{hybrid_forward.1} parent=1 // pred_region
      _
    $region9: #{hybrid_forward.1} parent=1 // pred_fallthru
      _
    // Predicated region
    $region10: #{hybrid_forward.1} parent=1 // pred_check
      _
    $region11: #{hybrid_forward.1} parent=1 // pred_check_branch
      %60 = sbr.rel (0) target = $region13
    $region12: #{hybrid_forward.1} parent=1 // pred_region
      %62 = vsyncadd [#allocation7], 0
      %s64 = sshll.u32 %s2, 4
      %s65 = int_to_ptr.hbm [resolvable:$true] %s64
      %s66 = sshll.u32 [#allocation6], 4
      %s67 = int_to_ptr.vmem [resolvable:$true] %s66
      %69 = dma.hbm_to_vmem [thread:$0]  %s65, 16, %s67, [#allocation7]
    $region13: #{hybrid_forward.1} parent=1 // pred_fallthru
      _
    // Predicated region
    $region14: #{hybrid_forward.1} parent=1 // pred_check
      _
    $region15: #{hybrid_forward.1} parent=1 // pred_check_branch
      %71 = sbr.rel (0) target = $region17
    $region16: #{hybrid_forward.1} parent=1 // pred_region
      %73 = vsyncadd [#allocation7], 0
      %s74 = sshll.u32 %s3, 4
      %s75 = int_to_ptr.hbm [resolvable:$true] %s74
      %s76 = sshll.u32 [#allocation8], 4
      %s77 = int_to_ptr.vmem [resolvable:$true] %s76
      %82 = dma.hbm_to_vmem [thread:$0]  %s75, 256, %s77, [#allocation7], 128, 128, 8
    $region17: #{hybrid_forward.1} parent=1 // pred_fallthru
      _
    // Predicated region
    $region18: #{hybrid_forward.1} parent=1 // pred_check
      _
    $region19: #{hybrid_forward.1} parent=1 // pred_check_branch
      %84 = sbr.rel (0) target = $region21
    $region20: #{hybrid_forward.1} parent=1 // pred_region
      %86 = vsyncadd [#allocation10], 0
      %s88 = sshll.u32 %s4, 4
      %s89 = int_to_ptr.hbm [resolvable:$true] %s88
      %s90 = sshll.u32 [#allocation9], 4
      %s91 = int_to_ptr.vmem [resolvable:$true] %s90
      %93 = dma.hbm_to_vmem [thread:$0]  %s89, 16, %s91, [#allocation10]
    $region21: #{hybrid_forward.1} parent=1 // pred_fallthru
      _
    // Predicated region
    $region22: #{hybrid_forward.1} parent=1 // pred_check
      _
    $region23: #{hybrid_forward.1} parent=1 // pred_check_branch
      %95 = sbr.rel (0) target = $region25
    $region24: #{hybrid_forward.1} parent=1 // pred_region
      _
    $region25: #{hybrid_forward.1} parent=1 // pred_fallthru
      _
    // Predicated region
    $region26: #{hybrid_forward.1} parent=1 // pred_check
      _
    $region27: #{hybrid_forward.1} parent=1 // pred_check_branch
      %97 = sbr.rel (0) target = $region29
    $region28: #{hybrid_forward.1} parent=1 // pred_region
      _
    $region29: #{hybrid_forward.1} parent=1 // pred_fallthru
      _
    // Predicated region
    $region30: #{hybrid_forward.1} parent=1 // pred_check
      _
    $region31: #{hybrid_forward.1} parent=1 // pred_check_branch
      %99 = sbr.rel (0) target = $region33
    $region32: #{hybrid_forward.1} parent=1 // pred_region
      _
    $region33: #{hybrid_forward.1} parent=1 // pred_fallthru
      _
    // Predicated region
    $region34: #{hybrid_forward.1} parent=1 // pred_check
      _
    $region35: #{hybrid_forward.1} parent=1 // pred_check_branch
      %101 = sbr.rel (0) target = $region37
    $region36: #{hybrid_forward.1} parent=1 // pred_region
      %103 = vsyncadd [#allocation10], 0
      %s104 = sshll.u32 %s8, 4
      %s105 = int_to_ptr.hbm [resolvable:$true] %s104
      %s106 = sshll.u32 [#allocation11], 4
      %s107 = int_to_ptr.vmem [resolvable:$true] %s106
      %112 = dma.hbm_to_vmem [thread:$0]  %s105, 128, %s107, [#allocation10], 16, 16, 1
    $region37: #{hybrid_forward.1} parent=1 // pred_fallthru
      _
    // Predicated region
    $region38: #{hybrid_forward.1} parent=1 // pred_check
      _
    $region39: #{hybrid_forward.1} parent=1 // pred_check_branch
      %114 = sbr.rel (0) target = $region41
    $region40: #{hybrid_forward.1} parent=1 // pred_region
      %116 = vsyncadd [#allocation13], 0
      %s117 = sshll.u32 %s9, 4
      %s118 = int_to_ptr.hbm [resolvable:$true] %s117
      %s119 = sshll.u32 [#allocation12], 4
      %s120 = int_to_ptr.vmem [resolvable:$true] %s119
      %125 = dma.hbm_to_vmem [thread:$0]  %s118, 256, %s120, [#allocation13], 128, 128, 8
    $region41: #{hybrid_forward.1} parent=1 // pred_fallthru
      _
    // Predicated region
    $region42: #{hybrid_forward.1} parent=1 // pred_check
      _
    $region43: #{hybrid_forward.1} parent=1 // pred_check_branch
      %127 = sbr.rel (0) target = $region45
    $region44: #{hybrid_forward.1} parent=1 // pred_region
      %129 = vsyncadd [#allocation13], 0
      %s130 = sshll.u32 %s10, 4
      %s131 = int_to_ptr.hbm [resolvable:$true] %s130
      %s132 = sshll.u32 [#allocation14], 4
      %s133 = int_to_ptr.vmem [resolvable:$true] %s132
      %138 = dma.hbm_to_vmem [thread:$0]  %s131, 256, %s133, [#allocation13], 128, 128, 8
    $region45: #{hybrid_forward.1} parent=1 // pred_fallthru
      _
    // Predicated region
    $region46: #{hybrid_forward.1} parent=1 // pred_check
      _
    $region47: #{hybrid_forward.1} parent=1 // pred_check_branch
      %140 = sbr.rel (0) target = $region49
    $region48: #{hybrid_forward.1} parent=1 // pred_region
      _
    $region49: #{hybrid_forward.1} parent=1 // pred_fallthru
      _
    // Predicated region
    $region50: #{hybrid_forward.1} parent=1 // pred_check
      _
    $region51: #{hybrid_forward.1} parent=1 // pred_check_branch
      %142 = sbr.rel (0) target = $region53
    $region52: #{hybrid_forward.1} parent=1 // pred_region
      _
    $region53: #{hybrid_forward.1} parent=1 // pred_fallthru
      _
    // Predicated region
    $region54: #{hybrid_forward.1} parent=1 // pred_check
      _
    $region55: #{hybrid_forward.1} parent=1 // pred_check_branch
      %144 = sbr.rel (0) target = $region57
    $region56: #{hybrid_forward.1} parent=1 // pred_region
      _
    $region57: #{hybrid_forward.1} parent=1 // pred_fallthru
      _
    // Predicated region
    $region58: #{hybrid_forward.1} parent=1 // pred_check
      _
    $region59: #{hybrid_forward.1} parent=1 // pred_check_branch
      %146 = sbr.rel (0) target = $region61
    $region60: #{hybrid_forward.1} parent=1 // pred_region
      %148 = vsyncadd [#allocation16], 0
      %s149 = sshll.u32 %s14, 4
      %s150 = int_to_ptr.hbm [resolvable:$true] %s149
      %s151 = sshll.u32 [#allocation15], 4
      %s152 = int_to_ptr.vmem [resolvable:$true] %s151
      %157 = dma.hbm_to_vmem [thread:$0]  %s150, 64, %s152, [#allocation16], 16, 16, 1
    $region61: #{hybrid_forward.1} parent=1 // pred_fallthru
      _
    // Predicated region
    $region62: #{hybrid_forward.1} parent=1 // pred_check
      _
    $region63: #{hybrid_forward.1} parent=1 // pred_check_branch
      %159 = sbr.rel (0) target = $region65
    $region64: #{hybrid_forward.1} parent=1 // pred_region
      _
    $region65: #{hybrid_forward.1} parent=1 // pred_fallthru
      _
    // Predicated region
    $region66: #{hybrid_forward.1} parent=1 // pred_check
      _
    $region67: #{hybrid_forward.1} parent=1 // pred_check_branch
      %161 = sbr.rel (0) target = $region69
    $region68: #{hybrid_forward.1} parent=1 // pred_region
      %163 = vsyncadd [#allocation16], 0
      %s164 = sshll.u32 %s16, 4
      %s165 = int_to_ptr.hbm [resolvable:$true] %s164
      %s166 = sshll.u32 [#allocation17], 4
      %s167 = int_to_ptr.vmem [resolvable:$true] %s166
      %172 = dma.hbm_to_vmem [thread:$0]  %s165, 64, %s167, [#allocation16], 16, 16, 1
    $region69: #{hybrid_forward.1} parent=1 // pred_fallthru
      _
    // Predicated region
    $region70: #{hybrid_forward.1} parent=1 // pred_check
      _
    $region71: #{hybrid_forward.1} parent=1 // pred_check_branch
      %174 = sbr.rel (0) target = $region73
    $region72: #{hybrid_forward.1} parent=1 // pred_region
      _
    $region73: #{hybrid_forward.1} parent=1 // pred_fallthru
      _
    // Predicated region
    $region74: #{hybrid_forward.1} parent=1 // pred_check
      _
    $region75: #{hybrid_forward.1} parent=1 // pred_check_branch
      %176 = sbr.rel (0) target = $region77
    $region76: #{hybrid_forward.1} parent=1 // pred_region
      %178 = vsyncadd [#allocation19], 0
      %s179 = sshll.u32 %s18, 4
      %s180 = int_to_ptr.hbm [resolvable:$true] %s179
      %s181 = sshll.u32 [#allocation18], 4
      %s182 = int_to_ptr.vmem [resolvable:$true] %s181
      %187 = dma.hbm_to_vmem [thread:$0]  %s180, 64, %s182, [#allocation19], 16, 16, 1
    $region77: #{hybrid_forward.1} parent=1 // pred_fallthru
      _
    // Predicated region
    $region78: #{hybrid_forward.1} parent=1 // pred_check
      _
    $region79: #{hybrid_forward.1} parent=1 // pred_check_branch
      %189 = sbr.rel (0) target = $region81
    $region80: #{hybrid_forward.1} parent=1 // pred_region
      _
    $region81: #{hybrid_forward.1} parent=1 // pred_fallthru
      _
    // Predicated region
    $region82: #{hybrid_forward.1} parent=1 // pred_check
      _
    $region83: #{hybrid_forward.1} parent=1 // pred_check_branch
      %191 = sbr.rel (0) target = $region85
    $region84: #{hybrid_forward.1} parent=1 // pred_region
      %193 = vsyncadd [#allocation19], 0
      %s194 = sshll.u32 %s20, 4
      %s195 = int_to_ptr.hbm [resolvable:$true] %s194
      %s196 = sshll.u32 [#allocation20], 4
      %s197 = int_to_ptr.vmem [resolvable:$true] %s196
      %202 = dma.hbm_to_vmem [thread:$0]  %s195, 64, %s197, [#allocation19], 16, 16, 1
    $region85: #{hybrid_forward.1} parent=1 // pred_fallthru
      _
    // Predicated region
    $region86: #{hybrid_forward.1} parent=1 // pred_check
      _
    $region87: #{hybrid_forward.1} parent=1 // pred_check_branch
      %204 = sbr.rel (0) target = $region89
    $region88: #{hybrid_forward.1} parent=1 // pred_region
      _
    $region89: #{hybrid_forward.1} parent=1 // pred_fallthru
      _
    // Predicated region
    $region90: #{hybrid_forward.1} parent=1 // pred_check
      _
    $region91: #{hybrid_forward.1} parent=1 // pred_check_branch
      %206 = sbr.rel (0) target = $region93
    $region92: #{hybrid_forward.1} parent=1 // pred_region
      %208 = vsyncadd [#allocation22], 0
      %s210 = sshll.u32 %s22, 4
      %s211 = int_to_ptr.hbm [resolvable:$true] %s210
      %s212 = sshll.u32 [#allocation21], 4
      %s213 = int_to_ptr.vmem [resolvable:$true] %s212
      %215 = dma.hbm_to_vmem [thread:$0]  %s211, 64, %s213, [#allocation22]
    $region93: #{hybrid_forward.1} parent=1 // pred_fallthru
      _
    // Predicated region
    $region94: #{hybrid_forward.1} parent=1 // pred_check
      _
    $region95: #{hybrid_forward.1} parent=1 // pred_check_branch
      %217 = sbr.rel (0) target = $region97
    $region96: #{hybrid_forward.1} parent=1 // pred_region
      %219 = vsyncadd [#allocation22], 0
      %s220 = sshll.u32 %s23, 4
      %s221 = int_to_ptr.hbm [resolvable:$true] %s220
      %s222 = sshll.u32 [#allocation23], 4
      %s223 = int_to_ptr.vmem [resolvable:$true] %s222
      %228 = dma.hbm_to_vmem [thread:$0]  %s221, 2048, %s223, [#allocation22], 128, 128, 8
    $region97: #{hybrid_forward.1} parent=1 // pred_fallthru
      _
    // Predicated region
    $region98: #{hybrid_forward.1} parent=1 // pred_check
      _
    $region99: #{hybrid_forward.1} parent=1 // pred_check_branch
      %230 = sbr.rel (0) target = $region101
    $region100: #{hybrid_forward.1} parent=1 // pred_region
      _
    $region101: #{hybrid_forward.1} parent=1 // pred_fallthru
      _
    // Predicated region
    $region102: #{hybrid_forward.1} parent=1 // pred_check
      _
    $region103: #{hybrid_forward.1} parent=1 // pred_check_branch
      %232 = sbr.rel (0) target = $region105
    $region104: #{hybrid_forward.1} parent=1 // pred_region
      %234 = vsyncadd [#allocation25], 0
      %s236 = sshll.u32 %s25, 4
      %s237 = int_to_ptr.hbm [resolvable:$true] %s236
      %s238 = sshll.u32 [#allocation24], 4
      %s239 = int_to_ptr.vmem [resolvable:$true] %s238
      %241 = dma.hbm_to_vmem [thread:$0]  %s237, 16, %s239, [#allocation25]
    $region105: #{hybrid_forward.1} parent=1 // pred_fallthru
      _
    // Predicated region
    $region106: #{hybrid_forward.1} parent=1 // pred_check
      _
    $region107: #{hybrid_forward.1} parent=1 // pred_check_branch
      %243 = sbr.rel (0) target = $region109
    $region108: #{hybrid_forward.1} parent=1 // pred_region
      _
    $region109: #{hybrid_forward.1} parent=1 // pred_fallthru
      _
    // Predicated region
    $region110: #{hybrid_forward.1} parent=1 // pred_check
      _
    $region111: #{hybrid_forward.1} parent=1 // pred_check_branch
      %245 = sbr.rel (0) target = $region113
    $region112: #{hybrid_forward.1} parent=1 // pred_region
      %247 = vsyncadd [#allocation25], 0
      %s249 = sshll.u32 %s27, 4
      %s250 = int_to_ptr.hbm [resolvable:$true] %s249
      %s251 = sshll.u32 [#allocation26], 4
      %s252 = int_to_ptr.vmem [resolvable:$true] %s251
      %254 = dma.hbm_to_vmem [thread:$0]  %s250, 16, %s252, [#allocation25]
    $region113: #{hybrid_forward.1} parent=1 // pred_fallthru
      _
    // Predicated region
    $region114: #{hybrid_forward.1} parent=1 // pred_check
      _
    $region115: #{hybrid_forward.1} parent=1 // pred_check_branch
      %256 = sbr.rel (0) target = $region117
    $region116: #{hybrid_forward.1} parent=1 // pred_region
      %258 = dma.done [#allocation4], 2048
    $region117: #{hybrid_forward.1} parent=1 // pred_fallthru
      _
    // Predicated region
    $region118: #{hybrid_forward.1} parent=1 // pred_check
      _
    $region119: #{hybrid_forward.1} parent=1 // pred_check_branch
      %260 = sbr.rel (0) target = $region121
    $region120: #{hybrid_forward.1} parent=1 // pred_region
      %262 = dma.done [#allocation7], 16
    $region121: #{hybrid_forward.1} parent=1 // pred_fallthru
      _
    // Predicated region
    $region122: #{hybrid_forward.1} parent=1 // pred_check
      _
    $region123: #{hybrid_forward.1} parent=1 // pred_check_branch
      %264 = sbr.rel (0) target = $region125
    $region124: #{hybrid_forward.1} parent=1 // pred_region
      %266 = dma.done [#allocation7], 256
    $region125: #{hybrid_forward.1} parent=1 // pred_fallthru
      _
    // Predicated region
    $region126: #{hybrid_forward.1} parent=1 // pred_check
      _
    $region127: #{hybrid_forward.1} parent=1 // pred_check_branch
      %268 = sbr.rel (0) target = $region129
    $region128: #{hybrid_forward.1} parent=1 // pred_region
      %270 = dma.done [#allocation10], 16
    $region129: #{hybrid_forward.1} parent=1 // pred_fallthru
      _
    // Predicated region
    $region130: #{hybrid_forward.1} parent=1 // pred_check
      _
    $region131: #{hybrid_forward.1} parent=1 // pred_check_branch
      %272 = sbr.rel (0) target = $region133
    $region132: #{hybrid_forward.1} parent=1 // pred_region
      %274 = dma.done [#allocation10], 128
    $region133: #{hybrid_forward.1} parent=1 // pred_fallthru
      _
    // Predicated region
    $region134: #{hybrid_forward.1} parent=1 // pred_check
      _
    $region135: #{hybrid_forward.1} parent=1 // pred_check_branch
      %276 = sbr.rel (0) target = $region137
    $region136: #{hybrid_forward.1} parent=1 // pred_region
      %278 = dma.done [#allocation13], 256
    $region137: #{hybrid_forward.1} parent=1 // pred_fallthru
      _
    // Predicated region
    $region138: #{hybrid_forward.1} parent=1 // pred_check
      _
    $region139: #{hybrid_forward.1} parent=1 // pred_check_branch
      %280 = sbr.rel (0) target = $region141
    $region140: #{hybrid_forward.1} parent=1 // pred_region
      %282 = dma.done [#allocation13], 256
    $region141: #{hybrid_forward.1} parent=1 // pred_fallthru
      _
    // Predicated region
    $region142: #{hybrid_forward.1} parent=1 // pred_check
      _
    $region143: #{hybrid_forward.1} parent=1 // pred_check_branch
      %284 = sbr.rel (0) target = $region145
    $region144: #{hybrid_forward.1} parent=1 // pred_region
      %286 = dma.done [#allocation16], 64
    $region145: #{hybrid_forward.1} parent=1 // pred_fallthru
      _
    // Predicated region
    $region146: #{hybrid_forward.1} parent=1 // pred_check
      _
    $region147: #{hybrid_forward.1} parent=1 // pred_check_branch
      %288 = sbr.rel (0) target = $region149
    $region148: #{hybrid_forward.1} parent=1 // pred_region
      %290 = dma.done [#allocation16], 64
    $region149: #{hybrid_forward.1} parent=1 // pred_fallthru
      _
    // Predicated region
    $region150: #{hybrid_forward.1} parent=1 // pred_check
      _
    $region151: #{hybrid_forward.1} parent=1 // pred_check_branch
      %292 = sbr.rel (0) target = $region153
    $region152: #{hybrid_forward.1} parent=1 // pred_region
      %294 = dma.done [#allocation19], 64
    $region153: #{hybrid_forward.1} parent=1 // pred_fallthru
      _
    // Predicated region
    $region154: #{hybrid_forward.1} parent=1 // pred_check
      _
    $region155: #{hybrid_forward.1} parent=1 // pred_check_branch
      %296 = sbr.rel (0) target = $region157
    $region156: #{hybrid_forward.1} parent=1 // pred_region
      %298 = dma.done [#allocation19], 64
    $region157: #{hybrid_forward.1} parent=1 // pred_fallthru
      _
    // Predicated region
    $region158: #{hybrid_forward.1} parent=1 // pred_check
      _
    $region159: #{hybrid_forward.1} parent=1 // pred_check_branch
      %300 = sbr.rel (0) target = $region161
    $region160: #{hybrid_forward.1} parent=1 // pred_region
      %302 = dma.done [#allocation22], 64
    $region161: #{hybrid_forward.1} parent=1 // pred_fallthru
      _
    // Predicated region
    $region162: #{hybrid_forward.1} parent=1 // pred_check
      _
    $region163: #{hybrid_forward.1} parent=1 // pred_check_branch
      %304 = sbr.rel (0) target = $region165
    $region164: #{hybrid_forward.1} parent=1 // pred_region
      %306 = dma.done [#allocation22], 2048
    $region165: #{hybrid_forward.1} parent=1 // pred_fallthru
      _
    // Predicated region
    $region166: #{hybrid_forward.1} parent=1 // pred_check
      _
    $region167: #{hybrid_forward.1} parent=1 // pred_check_branch
      %308 = sbr.rel (0) target = $region169
    $region168: #{hybrid_forward.1} parent=1 // pred_region
      %310 = dma.done [#allocation25], 16
    $region169: #{hybrid_forward.1} parent=1 // pred_fallthru
      _
    // Predicated region
    $region170: #{hybrid_forward.1} parent=1 // pred_check
      _
    $region171: #{hybrid_forward.1} parent=1 // pred_check_branch
      %312 = sbr.rel (0) target = $region173
    $region172: #{hybrid_forward.1} parent=1 // pred_region
      %314 = dma.done [#allocation25], 16
    $region173: #{hybrid_forward.1} parent=1 // pred_fallthru
      _
    %v315 = vld [vmem:[%s1] sm:$0xff]
    %v316 = vld [vmem:[%s1 + $0x8] sm:$0xff]
    %v317 = vld [vmem:[%s1 + $0x10] sm:$0xff]
    %v318 = vld [vmem:[%s1 + $0x18] sm:$0xff]
    %v319 = vld [vmem:[%s1 + $0x20] sm:$0xff]
    %v320 = vld [vmem:[%s1 + $0x28] sm:$0xff]
    %v321 = vld [vmem:[%s1 + $0x30] sm:$0xff]
    %v322 = vld [vmem:[%s1 + $0x38] sm:$0xff]
    %v323 = vld [vmem:[%s1 + $0x40] sm:$0xff]
    %v324 = vld [vmem:[%s1 + $0x48] sm:$0xff]
    %v325 = vld [vmem:[%s1 + $0x50] sm:$0xff]
    %v326 = vld [vmem:[%s1 + $0x58] sm:$0xff]
    %v327 = vld [vmem:[%s1 + $0x60] sm:$0xff]
    %v328 = vld [vmem:[%s1 + $0x68] sm:$0xff]
    %v329 = vld [vmem:[%s1 + $0x70] sm:$0xff]
    %v330 = vld [vmem:[%s1 + $0x78] sm:$0xff]
    %v331 = vld [vmem:[#allocation6] sm:$0x1]
    %v332 = vld [vmem:[#allocation8] sm:$0xff]
    %v333 = vld [vmem:[#allocation8 + $0x8] sm:$0xff]
    %v334 = vld [vmem:[#allocation9] sm:$0x1]
    %v335 = vld [vmem:[%s5] sm:$0xff]
    %v336 = vld [vmem:[%s5 + $0x8] sm:$0xff]
    %v337 = vld [vmem:[%s5 + $0x10] sm:$0xff]
    %v338 = vld [vmem:[%s5 + $0x18] sm:$0xff]
    %v339 = vld [vmem:[%s5 + $0x20] sm:$0xff]
    %v340 = vld [vmem:[%s5 + $0x28] sm:$0xff]
    %v341 = vld [vmem:[%s5 + $0x30] sm:$0xff]
    %v342 = vld [vmem:[%s5 + $0x38] sm:$0xff]
    %v343 = vld [vmem:[#allocation2] sm:$0x1]
    %v344 = vld [vmem:[#allocation3] sm:$0xff]
    %v345 = vld [vmem:[#allocation3 + $0x8] sm:$0xff]
    %v346 = vld [vmem:[#allocation3 + $0x10] sm:$0xff]
    %v347 = vld [vmem:[#allocation3 + $0x18] sm:$0xff]
    %v348 = vld [vmem:[#allocation3 + $0x20] sm:$0xff]
    %v349 = vld [vmem:[#allocation3 + $0x28] sm:$0xff]
    %v350 = vld [vmem:[#allocation3 + $0x30] sm:$0xff]
    %v351 = vld [vmem:[#allocation3 + $0x38] sm:$0xff]
    %s352 = scalar_lea.vmem [#allocation3], 64
    %v353 = vld [vmem:[%s352] sm:$0xff]
    %v354 = vld [vmem:[%s352 + $0x8] sm:$0xff]
    %v355 = vld [vmem:[%s352 + $0x10] sm:$0xff]
    %v356 = vld [vmem:[%s352 + $0x18] sm:$0xff]
    %v357 = vld [vmem:[%s352 + $0x20] sm:$0xff]
    %v358 = vld [vmem:[%s352 + $0x28] sm:$0xff]
    %v359 = vld [vmem:[%s352 + $0x30] sm:$0xff]
    %v360 = vld [vmem:[%s352 + $0x38] sm:$0xff]
    %v361 = vadd.f32 %v344, %v345
    %v362 = vadd.f32 %v361, %v346
    %v363 = vadd.f32 %v362, %v347
    %v364 = vadd.f32 %v363, %v348
    %v365 = vadd.f32 %v364, %v349
    %v366 = vadd.f32 %v365, %v350
    %v367 = vadd.f32 %v366, %v351
    %v368 = vrot.slane %v367, 4
    %v369 = vadd.f32 %v367, %v368
    %v370 = vrot.slane %v369, 2
    %v371 = vadd.f32 %v369, %v370
    %v372 = vrot.slane %v371, 1
    %v373 = vadd.f32 %v371, %v372
    %v374 = vrcp.pop 64.0
    %v375 = vmul.f32 64.0, %v374
    %v376 = vsub.f32 1.0, %v375
    %v377 = vmul.f32 %v374, %v376
    %v378 = vadd.f32 %v374, %v377
    %vm379 = vweird.f32 %v374
    %v380 = vsel %vm379, %v374, %v378
    %v381 = vmul.f32 %v373, %v380
    %v382 = vadd.f32 %v353, %v354
    %v383 = vadd.f32 %v382, %v355
    %v384 = vadd.f32 %v383, %v356
    %v385 = vadd.f32 %v384, %v357
    %v386 = vadd.f32 %v385, %v358
    %v387 = vadd.f32 %v386, %v359
    %v388 = vadd.f32 %v387, %v360
    %v389 = vrot.slane %v388, 4
    %v390 = vadd.f32 %v388, %v389
    %v391 = vrot.slane %v390, 2
    %v392 = vadd.f32 %v390, %v391
    %v393 = vrot.slane %v392, 1
    %v394 = vadd.f32 %v392, %v393
    %v395 = vmul.f32 %v394, %v380
    %v396 = vmax.f32 %v344, %v348
    %v397 = vmax.f32 %v345, %v349
    %v398 = vmax.f32 %v346, %v350
    %v399 = vmax.f32 %v347, %v351
    %v400 = vmax.f32 %v396, %v397
    %v401 = vmax.f32 %v398, %v399
    %v402 = vmax.f32 %v400, %v401
    %v403 = vrot.slane %v402, 4
    %v404 = vmax.f32 %v402, %v403
    %v405 = vrot.slane %v404, 2
    %v406 = vmax.f32 %v404, %v405
    %v407 = vrot.slane %v406, 1
    %v408 = vmax.f32 %v406, %v407
    %v409 = vmax.f32 %v353, %v357
    %v410 = vmax.f32 %v354, %v358
    %v411 = vmax.f32 %v355, %v359
    %v412 = vmax.f32 %v356, %v360
    %v413 = vmax.f32 %v409, %v410
    %v414 = vmax.f32 %v411, %v412
    %v415 = vmax.f32 %v413, %v414
    %v416 = vrot.slane %v415, 4
    %v417 = vmax.f32 %v415, %v416
    %v418 = vrot.slane %v417, 2
    %v419 = vmax.f32 %v417, %v418
    %v420 = vrot.slane %v419, 1
    %v421 = vmax.f32 %v419, %v420
    %vm422 = vcmask 1040384
    %v423 = vsel %vm422, %v381, %v395
    %vm424 = vcmask 1041408
    %v425 = vsel %vm424, %v423, %v408
    %vm426 = vcmask 1042432
    %v427 = vsel %vm426, %v425, %v421
    %v429 = vperm.slane %v331, 0
    %431 = vmatpush.msra.mxu0 %v330
    %432 = vmatpush.msra.mxu0 %v329
    %433 = vmatpush.msra.mxu0 %v328
    %434 = vmatpush.msra.mxu0 %v327
    %435 = vmatpush.msra.mxu0 %v326
    %436 = vmatpush.msra.mxu0 %v325
    %437 = vmatpush.msra.mxu0 %v324
    %438 = vmatpush.msra.mxu0 %v323
    %439 = vmatpush.msra.mxu0 %v322
    %440 = vmatpush.msra.mxu0 %v321
    %441 = vmatpush.msra.mxu0 %v320
    %442 = vmatpush.msra.mxu0 %v319
    %443 = vmatpush.msra.mxu0 %v318
    %444 = vmatpush.msra.mxu0 %v317
    %445 = vmatpush.msra.mxu0 %v316
    %446 = vmatpush.msra.mxu0 %v315
    %447 = vmatmul.f32.gmra.mxu0 %v427
    %v448 = vpop.f32.mrf.mxu0
    %v449 = vadd.f32 %v429, %v448
    %450 = vdwg.mxu0
    %v451 = vmax.f32 %v449, 0.0
    %v453 = vperm.slane %v334, 0
    %vm455 = vcmask 130048
    %v457 = vsel %vm455, %v451, 0
    %459 = vmatpush.msra.mxu0 0.0
    %460 = vmatpush.msra.mxu0 0.0
    %461 = vmatpush.msra.mxu0 0.0
    %462 = vmatpush.msra.mxu0 0.0
    %463 = vmatpush.msra.mxu0 0.0
    %464 = vmatpush.msra.mxu0 0.0
    %465 = vmatpush.msra.mxu0 0.0
    %466 = vmatpush.msra.mxu0 0.0
    %467 = vmatpush.msra.mxu0 0.0
    %468 = vmatpush.msra.mxu0 0.0
    %469 = vmatpush.msra.mxu0 0.0
    %470 = vmatpush.msra.mxu0 0.0
    %471 = vmatpush.msra.mxu0 0.0
    %472 = vmatpush.msra.mxu0 0.0
    %473 = vmatpush.msra.mxu0 %v333
    %474 = vmatpush.msra.mxu0 %v332
    %475 = vmatmul.f32.gmra.mxu0 %v457
    %v476 = vpop.f32.mrf.mxu0
    %v477 = vadd.f32 %v453, %v476
    %478 = vdwg.mxu0
    %v480 = vrot.slane %v477, 2
    %v482 = vadd.f32 %v477, %v480
    %v483 = vsub.f32 0.0, %v482
    %v484 = vmul.f32 %v483, 1.442695
    %v485 = vpow.pop %v484
    %v486 = vadd.f32 %v485, 1.0
    %v487 = vrcp.pop %v486
    %v488 = vmul.f32 %v486, %v487
    %v489 = vsub.f32 1.0, %v488
    %v490 = vmul.f32 %v487, %v489
    %v491 = vadd.f32 %v487, %v490
    %vm492 = vweird.f32 %v486
    %vm493 = vweird.f32 %v487
    %vm494 = vmor %vm492, %vm493
    %v495 = vsel %vm494, %v487, %v491
    %v496 = vand.u32 2147483647, %v486
    %vm497 = vcmp.eq.f32.partialorder %v496, 8.507059e+37
    %v498 = vand.u32 %v486, 2147483648
    %v499 = vor.u32 1.1754944e-38, %v498
    %v500 = vsel %vm497, %v499, %v495
    %v501 = vmul.f32 1.0, %v500
    %v502 = vperm.slane %v501, 0
    %v503 = vmul.f32 %v344, %v502
    %v504 = vmul.f32 %v345, %v502
    %v505 = vmul.f32 %v346, %v502
    %v506 = vmul.f32 %v347, %v502
    %v507 = vmul.f32 %v348, %v502
    %v508 = vmul.f32 %v349, %v502
    %v509 = vmul.f32 %v350, %v502
    %v510 = vmul.f32 %v351, %v502
    %511 = vadd.xlane.f32.xlu0 %v503
    %v512 = vpop.xlane.xlu0 %511
    %513 = vadd.xlane.f32.xlu0 %v504
    %v514 = vpop.xlane.xlu0 %513
    %515 = vadd.xlane.f32.xlu0 %v505
    %v516 = vpop.xlane.xlu0 %515
    %517 = vadd.xlane.f32.xlu0 %v506
    %v518 = vpop.xlane.xlu0 %517
    %519 = vadd.xlane.f32.xlu0 %v507
    %v520 = vpop.xlane.xlu0 %519
    %521 = vadd.xlane.f32.xlu0 %v508
    %v522 = vpop.xlane.xlu0 %521
    %523 = vadd.xlane.f32.xlu0 %v509
    %v524 = vpop.xlane.xlu0 %523
    %525 = vadd.xlane.f32.xlu0 %v510
    %v526 = vpop.xlane.xlu0 %525
    %v527 = vrcp.pop 128.0
    %v528 = vmul.f32 128.0, %v527
    %v529 = vsub.f32 1.0, %v528
    %v530 = vmul.f32 %v527, %v529
    %v531 = vadd.f32 %v527, %v530
    %vm532 = vweird.f32 %v527
    %v533 = vsel %vm532, %v527, %v531
    %v534 = vmul.f32 %v512, %v533
    %v535 = vmul.f32 %v514, %v533
    %v536 = vmul.f32 %v516, %v533
    %v537 = vmul.f32 %v518, %v533
    %v538 = vmul.f32 %v520, %v533
    %v539 = vmul.f32 %v522, %v533
    %v540 = vmul.f32 %v524, %v533
    %v541 = vmul.f32 %v526, %v533
    %542 = vmax.xlane.f32.xlu0 %v503
    %v543 = vpop.xlane.xlu0 %542
    %544 = vmax.xlane.f32.xlu0 %v504
    %v545 = vpop.xlane.xlu0 %544
    %546 = vmax.xlane.f32.xlu0 %v505
    %v547 = vpop.xlane.xlu0 %546
    %548 = vmax.xlane.f32.xlu0 %v506
    %v549 = vpop.xlane.xlu0 %548
    %550 = vmax.xlane.f32.xlu0 %v507
    %v551 = vpop.xlane.xlu0 %550
    %552 = vmax.xlane.f32.xlu0 %v508
    %v553 = vpop.xlane.xlu0 %552
    %554 = vmax.xlane.f32.xlu0 %v509
    %v555 = vpop.xlane.xlu0 %554
    %556 = vmax.xlane.f32.xlu0 %v510
    %v557 = vpop.xlane.xlu0 %556
    %v559 = vperm.slane %v343, 0
    %561 = vmatpush.msra.mxu0 %v557
    %562 = vmatpush.msra.mxu0 %v555
    %563 = vmatpush.msra.mxu0 %v553
    %564 = vmatpush.msra.mxu0 %v551
    %565 = vmatpush.msra.mxu0 %v549
    %566 = vmatpush.msra.mxu0 %v547
    %567 = vmatpush.msra.mxu0 %v545
    %568 = vmatpush.msra.mxu0 %v543
    %569 = vmatpush.msra.mxu0 %v541
    %570 = vmatpush.msra.mxu0 %v540
    %571 = vmatpush.msra.mxu0 %v539
    %572 = vmatpush.msra.mxu0 %v538
    %573 = vmatpush.msra.mxu0 %v537
    %574 = vmatpush.msra.mxu0 %v536
    %575 = vmatpush.msra.mxu0 %v535
    %576 = vmatpush.msra.mxu0 %v534
    %577 = vmatmul.f32.gmra.mxu0 %v335
    %v578 = vpop.f32.mrf.mxu0
    %v579 = vadd.f32 %v559, %v578
    %580 = vmatmul.f32.gmra.mxu0 %v336
    %v581 = vpop.f32.mrf.mxu0
    %v582 = vadd.f32 %v559, %v581
    %583 = vmatmul.f32.gmra.mxu0 %v337
    %v584 = vpop.f32.mrf.mxu0
    %v585 = vadd.f32 %v559, %v584
    %586 = vmatmul.f32.gmra.mxu0 %v338
    %v587 = vpop.f32.mrf.mxu0
    %v588 = vadd.f32 %v559, %v587
    %589 = vmatmul.f32.gmra.mxu0 %v339
    %v590 = vpop.f32.mrf.mxu0
    %v591 = vadd.f32 %v559, %v590
    %592 = vmatmul.f32.gmra.mxu0 %v340
    %v593 = vpop.f32.mrf.mxu0
    %v594 = vadd.f32 %v559, %v593
    %595 = vmatmul.f32.gmra.mxu0 %v341
    %v596 = vpop.f32.mrf.mxu0
    %v597 = vadd.f32 %v559, %v596
    %598 = vmatmul.f32.gmra.mxu0 %v342
    %v599 = vpop.f32.mrf.mxu0
    %v600 = vadd.f32 %v559, %v599
    %601 = vdwg.mxu0
    %v602 = vsub.f32 0.0, %v579
    %v603 = vsub.f32 0.0, %v582
    %v604 = vsub.f32 0.0, %v585
    %v605 = vsub.f32 0.0, %v588
    %v606 = vsub.f32 0.0, %v591
    %v607 = vsub.f32 0.0, %v594
    %v608 = vsub.f32 0.0, %v597
    %v609 = vsub.f32 0.0, %v600
    %v610 = vmul.f32 %v602, 1.442695
    %v611 = vpow.pop %v610
    %v612 = vmul.f32 %v603, 1.442695
    %v613 = vpow.pop %v612
    %v614 = vmul.f32 %v604, 1.442695
    %v615 = vpow.pop %v614
    %v616 = vmul.f32 %v605, 1.442695
    %v617 = vpow.pop %v616
    %v618 = vmul.f32 %v606, 1.442695
    %v619 = vpow.pop %v618
    %v620 = vmul.f32 %v607, 1.442695
    %v621 = vpow.pop %v620
    %v622 = vmul.f32 %v608, 1.442695
    %v623 = vpow.pop %v622
    %v624 = vmul.f32 %v609, 1.442695
    %v625 = vpow.pop %v624
    %v626 = vadd.f32 %v611, 1.0
    %v627 = vadd.f32 %v613, 1.0
    %v628 = vadd.f32 %v615, 1.0
    %v629 = vadd.f32 %v617, 1.0
    %v630 = vadd.f32 %v619, 1.0
    %v631 = vadd.f32 %v621, 1.0
    %v632 = vadd.f32 %v623, 1.0
    %v633 = vadd.f32 %v625, 1.0
    %v634 = vrcp.pop %v626
    %v635 = vmul.f32 %v626, %v634
    %v636 = vsub.f32 1.0, %v635
    %v637 = vmul.f32 %v634, %v636
    %v638 = vadd.f32 %v634, %v637
    %vm639 = vweird.f32 %v626
    %vm640 = vweird.f32 %v634
    %vm641 = vmor %vm639, %vm640
    %v642 = vsel %vm641, %v634, %v638
    %v643 = vand.u32 2147483647, %v626
    %vm644 = vcmp.eq.f32.partialorder %v643, 8.507059e+37
    %v645 = vand.u32 %v626, 2147483648
    %v646 = vor.u32 1.1754944e-38, %v645
    %v647 = vsel %vm644, %v646, %v642
    %v648 = vmul.f32 1.0, %v647
    %v649 = vrcp.pop %v627
    %v650 = vmul.f32 %v627, %v649
    %v651 = vsub.f32 1.0, %v650
    %v652 = vmul.f32 %v649, %v651
    %v653 = vadd.f32 %v649, %v652
    %vm654 = vweird.f32 %v627
    %vm655 = vweird.f32 %v649
    %vm656 = vmor %vm654, %vm655
    %v657 = vsel %vm656, %v649, %v653
    %v658 = vand.u32 2147483647, %v627
    %vm659 = vcmp.eq.f32.partialorder %v658, 8.507059e+37
    %v660 = vand.u32 %v627, 2147483648
    %v661 = vor.u32 1.1754944e-38, %v660
    %v662 = vsel %vm659, %v661, %v657
    %v663 = vmul.f32 1.0, %v662
    %v664 = vrcp.pop %v628
    %v665 = vmul.f32 %v628, %v664
    %v666 = vsub.f32 1.0, %v665
    %v667 = vmul.f32 %v664, %v666
    %v668 = vadd.f32 %v664, %v667
    %vm669 = vweird.f32 %v628
    %vm670 = vweird.f32 %v664
    %vm671 = vmor %vm669, %vm670
    %v672 = vsel %vm671, %v664, %v668
    %v673 = vand.u32 2147483647, %v628
    %vm674 = vcmp.eq.f32.partialorder %v673, 8.507059e+37
    %v675 = vand.u32 %v628, 2147483648
    %v676 = vor.u32 1.1754944e-38, %v675
    %v677 = vsel %vm674, %v676, %v672
    %v678 = vmul.f32 1.0, %v677
    %v679 = vrcp.pop %v629
    %v680 = vmul.f32 %v629, %v679
    %v681 = vsub.f32 1.0, %v680
    %v682 = vmul.f32 %v679, %v681
    %v683 = vadd.f32 %v679, %v682
    %vm684 = vweird.f32 %v629
    %vm685 = vweird.f32 %v679
    %vm686 = vmor %vm684, %vm685
    %v687 = vsel %vm686, %v679, %v683
    %v688 = vand.u32 2147483647, %v629
    %vm689 = vcmp.eq.f32.partialorder %v688, 8.507059e+37
    %v690 = vand.u32 %v629, 2147483648
    %v691 = vor.u32 1.1754944e-38, %v690
    %v692 = vsel %vm689, %v691, %v687
    %v693 = vmul.f32 1.0, %v692
    %v694 = vrcp.pop %v630
    %v695 = vmul.f32 %v630, %v694
    %v696 = vsub.f32 1.0, %v695
    %v697 = vmul.f32 %v694, %v696
    %v698 = vadd.f32 %v694, %v697
    %vm699 = vweird.f32 %v630
    %vm700 = vweird.f32 %v694
    %vm701 = vmor %vm699, %vm700
    %v702 = vsel %vm701, %v694, %v698
    %v703 = vand.u32 2147483647, %v630
    %vm704 = vcmp.eq.f32.partialorder %v703, 8.507059e+37
    %v705 = vand.u32 %v630, 2147483648
    %v706 = vor.u32 1.1754944e-38, %v705
    %v707 = vsel %vm704, %v706, %v702
    %v708 = vmul.f32 1.0, %v707
    %v709 = vrcp.pop %v631
    %v710 = vmul.f32 %v631, %v709
    %v711 = vsub.f32 1.0, %v710
    %v712 = vmul.f32 %v709, %v711
    %v713 = vadd.f32 %v709, %v712
    %vm714 = vweird.f32 %v631
    %vm715 = vweird.f32 %v709
    %vm716 = vmor %vm714, %vm715
    %v717 = vsel %vm716, %v709, %v713
    %v718 = vand.u32 2147483647, %v631
    %vm719 = vcmp.eq.f32.partialorder %v718, 8.507059e+37
    %v720 = vand.u32 %v631, 2147483648
    %v721 = vor.u32 1.1754944e-38, %v720
    %v722 = vsel %vm719, %v721, %v717
    %v723 = vmul.f32 1.0, %v722
    %v724 = vrcp.pop %v632
    %v725 = vmul.f32 %v632, %v724
    %v726 = vsub.f32 1.0, %v725
    %v727 = vmul.f32 %v724, %v726
    %v728 = vadd.f32 %v724, %v727
    %vm729 = vweird.f32 %v632
    %vm730 = vweird.f32 %v724
    %vm731 = vmor %vm729, %vm730
    %v732 = vsel %vm731, %v724, %v728
    %v733 = vand.u32 2147483647, %v632
    %vm734 = vcmp.eq.f32.partialorder %v733, 8.507059e+37
    %v735 = vand.u32 %v632, 2147483648
    %v736 = vor.u32 1.1754944e-38, %v735
    %v737 = vsel %vm734, %v736, %v732
    %v738 = vmul.f32 1.0, %v737
    %v739 = vrcp.pop %v633
    %v740 = vmul.f32 %v633, %v739
    %v741 = vsub.f32 1.0, %v740
    %v742 = vmul.f32 %v739, %v741
    %v743 = vadd.f32 %v739, %v742
    %vm744 = vweird.f32 %v633
    %vm745 = vweird.f32 %v739
    %vm746 = vmor %vm744, %vm745
    %v747 = vsel %vm746, %v739, %v743
    %v748 = vand.u32 2147483647, %v633
    %vm749 = vcmp.eq.f32.partialorder %v748, 8.507059e+37
    %v750 = vand.u32 %v633, 2147483648
    %v751 = vor.u32 1.1754944e-38, %v750
    %v752 = vsel %vm749, %v751, %v747
    %v753 = vmul.f32 1.0, %v752
    %755 = vset.pattern.permute.xlu0 0
    %756 = vperm.xlu0 %755, %v648
    %v757 = vpop.permute.xlu0 %756
    %760 = vset.pattern.permute.xlu0 0
    %761 = vperm.xlu0 %760, %v663
    %v762 = vpop.permute.xlu0 %761
    %765 = vset.pattern.permute.xlu0 0
    %766 = vperm.xlu0 %765, %v678
    %v767 = vpop.permute.xlu0 %766
    %770 = vset.pattern.permute.xlu0 0
    %771 = vperm.xlu0 %770, %v693
    %v772 = vpop.permute.xlu0 %771
    %775 = vset.pattern.permute.xlu0 0
    %776 = vperm.xlu0 %775, %v708
    %v777 = vpop.permute.xlu0 %776
    %780 = vset.pattern.permute.xlu0 0
    %781 = vperm.xlu0 %780, %v723
    %v782 = vpop.permute.xlu0 %781
    %785 = vset.pattern.permute.xlu0 0
    %786 = vperm.xlu0 %785, %v738
    %v787 = vpop.permute.xlu0 %786
    %790 = vset.pattern.permute.xlu0 0
    %791 = vperm.xlu0 %790, %v753
    %v792 = vpop.permute.xlu0 %791
    %v794 = vmul.f32 %v503, %v757
    %v795 = vmul.f32 %v504, %v762
    %v796 = vmul.f32 %v505, %v767
    %v797 = vmul.f32 %v506, %v772
    %v798 = vmul.f32 %v507, %v777
    %v799 = vmul.f32 %v508, %v782
    %v800 = vmul.f32 %v509, %v787
    %v801 = vmul.f32 %v510, %v792
    %v802 = vadd.f32 %v794, %v795
    %v803 = vadd.f32 %v802, %v796
    %v804 = vadd.f32 %v803, %v797
    %v805 = vadd.f32 %v804, %v798
    %v806 = vadd.f32 %v805, %v799
    %v807 = vadd.f32 %v806, %v800
    %v808 = vadd.f32 %v807, %v801
    %v809 = vrot.slane %v808, 4
    %v810 = vadd.f32 %v808, %v809
    %v811 = vrot.slane %v810, 2
    %v812 = vadd.f32 %v810, %v811
    %v813 = vrot.slane %v812, 1
    %v814 = vadd.f32 %v812, %v813
    %v815 = vmul.f32 %v814, %v380
    %v816 = vperm.slane %v501, 1
    %v817 = vmul.f32 %v353, %v816
    %v818 = vmul.f32 %v354, %v816
    %v819 = vmul.f32 %v355, %v816
    %v820 = vmul.f32 %v356, %v816
    %v821 = vmul.f32 %v357, %v816
    %v822 = vmul.f32 %v358, %v816
    %v823 = vmul.f32 %v359, %v816
    %v824 = vmul.f32 %v360, %v816
    %825 = vadd.xlane.f32.xlu0 %v817
    %v826 = vpop.xlane.xlu0 %825
    %827 = vadd.xlane.f32.xlu0 %v818
    %v828 = vpop.xlane.xlu0 %827
    %829 = vadd.xlane.f32.xlu0 %v819
    %v830 = vpop.xlane.xlu0 %829
    %831 = vadd.xlane.f32.xlu0 %v820
    %v832 = vpop.xlane.xlu0 %831
    %833 = vadd.xlane.f32.xlu0 %v821
    %v834 = vpop.xlane.xlu0 %833
    %835 = vadd.xlane.f32.xlu0 %v822
    %v836 = vpop.xlane.xlu0 %835
    %837 = vadd.xlane.f32.xlu0 %v823
    %v838 = vpop.xlane.xlu0 %837
    %839 = vadd.xlane.f32.xlu0 %v824
    %v840 = vpop.xlane.xlu0 %839
    %v841 = vmul.f32 %v826, %v533
    %v842 = vmul.f32 %v828, %v533
    %v843 = vmul.f32 %v830, %v533
    %v844 = vmul.f32 %v832, %v533
    %v845 = vmul.f32 %v834, %v533
    %v846 = vmul.f32 %v836, %v533
    %v847 = vmul.f32 %v838, %v533
    %v848 = vmul.f32 %v840, %v533
    %849 = vmax.xlane.f32.xlu0 %v817
    %v850 = vpop.xlane.xlu0 %849
    %851 = vmax.xlane.f32.xlu0 %v818
    %v852 = vpop.xlane.xlu0 %851
    %853 = vmax.xlane.f32.xlu0 %v819
    %v854 = vpop.xlane.xlu0 %853
    %855 = vmax.xlane.f32.xlu0 %v820
    %v856 = vpop.xlane.xlu0 %855
    %857 = vmax.xlane.f32.xlu0 %v821
    %v858 = vpop.xlane.xlu0 %857
    %859 = vmax.xlane.f32.xlu0 %v822
    %v860 = vpop.xlane.xlu0 %859
    %861 = vmax.xlane.f32.xlu0 %v823
    %v862 = vpop.xlane.xlu0 %861
    %863 = vmax.xlane.f32.xlu0 %v824
    %v864 = vpop.xlane.xlu0 %863
    %865 = vmatpush.msra.mxu0 %v864
    %866 = vmatpush.msra.mxu0 %v862
    %867 = vmatpush.msra.mxu0 %v860
    %868 = vmatpush.msra.mxu0 %v858
    %869 = vmatpush.msra.mxu0 %v856
    %870 = vmatpush.msra.mxu0 %v854
    %871 = vmatpush.msra.mxu0 %v852
    %872 = vmatpush.msra.mxu0 %v850
    %873 = vmatpush.msra.mxu0 %v848
    %874 = vmatpush.msra.mxu0 %v847
    %875 = vmatpush.msra.mxu0 %v846
    %876 = vmatpush.msra.mxu0 %v845
    %877 = vmatpush.msra.mxu0 %v844
    %878 = vmatpush.msra.mxu0 %v843
    %879 = vmatpush.msra.mxu0 %v842
    %880 = vmatpush.msra.mxu0 %v841
    %881 = vmatmul.f32.gmra.mxu0 %v335
    %v882 = vpop.f32.mrf.mxu0
    %v883 = vadd.f32 %v559, %v882
    %884 = vmatmul.f32.gmra.mxu0 %v336
    %v885 = vpop.f32.mrf.mxu0
    %v886 = vadd.f32 %v559, %v885
    %887 = vmatmul.f32.gmra.mxu0 %v337
    %v888 = vpop.f32.mrf.mxu0
    %v889 = vadd.f32 %v559, %v888
    %890 = vmatmul.f32.gmra.mxu0 %v338
    %v891 = vpop.f32.mrf.mxu0
    %v892 = vadd.f32 %v559, %v891
    %893 = vmatmul.f32.gmra.mxu0 %v339
    %v894 = vpop.f32.mrf.mxu0
    %v895 = vadd.f32 %v559, %v894
    %896 = vmatmul.f32.gmra.mxu0 %v340
    %v897 = vpop.f32.mrf.mxu0
    %v898 = vadd.f32 %v559, %v897
    %899 = vmatmul.f32.gmra.mxu0 %v341
    %v900 = vpop.f32.mrf.mxu0
    %v901 = vadd.f32 %v559, %v900
    %902 = vmatmul.f32.gmra.mxu0 %v342
    %v903 = vpop.f32.mrf.mxu0
    %v904 = vadd.f32 %v559, %v903
    %905 = vdwg.mxu0
    %v906 = vsub.f32 0.0, %v883
    %v907 = vsub.f32 0.0, %v886
    %v908 = vsub.f32 0.0, %v889
    %v909 = vsub.f32 0.0, %v892
    %v910 = vsub.f32 0.0, %v895
    %v911 = vsub.f32 0.0, %v898
    %v912 = vsub.f32 0.0, %v901
    %v913 = vsub.f32 0.0, %v904
    %v914 = vmul.f32 %v906, 1.442695
    %v915 = vpow.pop %v914
    %v916 = vmul.f32 %v907, 1.442695
    %v917 = vpow.pop %v916
    %v918 = vmul.f32 %v908, 1.442695
    %v919 = vpow.pop %v918
    %v920 = vmul.f32 %v909, 1.442695
    %v921 = vpow.pop %v920
    %v922 = vmul.f32 %v910, 1.442695
    %v923 = vpow.pop %v922
    %v924 = vmul.f32 %v911, 1.442695
    %v925 = vpow.pop %v924
    %v926 = vmul.f32 %v912, 1.442695
    %v927 = vpow.pop %v926
    %v928 = vmul.f32 %v913, 1.442695
    %v929 = vpow.pop %v928
    %v930 = vadd.f32 %v915, 1.0
    %v931 = vadd.f32 %v917, 1.0
    %v932 = vadd.f32 %v919, 1.0
    %v933 = vadd.f32 %v921, 1.0
    %v934 = vadd.f32 %v923, 1.0
    %v935 = vadd.f32 %v925, 1.0
    %v936 = vadd.f32 %v927, 1.0
    %v937 = vadd.f32 %v929, 1.0
    %v938 = vrcp.pop %v930
    %v939 = vmul.f32 %v930, %v938
    %v940 = vsub.f32 1.0, %v939
    %v941 = vmul.f32 %v938, %v940
    %v942 = vadd.f32 %v938, %v941
    %vm943 = vweird.f32 %v930
    %vm944 = vweird.f32 %v938
    %vm945 = vmor %vm943, %vm944
    %v946 = vsel %vm945, %v938, %v942
    %v947 = vand.u32 2147483647, %v930
    %vm948 = vcmp.eq.f32.partialorder %v947, 8.507059e+37
    %v949 = vand.u32 %v930, 2147483648
    %v950 = vor.u32 1.1754944e-38, %v949
    %v951 = vsel %vm948, %v950, %v946
    %v952 = vmul.f32 1.0, %v951
    %v953 = vrcp.pop %v931
    %v954 = vmul.f32 %v931, %v953
    %v955 = vsub.f32 1.0, %v954
    %v956 = vmul.f32 %v953, %v955
    %v957 = vadd.f32 %v953, %v956
    %vm958 = vweird.f32 %v931
    %vm959 = vweird.f32 %v953
    %vm960 = vmor %vm958, %vm959
    %v961 = vsel %vm960, %v953, %v957
    %v962 = vand.u32 2147483647, %v931
    %vm963 = vcmp.eq.f32.partialorder %v962, 8.507059e+37
    %v964 = vand.u32 %v931, 2147483648
    %v965 = vor.u32 1.1754944e-38, %v964
    %v966 = vsel %vm963, %v965, %v961
    %v967 = vmul.f32 1.0, %v966
    %v968 = vrcp.pop %v932
    %v969 = vmul.f32 %v932, %v968
    %v970 = vsub.f32 1.0, %v969
    %v971 = vmul.f32 %v968, %v970
    %v972 = vadd.f32 %v968, %v971
    %vm973 = vweird.f32 %v932
    %vm974 = vweird.f32 %v968
    %vm975 = vmor %vm973, %vm974
    %v976 = vsel %vm975, %v968, %v972
    %v977 = vand.u32 2147483647, %v932
    %vm978 = vcmp.eq.f32.partialorder %v977, 8.507059e+37
    %v979 = vand.u32 %v932, 2147483648
    %v980 = vor.u32 1.1754944e-38, %v979
    %v981 = vsel %vm978, %v980, %v976
    %v982 = vmul.f32 1.0, %v981
    %v983 = vrcp.pop %v933
    %v984 = vmul.f32 %v933, %v983
    %v985 = vsub.f32 1.0, %v984
    %v986 = vmul.f32 %v983, %v985
    %v987 = vadd.f32 %v983, %v986
    %vm988 = vweird.f32 %v933
    %vm989 = vweird.f32 %v983
    %vm990 = vmor %vm988, %vm989
    %v991 = vsel %vm990, %v983, %v987
    %v992 = vand.u32 2147483647, %v933
    %vm993 = vcmp.eq.f32.partialorder %v992, 8.507059e+37
    %v994 = vand.u32 %v933, 2147483648
    %v995 = vor.u32 1.1754944e-38, %v994
    %v996 = vsel %vm993, %v995, %v991
    %v997 = vmul.f32 1.0, %v996
    %v998 = vrcp.pop %v934
    %v999 = vmul.f32 %v934, %v998
    %v1000 = vsub.f32 1.0, %v999
    %v1001 = vmul.f32 %v998, %v1000
    %v1002 = vadd.f32 %v998, %v1001
    %vm1003 = vweird.f32 %v934
    %vm1004 = vweird.f32 %v998
    %vm1005 = vmor %vm1003, %vm1004
    %v1006 = vsel %vm1005, %v998, %v1002
    %v1007 = vand.u32 2147483647, %v934
    %vm1008 = vcmp.eq.f32.partialorder %v1007, 8.507059e+37
    %v1009 = vand.u32 %v934, 2147483648
    %v1010 = vor.u32 1.1754944e-38, %v1009
    %v1011 = vsel %vm1008, %v1010, %v1006
    %v1012 = vmul.f32 1.0, %v1011
    %v1013 = vrcp.pop %v935
    %v1014 = vmul.f32 %v935, %v1013
    %v1015 = vsub.f32 1.0, %v1014
    %v1016 = vmul.f32 %v1013, %v1015
    %v1017 = vadd.f32 %v1013, %v1016
    %vm1018 = vweird.f32 %v935
    %vm1019 = vweird.f32 %v1013
    %vm1020 = vmor %vm1018, %vm1019
    %v1021 = vsel %vm1020, %v1013, %v1017
    %v1022 = vand.u32 2147483647, %v935
    %vm1023 = vcmp.eq.f32.partialorder %v1022, 8.507059e+37
    %v1024 = vand.u32 %v935, 2147483648
    %v1025 = vor.u32 1.1754944e-38, %v1024
    %v1026 = vsel %vm1023, %v1025, %v1021
    %v1027 = vmul.f32 1.0, %v1026
    %v1028 = vrcp.pop %v936
    %v1029 = vmul.f32 %v936, %v1028
    %v1030 = vsub.f32 1.0, %v1029
    %v1031 = vmul.f32 %v1028, %v1030
    %v1032 = vadd.f32 %v1028, %v1031
    %vm1033 = vweird.f32 %v936
    %vm1034 = vweird.f32 %v1028
    %vm1035 = vmor %vm1033, %vm1034
    %v1036 = vsel %vm1035, %v1028, %v1032
    %v1037 = vand.u32 2147483647, %v936
    %vm1038 = vcmp.eq.f32.partialorder %v1037, 8.507059e+37
    %v1039 = vand.u32 %v936, 2147483648
    %v1040 = vor.u32 1.1754944e-38, %v1039
    %v1041 = vsel %vm1038, %v1040, %v1036
    %v1042 = vmul.f32 1.0, %v1041
    %v1043 = vrcp.pop %v937
    %v1044 = vmul.f32 %v937, %v1043
    %v1045 = vsub.f32 1.0, %v1044
    %v1046 = vmul.f32 %v1043, %v1045
    %v1047 = vadd.f32 %v1043, %v1046
    %vm1048 = vweird.f32 %v937
    %vm1049 = vweird.f32 %v1043
    %vm1050 = vmor %vm1048, %vm1049
    %v1051 = vsel %vm1050, %v1043, %v1047
    %v1052 = vand.u32 2147483647, %v937
    %vm1053 = vcmp.eq.f32.partialorder %v1052, 8.507059e+37
    %v1054 = vand.u32 %v937, 2147483648
    %v1055 = vor.u32 1.1754944e-38, %v1054
    %v1056 = vsel %vm1053, %v1055, %v1051
    %v1057 = vmul.f32 1.0, %v1056
    %1059 = vset.pattern.permute.xlu0 0
    %1060 = vperm.xlu0 %1059, %v952
    %v1061 = vpop.permute.xlu0 %1060
    %1064 = vset.pattern.permute.xlu0 0
    %1065 = vperm.xlu0 %1064, %v967
    %v1066 = vpop.permute.xlu0 %1065
    %1069 = vset.pattern.permute.xlu0 0
    %1070 = vperm.xlu0 %1069, %v982
    %v1071 = vpop.permute.xlu0 %1070
    %1074 = vset.pattern.permute.xlu0 0
    %1075 = vperm.xlu0 %1074, %v997
    %v1076 = vpop.permute.xlu0 %1075
    %1079 = vset.pattern.permute.xlu0 0
    %1080 = vperm.xlu0 %1079, %v1012
    %v1081 = vpop.permute.xlu0 %1080
    %1084 = vset.pattern.permute.xlu0 0
    %1085 = vperm.xlu0 %1084, %v1027
    %v1086 = vpop.permute.xlu0 %1085
    %1089 = vset.pattern.permute.xlu0 0
    %1090 = vperm.xlu0 %1089, %v1042
    %v1091 = vpop.permute.xlu0 %1090
    %1094 = vset.pattern.permute.xlu0 0
    %1095 = vperm.xlu0 %1094, %v1057
    %v1096 = vpop.permute.xlu0 %1095
    %v1098 = vmul.f32 %v817, %v1061
    %v1099 = vmul.f32 %v818, %v1066
    %v1100 = vmul.f32 %v819, %v1071
    %v1101 = vmul.f32 %v820, %v1076
    %v1102 = vmul.f32 %v821, %v1081
    %v1103 = vmul.f32 %v822, %v1086
    %v1104 = vmul.f32 %v823, %v1091
    %v1105 = vmul.f32 %v824, %v1096
    %v1106 = vadd.f32 %v1098, %v1099
    %v1107 = vadd.f32 %v1106, %v1100
    %v1108 = vadd.f32 %v1107, %v1101
    %v1109 = vadd.f32 %v1108, %v1102
    %v1110 = vadd.f32 %v1109, %v1103
    %v1111 = vadd.f32 %v1110, %v1104
    %v1112 = vadd.f32 %v1111, %v1105
    %v1113 = vrot.slane %v1112, 4
    %v1114 = vadd.f32 %v1112, %v1113
    %v1115 = vrot.slane %v1114, 2
    %v1116 = vadd.f32 %v1114, %v1115
    %v1117 = vrot.slane %v1116, 1
    %v1118 = vadd.f32 %v1116, %v1117
    %v1119 = vmul.f32 %v1118, %v380
    %v1120 = vsel %vm422, %v815, %v1119
    %v1121 = vld [vmem:[%s7] sm:$0xff]
    %v1122 = vld [vmem:[%s7 + $0x8] sm:$0xff]
    %v1123 = vld [vmem:[%s7 + $0x10] sm:$0xff]
    %v1124 = vld [vmem:[%s7 + $0x18] sm:$0xff]
    %v1125 = vld [vmem:[%s7 + $0x20] sm:$0xff]
    %v1126 = vld [vmem:[%s7 + $0x28] sm:$0xff]
    %v1127 = vld [vmem:[%s7 + $0x30] sm:$0xff]
    %v1128 = vld [vmem:[%s7 + $0x38] sm:$0xff]
    %v1129 = vld [vmem:[%s7 + $0x40] sm:$0xff]
    %v1130 = vld [vmem:[%s7 + $0x48] sm:$0xff]
    %v1131 = vld [vmem:[%s7 + $0x50] sm:$0xff]
    %v1132 = vld [vmem:[%s7 + $0x58] sm:$0xff]
    %v1133 = vld [vmem:[%s7 + $0x60] sm:$0xff]
    %v1134 = vld [vmem:[%s7 + $0x68] sm:$0xff]
    %v1135 = vld [vmem:[%s7 + $0x70] sm:$0xff]
    %v1136 = vld [vmem:[%s7 + $0x78] sm:$0xff]
    %v1137 = vld [vmem:[#allocation11] sm:$0x1]
    %v1139 = vperm.slane %v1137, 0
    %1141 = vmatpush.msra.mxu0 %v1136
    %1142 = vmatpush.msra.mxu0 %v1135
    %1143 = vmatpush.msra.mxu0 %v1134
    %1144 = vmatpush.msra.mxu0 %v1133
    %1145 = vmatpush.msra.mxu0 %v1132
    %1146 = vmatpush.msra.mxu0 %v1131
    %1147 = vmatpush.msra.mxu0 %v1130
    %1148 = vmatpush.msra.mxu0 %v1129
    %1149 = vmatpush.msra.mxu0 %v1128
    %1150 = vmatpush.msra.mxu0 %v1127
    %1151 = vmatpush.msra.mxu0 %v1126
    %1152 = vmatpush.msra.mxu0 %v1125
    %1153 = vmatpush.msra.mxu0 %v1124
    %1154 = vmatpush.msra.mxu0 %v1123
    %1155 = vmatpush.msra.mxu0 %v1122
    %1156 = vmatpush.msra.mxu0 %v1121
    %1157 = vmatmul.f32.gmra.mxu0 %v1120
    %v1158 = vpop.f32.mrf.mxu0
    %v1159 = vadd.f32 %v1139, %v1158
    %1160 = vdwg.mxu0
    %s1161 = scalar_lea.vmem %s7, 128
    %v1162 = vld [vmem:[%s1161] sm:$0xff]
    %v1163 = vld [vmem:[%s1161 + $0x8] sm:$0xff]
    %v1164 = vld [vmem:[%s1161 + $0x10] sm:$0xff]
    %v1165 = vld [vmem:[%s1161 + $0x18] sm:$0xff]
    %v1166 = vld [vmem:[%s1161 + $0x20] sm:$0xff]
    %v1167 = vld [vmem:[%s1161 + $0x28] sm:$0xff]
    %v1168 = vld [vmem:[%s1161 + $0x30] sm:$0xff]
    %v1169 = vld [vmem:[%s1161 + $0x38] sm:$0xff]
    %v1170 = vld [vmem:[%s1161 + $0x40] sm:$0xff]
    %v1171 = vld [vmem:[%s1161 + $0x48] sm:$0xff]
    %v1172 = vld [vmem:[%s1161 + $0x50] sm:$0xff]
    %v1173 = vld [vmem:[%s1161 + $0x58] sm:$0xff]
    %v1174 = vld [vmem:[%s1161 + $0x60] sm:$0xff]
    %v1175 = vld [vmem:[%s1161 + $0x68] sm:$0xff]
    %v1176 = vld [vmem:[%s1161 + $0x70] sm:$0xff]
    %v1177 = vld [vmem:[%s1161 + $0x78] sm:$0xff]
    %s1178 = scalar_lea.vmem [#allocation11], 1
    %v1179 = vld [vmem:[%s1178] sm:$0x1]
    %v1181 = vperm.slane %v1179, 0
    %1183 = vmatpush.msra.mxu0 %v1177
    %1184 = vmatpush.msra.mxu0 %v1176
    %1185 = vmatpush.msra.mxu0 %v1175
    %1186 = vmatpush.msra.mxu0 %v1174
    %1187 = vmatpush.msra.mxu0 %v1173
    %1188 = vmatpush.msra.mxu0 %v1172
    %1189 = vmatpush.msra.mxu0 %v1171
    %1190 = vmatpush.msra.mxu0 %v1170
    %1191 = vmatpush.msra.mxu0 %v1169
    %1192 = vmatpush.msra.mxu0 %v1168
    %1193 = vmatpush.msra.mxu0 %v1167
    %1194 = vmatpush.msra.mxu0 %v1166
    %1195 = vmatpush.msra.mxu0 %v1165
    %1196 = vmatpush.msra.mxu0 %v1164
    %1197 = vmatpush.msra.mxu0 %v1163
    %1198 = vmatpush.msra.mxu0 %v1162
    %1199 = vmatmul.f32.gmra.mxu0 %v1120
    %v1200 = vpop.f32.mrf.mxu0
    %v1201 = vadd.f32 %v1181, %v1200
    %1202 = vdwg.mxu0
    %s1203 = scalar_lea.vmem %s7, 256
    %v1204 = vld [vmem:[%s1203] sm:$0xff]
    %v1205 = vld [vmem:[%s1203 + $0x8] sm:$0xff]
    %v1206 = vld [vmem:[%s1203 + $0x10] sm:$0xff]
    %v1207 = vld [vmem:[%s1203 + $0x18] sm:$0xff]
    %v1208 = vld [vmem:[%s1203 + $0x20] sm:$0xff]
    %v1209 = vld [vmem:[%s1203 + $0x28] sm:$0xff]
    %v1210 = vld [vmem:[%s1203 + $0x30] sm:$0xff]
    %v1211 = vld [vmem:[%s1203 + $0x38] sm:$0xff]
    %v1212 = vld [vmem:[%s1203 + $0x40] sm:$0xff]
    %v1213 = vld [vmem:[%s1203 + $0x48] sm:$0xff]
    %v1214 = vld [vmem:[%s1203 + $0x50] sm:$0xff]
    %v1215 = vld [vmem:[%s1203 + $0x58] sm:$0xff]
    %v1216 = vld [vmem:[%s1203 + $0x60] sm:$0xff]
    %v1217 = vld [vmem:[%s1203 + $0x68] sm:$0xff]
    %v1218 = vld [vmem:[%s1203 + $0x70] sm:$0xff]
    %v1219 = vld [vmem:[%s1203 + $0x78] sm:$0xff]
    %s1220 = scalar_lea.vmem [#allocation11], 2
    %v1221 = vld [vmem:[%s1220] sm:$0x1]
    %v1223 = vperm.slane %v1221, 0
    %1225 = vmatpush.msra.mxu0 %v1219
    %1226 = vmatpush.msra.mxu0 %v1218
    %1227 = vmatpush.msra.mxu0 %v1217
    %1228 = vmatpush.msra.mxu0 %v1216
    %1229 = vmatpush.msra.mxu0 %v1215
    %1230 = vmatpush.msra.mxu0 %v1214
    %1231 = vmatpush.msra.mxu0 %v1213
    %1232 = vmatpush.msra.mxu0 %v1212
    %1233 = vmatpush.msra.mxu0 %v1211
    %1234 = vmatpush.msra.mxu0 %v1210
    %1235 = vmatpush.msra.mxu0 %v1209
    %1236 = vmatpush.msra.mxu0 %v1208
    %1237 = vmatpush.msra.mxu0 %v1207
    %1238 = vmatpush.msra.mxu0 %v1206
    %1239 = vmatpush.msra.mxu0 %v1205
    %1240 = vmatpush.msra.mxu0 %v1204
    %1241 = vmatmul.f32.gmra.mxu0 %v1120
    %v1242 = vpop.f32.mrf.mxu0
    %v1243 = vadd.f32 %v1223, %v1242
    %1244 = vdwg.mxu0
    %s1245 = scalar_lea.vmem %s7, 384
    %v1246 = vld [vmem:[%s1245] sm:$0xff]
    %v1247 = vld [vmem:[%s1245 + $0x8] sm:$0xff]
    %v1248 = vld [vmem:[%s1245 + $0x10] sm:$0xff]
    %v1249 = vld [vmem:[%s1245 + $0x18] sm:$0xff]
    %v1250 = vld [vmem:[%s1245 + $0x20] sm:$0xff]
    %v1251 = vld [vmem:[%s1245 + $0x28] sm:$0xff]
    %v1252 = vld [vmem:[%s1245 + $0x30] sm:$0xff]
    %v1253 = vld [vmem:[%s1245 + $0x38] sm:$0xff]
    %v1254 = vld [vmem:[%s1245 + $0x40] sm:$0xff]
    %v1255 = vld [vmem:[%s1245 + $0x48] sm:$0xff]
    %v1256 = vld [vmem:[%s1245 + $0x50] sm:$0xff]
    %v1257 = vld [vmem:[%s1245 + $0x58] sm:$0xff]
    %v1258 = vld [vmem:[%s1245 + $0x60] sm:$0xff]
    %v1259 = vld [vmem:[%s1245 + $0x68] sm:$0xff]
    %v1260 = vld [vmem:[%s1245 + $0x70] sm:$0xff]
    %v1261 = vld [vmem:[%s1245 + $0x78] sm:$0xff]
    %s1262 = scalar_lea.vmem [#allocation11], 3
    %v1263 = vld [vmem:[%s1262] sm:$0x1]
    %v1265 = vperm.slane %v1263, 0
    %1267 = vmatpush.msra.mxu0 %v1261
    %1268 = vmatpush.msra.mxu0 %v1260
    %1269 = vmatpush.msra.mxu0 %v1259
    %1270 = vmatpush.msra.mxu0 %v1258
    %1271 = vmatpush.msra.mxu0 %v1257
    %1272 = vmatpush.msra.mxu0 %v1256
    %1273 = vmatpush.msra.mxu0 %v1255
    %1274 = vmatpush.msra.mxu0 %v1254
    %1275 = vmatpush.msra.mxu0 %v1253
    %1276 = vmatpush.msra.mxu0 %v1252
    %1277 = vmatpush.msra.mxu0 %v1251
    %1278 = vmatpush.msra.mxu0 %v1250
    %1279 = vmatpush.msra.mxu0 %v1249
    %1280 = vmatpush.msra.mxu0 %v1248
    %1281 = vmatpush.msra.mxu0 %v1247
    %1282 = vmatpush.msra.mxu0 %v1246
    %1283 = vmatmul.f32.gmra.mxu0 %v1120
    %v1284 = vpop.f32.mrf.mxu0
    %v1285 = vadd.f32 %v1265, %v1284
    %1286 = vdwg.mxu0
    %s1287 = scalar_lea.vmem %s7, 512
    %v1288 = vld [vmem:[%s1287] sm:$0xff]
    %v1289 = vld [vmem:[%s1287 + $0x8] sm:$0xff]
    %v1290 = vld [vmem:[%s1287 + $0x10] sm:$0xff]
    %v1291 = vld [vmem:[%s1287 + $0x18] sm:$0xff]
    %v1292 = vld [vmem:[%s1287 + $0x20] sm:$0xff]
    %v1293 = vld [vmem:[%s1287 + $0x28] sm:$0xff]
    %v1294 = vld [vmem:[%s1287 + $0x30] sm:$0xff]
    %v1295 = vld [vmem:[%s1287 + $0x38] sm:$0xff]
    %v1296 = vld [vmem:[%s1287 + $0x40] sm:$0xff]
    %v1297 = vld [vmem:[%s1287 + $0x48] sm:$0xff]
    %v1298 = vld [vmem:[%s1287 + $0x50] sm:$0xff]
    %v1299 = vld [vmem:[%s1287 + $0x58] sm:$0xff]
    %v1300 = vld [vmem:[%s1287 + $0x60] sm:$0xff]
    %v1301 = vld [vmem:[%s1287 + $0x68] sm:$0xff]
    %v1302 = vld [vmem:[%s1287 + $0x70] sm:$0xff]
    %v1303 = vld [vmem:[%s1287 + $0x78] sm:$0xff]
    %s1304 = scalar_lea.vmem [#allocation11], 4
    %v1305 = vld [vmem:[%s1304] sm:$0x1]
    %v1307 = vperm.slane %v1305, 0
    %1309 = vmatpush.msra.mxu0 %v1303
    %1310 = vmatpush.msra.mxu0 %v1302
    %1311 = vmatpush.msra.mxu0 %v1301
    %1312 = vmatpush.msra.mxu0 %v1300
    %1313 = vmatpush.msra.mxu0 %v1299
    %1314 = vmatpush.msra.mxu0 %v1298
    %1315 = vmatpush.msra.mxu0 %v1297
    %1316 = vmatpush.msra.mxu0 %v1296
    %1317 = vmatpush.msra.mxu0 %v1295
    %1318 = vmatpush.msra.mxu0 %v1294
    %1319 = vmatpush.msra.mxu0 %v1293
    %1320 = vmatpush.msra.mxu0 %v1292
    %1321 = vmatpush.msra.mxu0 %v1291
    %1322 = vmatpush.msra.mxu0 %v1290
    %1323 = vmatpush.msra.mxu0 %v1289
    %1324 = vmatpush.msra.mxu0 %v1288
    %1325 = vmatmul.f32.gmra.mxu0 %v1120
    %v1326 = vpop.f32.mrf.mxu0
    %v1327 = vadd.f32 %v1307, %v1326
    %1328 = vdwg.mxu0
    %s1329 = scalar_lea.vmem %s7, 640
    %v1330 = vld [vmem:[%s1329] sm:$0xff]
    %v1331 = vld [vmem:[%s1329 + $0x8] sm:$0xff]
    %v1332 = vld [vmem:[%s1329 + $0x10] sm:$0xff]
    %v1333 = vld [vmem:[%s1329 + $0x18] sm:$0xff]
    %v1334 = vld [vmem:[%s1329 + $0x20] sm:$0xff]
    %v1335 = vld [vmem:[%s1329 + $0x28] sm:$0xff]
    %v1336 = vld [vmem:[%s1329 + $0x30] sm:$0xff]
    %v1337 = vld [vmem:[%s1329 + $0x38] sm:$0xff]
    %v1338 = vld [vmem:[%s1329 + $0x40] sm:$0xff]
    %v1339 = vld [vmem:[%s1329 + $0x48] sm:$0xff]
    %v1340 = vld [vmem:[%s1329 + $0x50] sm:$0xff]
    %v1341 = vld [vmem:[%s1329 + $0x58] sm:$0xff]
    %v1342 = vld [vmem:[%s1329 + $0x60] sm:$0xff]
    %v1343 = vld [vmem:[%s1329 + $0x68] sm:$0xff]
    %v1344 = vld [vmem:[%s1329 + $0x70] sm:$0xff]
    %v1345 = vld [vmem:[%s1329 + $0x78] sm:$0xff]
    %s1346 = scalar_lea.vmem [#allocation11], 5
    %v1347 = vld [vmem:[%s1346] sm:$0x1]
    %v1349 = vperm.slane %v1347, 0
    %1351 = vmatpush.msra.mxu0 %v1345
    %1352 = vmatpush.msra.mxu0 %v1344
    %1353 = vmatpush.msra.mxu0 %v1343
    %1354 = vmatpush.msra.mxu0 %v1342
    %1355 = vmatpush.msra.mxu0 %v1341
    %1356 = vmatpush.msra.mxu0 %v1340
    %1357 = vmatpush.msra.mxu0 %v1339
    %1358 = vmatpush.msra.mxu0 %v1338
    %1359 = vmatpush.msra.mxu0 %v1337
    %1360 = vmatpush.msra.mxu0 %v1336
    %1361 = vmatpush.msra.mxu0 %v1335
    %1362 = vmatpush.msra.mxu0 %v1334
    %1363 = vmatpush.msra.mxu0 %v1333
    %1364 = vmatpush.msra.mxu0 %v1332
    %1365 = vmatpush.msra.mxu0 %v1331
    %1366 = vmatpush.msra.mxu0 %v1330
    %1367 = vmatmul.f32.gmra.mxu0 %v1120
    %v1368 = vpop.f32.mrf.mxu0
    %v1369 = vadd.f32 %v1349, %v1368
    %1370 = vdwg.mxu0
    %s1371 = scalar_lea.vmem %s7, 768
    %v1372 = vld [vmem:[%s1371] sm:$0xff]
    %v1373 = vld [vmem:[%s1371 + $0x8] sm:$0xff]
    %v1374 = vld [vmem:[%s1371 + $0x10] sm:$0xff]
    %v1375 = vld [vmem:[%s1371 + $0x18] sm:$0xff]
    %v1376 = vld [vmem:[%s1371 + $0x20] sm:$0xff]
    %v1377 = vld [vmem:[%s1371 + $0x28] sm:$0xff]
    %v1378 = vld [vmem:[%s1371 + $0x30] sm:$0xff]
    %v1379 = vld [vmem:[%s1371 + $0x38] sm:$0xff]
    %v1380 = vld [vmem:[%s1371 + $0x40] sm:$0xff]
    %v1381 = vld [vmem:[%s1371 + $0x48] sm:$0xff]
    %v1382 = vld [vmem:[%s1371 + $0x50] sm:$0xff]
    %v1383 = vld [vmem:[%s1371 + $0x58] sm:$0xff]
    %v1384 = vld [vmem:[%s1371 + $0x60] sm:$0xff]
    %v1385 = vld [vmem:[%s1371 + $0x68] sm:$0xff]
    %v1386 = vld [vmem:[%s1371 + $0x70] sm:$0xff]
    %v1387 = vld [vmem:[%s1371 + $0x78] sm:$0xff]
    %s1388 = scalar_lea.vmem [#allocation11], 6
    %v1389 = vld [vmem:[%s1388] sm:$0x1]
    %v1391 = vperm.slane %v1389, 0
    %1393 = vmatpush.msra.mxu0 %v1387
    %1394 = vmatpush.msra.mxu0 %v1386
    %1395 = vmatpush.msra.mxu0 %v1385
    %1396 = vmatpush.msra.mxu0 %v1384
    %1397 = vmatpush.msra.mxu0 %v1383
    %1398 = vmatpush.msra.mxu0 %v1382
    %1399 = vmatpush.msra.mxu0 %v1381
    %1400 = vmatpush.msra.mxu0 %v1380
    %1401 = vmatpush.msra.mxu0 %v1379
    %1402 = vmatpush.msra.mxu0 %v1378
    %1403 = vmatpush.msra.mxu0 %v1377
    %1404 = vmatpush.msra.mxu0 %v1376
    %1405 = vmatpush.msra.mxu0 %v1375
    %1406 = vmatpush.msra.mxu0 %v1374
    %1407 = vmatpush.msra.mxu0 %v1373
    %1408 = vmatpush.msra.mxu0 %v1372
    %1409 = vmatmul.f32.gmra.mxu0 %v1120
    %v1410 = vpop.f32.mrf.mxu0
    %v1411 = vadd.f32 %v1391, %v1410
    %1412 = vdwg.mxu0
    %s1413 = scalar_lea.vmem %s7, 896
    %v1414 = vld [vmem:[%s1413] sm:$0xff]
    %v1415 = vld [vmem:[%s1413 + $0x8] sm:$0xff]
    %v1416 = vld [vmem:[%s1413 + $0x10] sm:$0xff]
    %v1417 = vld [vmem:[%s1413 + $0x18] sm:$0xff]
    %v1418 = vld [vmem:[%s1413 + $0x20] sm:$0xff]
    %v1419 = vld [vmem:[%s1413 + $0x28] sm:$0xff]
    %v1420 = vld [vmem:[%s1413 + $0x30] sm:$0xff]
    %v1421 = vld [vmem:[%s1413 + $0x38] sm:$0xff]
    %v1422 = vld [vmem:[%s1413 + $0x40] sm:$0xff]
    %v1423 = vld [vmem:[%s1413 + $0x48] sm:$0xff]
    %v1424 = vld [vmem:[%s1413 + $0x50] sm:$0xff]
    %v1425 = vld [vmem:[%s1413 + $0x58] sm:$0xff]
    %v1426 = vld [vmem:[%s1413 + $0x60] sm:$0xff]
    %v1427 = vld [vmem:[%s1413 + $0x68] sm:$0xff]
    %v1428 = vld [vmem:[%s1413 + $0x70] sm:$0xff]
    %v1429 = vld [vmem:[%s1413 + $0x78] sm:$0xff]
    %s1430 = scalar_lea.vmem [#allocation11], 7
    %v1431 = vld [vmem:[%s1430] sm:$0x1]
    %v1433 = vperm.slane %v1431, 0
    %1435 = vmatpush.msra.mxu0 %v1429
    %1436 = vmatpush.msra.mxu0 %v1428
    %1437 = vmatpush.msra.mxu0 %v1427
    %1438 = vmatpush.msra.mxu0 %v1426
    %1439 = vmatpush.msra.mxu0 %v1425
    %1440 = vmatpush.msra.mxu0 %v1424
    %1441 = vmatpush.msra.mxu0 %v1423
    %1442 = vmatpush.msra.mxu0 %v1422
    %1443 = vmatpush.msra.mxu0 %v1421
    %1444 = vmatpush.msra.mxu0 %v1420
    %1445 = vmatpush.msra.mxu0 %v1419
    %1446 = vmatpush.msra.mxu0 %v1418
    %1447 = vmatpush.msra.mxu0 %v1417
    %1448 = vmatpush.msra.mxu0 %v1416
    %1449 = vmatpush.msra.mxu0 %v1415
    %1450 = vmatpush.msra.mxu0 %v1414
    %1451 = vmatmul.f32.gmra.mxu0 %v1120
    %v1452 = vpop.f32.mrf.mxu0
    %v1453 = vadd.f32 %v1433, %v1452
    %1454 = vdwg.mxu0
    %v1456 = vrot.slane %v1201, 6
    %v1459 = vrot.slane %v1243, 4
    %v1462 = vrot.slane %v1285, 2
    %v1465 = vrot.slane %v1369, 6
    %v1468 = vrot.slane %v1411, 4
    %v1471 = vrot.slane %v1453, 2
    %v1473 = vsel %vm424, %v1159, %v1456
    %vm1474 = vcmask 1043456
    %v1475 = vsel %vm1474, %v1473, %v1459
    %vm1476 = vcmask 1045504
    %v1477 = vsel %vm1476, %v1475, %v1462
    %v1478 = vsel %vm424, %v1327, %v1465
    %v1479 = vsel %vm1474, %v1478, %v1468
    %v1480 = vsel %vm1476, %v1479, %v1471
    %v1481 = vld [vmem:[#allocation12] sm:$0xff]
    %v1482 = vld [vmem:[#allocation12 + $0x8] sm:$0xff]
    %v1484 = vsel %vm455, %v1481, 0
    %v1487 = vsel %vm455, %v1482, 0
    %1489 = vmatpush.msra.mxu0 0.0
    %1490 = vmatpush.msra.mxu0 0.0
    %1491 = vmatpush.msra.mxu0 0.0
    %1492 = vmatpush.msra.mxu0 0.0
    %1493 = vmatpush.msra.mxu0 0.0
    %1494 = vmatpush.msra.mxu0 0.0
    %1495 = vmatpush.msra.mxu0 0.0
    %1496 = vmatpush.msra.mxu0 0.0
    %1497 = vmatpush.msra.mxu0 0.0
    %1498 = vmatpush.msra.mxu0 0.0
    %1499 = vmatpush.msra.mxu0 0.0
    %1500 = vmatpush.msra.mxu0 0.0
    %1501 = vmatpush.msra.mxu0 0.0
    %1502 = vmatpush.msra.mxu0 0.0
    %1503 = vmatpush.msra.mxu0 %v1480
    %1504 = vmatpush.msra.mxu0 %v1477
    %1505 = vmatmul.f32.gmra.mxu0 %v1484
    %v1506 = vpop.f32.mrf.mxu0
    %v1507 = vadd.f32 0.0, %v1506
    %1508 = vmatmul.f32.gmra.mxu0 %v1487
    %v1509 = vpop.f32.mrf.mxu0
    %v1510 = vadd.f32 0.0, %v1509
    %1511 = vdwg.mxu0
    %v1512 = vld [vmem:[%s21] sm:$0xff]
    %v1513 = vld [vmem:[%s21 + $0x8] sm:$0xff]
    %v1514 = vld [vmem:[%s21 + $0x10] sm:$0xff]
    %v1515 = vld [vmem:[%s21 + $0x18] sm:$0xff]
    %v1516 = vld [vmem:[%s21 + $0x20] sm:$0xff]
    %v1517 = vld [vmem:[%s21 + $0x28] sm:$0xff]
    %v1518 = vld [vmem:[%s21 + $0x30] sm:$0xff]
    %v1519 = vld [vmem:[%s21 + $0x38] sm:$0xff]
    %v1520 = vld [vmem:[#allocation21] sm:$0xf]
    %vm1521 = vcmask 523264
    %v1522 = vsel %vm1521, %v1507, 0.0
    %1523 = vadd.xlane.f32.xlu0 %v1522
    %v1524 = vpop.xlane.xlu0 %1523
    %v1525 = vsel %vm1521, %v1510, 0.0
    %1526 = vadd.xlane.f32.xlu0 %v1525
    %v1527 = vpop.xlane.xlu0 %1526
    %v1528 = vmul.f32 %v1524, %v380
    %v1529 = vmul.f32 %v1527, %v380
    %v1530 = vsub.f32 %v1507, %v1528
    %v1531 = vsub.f32 %v1510, %v1529
    %v1532 = vmul.f32 %v1530, %v1530
    %v1533 = vmul.f32 %v1531, %v1531
    %v1534 = vsel %vm1521, %v1532, 0.0
    %1535 = vadd.xlane.f32.xlu0 %v1534
    %v1536 = vpop.xlane.xlu0 %1535
    %v1537 = vsel %vm1521, %v1533, 0.0
    %1538 = vadd.xlane.f32.xlu0 %v1537
    %v1539 = vpop.xlane.xlu0 %1538
    %v1540 = vmul.f32 %v1536, %v380
    %v1541 = vmul.f32 %v1539, %v380
    %v1542 = vadd.f32 %v1540, 1e-05
    %v1543 = vadd.f32 %v1541, 1e-05
    %v1544 = vrsqrt.pop %v1542
    %v1545 = vmul.f32 %v1544, %v1542
    %v1546 = vmul.f32 %v1545, %v1544
    %v1547 = vmul.f32 0.5, %v1546
    %v1548 = vsub.f32 1.5, %v1547
    %v1549 = vmul.f32 %v1544, %v1548
    %vm1550 = vweird.f32 %v1542
    %vm1551 = vweird.f32 %v1544
    %vm1552 = vmor %vm1550, %vm1551
    %v1553 = vsel %vm1552, %v1544, %v1549
    %v1554 = vrsqrt.pop %v1543
    %v1555 = vmul.f32 %v1554, %v1543
    %v1556 = vmul.f32 %v1555, %v1554
    %v1557 = vmul.f32 0.5, %v1556
    %v1558 = vsub.f32 1.5, %v1557
    %v1559 = vmul.f32 %v1554, %v1558
    %vm1560 = vweird.f32 %v1543
    %vm1561 = vweird.f32 %v1554
    %vm1562 = vmor %vm1560, %vm1561
    %v1563 = vsel %vm1562, %v1554, %v1559
    %v1564 = vmul.f32 %v1530, %v1553
    %v1565 = vmul.f32 %v1531, %v1563
    %v1566 = vld [vmem:[%s11] sm:$0xff]
    %v1567 = vld [vmem:[%s11 + $0x8] sm:$0xff]
    %v1568 = vld [vmem:[%s11 + $0x10] sm:$0xff]
    %v1569 = vld [vmem:[%s11 + $0x18] sm:$0xff]
    %v1570 = vld [vmem:[%s11 + $0x20] sm:$0xff]
    %v1571 = vld [vmem:[%s11 + $0x28] sm:$0xff]
    %v1572 = vld [vmem:[%s11 + $0x30] sm:$0xff]
    %v1573 = vld [vmem:[%s11 + $0x38] sm:$0xff]
    %v1574 = vld [vmem:[%s12] sm:$0x1]
    %v1576 = vperm.slane %v1574, 0
    %v1579 = vsel %vm1521, %v1564, 0
    %v1582 = vsel %vm1521, %v1565, 0
    %1584 = vmatpush.msra.mxu0 0.0
    %1585 = vmatpush.msra.mxu0 0.0
    %1586 = vmatpush.msra.mxu0 0.0
    %1587 = vmatpush.msra.mxu0 0.0
    %1588 = vmatpush.msra.mxu0 0.0
    %1589 = vmatpush.msra.mxu0 0.0
    %1590 = vmatpush.msra.mxu0 0.0
    %1591 = vmatpush.msra.mxu0 0.0
    %1592 = vmatpush.msra.mxu0 %v1573
    %1593 = vmatpush.msra.mxu0 %v1572
    %1594 = vmatpush.msra.mxu0 %v1571
    %1595 = vmatpush.msra.mxu0 %v1570
    %1596 = vmatpush.msra.mxu0 %v1569
    %1597 = vmatpush.msra.mxu0 %v1568
    %1598 = vmatpush.msra.mxu0 %v1567
    %1599 = vmatpush.msra.mxu0 %v1566
    %1600 = vmatmul.f32.gmra.mxu0 %v1579
    %v1601 = vpop.f32.mrf.mxu0
    %v1602 = vadd.f32 %v1576, %v1601
    %1603 = vmatmul.f32.gmra.mxu0 %v1582
    %v1604 = vpop.f32.mrf.mxu0
    %v1605 = vadd.f32 %v1576, %v1604
    %1606 = vdwg.mxu0
    %v1607 = vmul.f32 %v1602, 0.25
    %v1608 = vmul.f32 %v1605, 0.25
    %v1609 = vld [vmem:[%s13] sm:$0xff]
    %v1610 = vld [vmem:[%s13 + $0x8] sm:$0xff]
    %v1611 = vld [vmem:[%s13 + $0x10] sm:$0xff]
    %v1612 = vld [vmem:[%s13 + $0x18] sm:$0xff]
    %v1613 = vld [vmem:[%s13 + $0x20] sm:$0xff]
    %v1614 = vld [vmem:[%s13 + $0x28] sm:$0xff]
    %v1615 = vld [vmem:[%s13 + $0x30] sm:$0xff]
    %v1616 = vld [vmem:[%s13 + $0x38] sm:$0xff]
    %v1617 = vld [vmem:[#allocation15] sm:$0x1]
    %v1619 = vperm.slane %v1617, 0
    %1621 = vmatpush.msra.mxu0 0.0
    %1622 = vmatpush.msra.mxu0 0.0
    %1623 = vmatpush.msra.mxu0 0.0
    %1624 = vmatpush.msra.mxu0 0.0
    %1625 = vmatpush.msra.mxu0 0.0
    %1626 = vmatpush.msra.mxu0 0.0
    %1627 = vmatpush.msra.mxu0 0.0
    %1628 = vmatpush.msra.mxu0 0.0
    %1629 = vmatpush.msra.mxu0 %v1616
    %1630 = vmatpush.msra.mxu0 %v1615
    %1631 = vmatpush.msra.mxu0 %v1614
    %1632 = vmatpush.msra.mxu0 %v1613
    %1633 = vmatpush.msra.mxu0 %v1612
    %1634 = vmatpush.msra.mxu0 %v1611
    %1635 = vmatpush.msra.mxu0 %v1610
    %1636 = vmatpush.msra.mxu0 %v1609
    %1637 = vmatmul.f32.gmra.mxu0 %v1579
    %v1638 = vpop.f32.mrf.mxu0
    %v1639 = vadd.f32 %v1619, %v1638
    %1640 = vmatmul.f32.gmra.mxu0 %v1582
    %v1641 = vpop.f32.mrf.mxu0
    %v1642 = vadd.f32 %v1619, %v1641
    %1643 = vdwg.mxu0
    %v1644 = vld [vmem:[%s15] sm:$0xff]
    %v1645 = vld [vmem:[%s15 + $0x8] sm:$0xff]
    %v1646 = vld [vmem:[%s15 + $0x10] sm:$0xff]
    %v1647 = vld [vmem:[%s15 + $0x18] sm:$0xff]
    %v1648 = vld [vmem:[%s15 + $0x20] sm:$0xff]
    %v1649 = vld [vmem:[%s15 + $0x28] sm:$0xff]
    %v1650 = vld [vmem:[%s15 + $0x30] sm:$0xff]
    %v1651 = vld [vmem:[%s15 + $0x38] sm:$0xff]
    %v1652 = vld [vmem:[#allocation17] sm:$0x1]
    %v1654 = vperm.slane %v1652, 0
    %1656 = vmatpush.msra.mxu0 0.0
    %1657 = vmatpush.msra.mxu0 0.0
    %1658 = vmatpush.msra.mxu0 0.0
    %1659 = vmatpush.msra.mxu0 0.0
    %1660 = vmatpush.msra.mxu0 0.0
    %1661 = vmatpush.msra.mxu0 0.0
    %1662 = vmatpush.msra.mxu0 0.0
    %1663 = vmatpush.msra.mxu0 0.0
    %1664 = vmatpush.msra.mxu0 %v1651
    %1665 = vmatpush.msra.mxu0 %v1650
    %1666 = vmatpush.msra.mxu0 %v1649
    %1667 = vmatpush.msra.mxu0 %v1648
    %1668 = vmatpush.msra.mxu0 %v1647
    %1669 = vmatpush.msra.mxu0 %v1646
    %1670 = vmatpush.msra.mxu0 %v1645
    %1671 = vmatpush.msra.mxu0 %v1644
    %1672 = vmatmul.f32.gmra.mxu0 %v1579
    %v1673 = vpop.f32.mrf.mxu0
    %v1674 = vadd.f32 %v1654, %v1673
    %1675 = vmatmul.f32.gmra.mxu0 %v1582
    %v1676 = vpop.f32.mrf.mxu0
    %v1677 = vadd.f32 %v1654, %v1676
    %1678 = vdwg.mxu0
    %v1679 = vmul.f32 %v1607, %v1639
    %v1680 = vmul.f32 %v1607, %v1642
    %v1682 = vsel %vm1521, %v1679, 0
    %v1685 = vsel %vm1521, %v1680, 0
    %1687 = vmatpush.msra.mxu0 0.0
    %1688 = vmatpush.msra.mxu0 0.0
    %1689 = vmatpush.msra.mxu0 0.0
    %1690 = vmatpush.msra.mxu0 0.0
    %1691 = vmatpush.msra.mxu0 0.0
    %1692 = vmatpush.msra.mxu0 0.0
    %1693 = vmatpush.msra.mxu0 0.0
    %1694 = vmatpush.msra.mxu0 0.0
    %1695 = vmatpush.msra.mxu0 %v1519
    %1696 = vmatpush.msra.mxu0 %v1518
    %1697 = vmatpush.msra.mxu0 %v1517
    %1698 = vmatpush.msra.mxu0 %v1516
    %1699 = vmatpush.msra.mxu0 %v1515
    %1700 = vmatpush.msra.mxu0 %v1514
    %1701 = vmatpush.msra.mxu0 %v1513
    %1702 = vmatpush.msra.mxu0 %v1512
    %1703 = vmatmul.f32.gmra.mxu0 %v1682
    %v1704 = vpop.f32.mrf.mxu0
    %v1705 = vadd.f32 0.0, %v1704
    %1706 = vmatmul.f32.gmra.mxu0 %v1685
    %v1707 = vpop.f32.mrf.mxu0
    %v1708 = vadd.f32 0.0, %v1707
    %1709 = vdwg.mxu0
    %v1710 = vmax.f32 %v1705, %v1708
    %v1711 = vsub.f32 %v1705, %v1710
    %v1712 = vmul.f32 %v1711, 1.442695
    %v1713 = vpow.pop %v1712
    %v1714 = vsub.f32 %v1708, %v1710
    %v1715 = vmul.f32 %v1714, 1.442695
    %v1716 = vpow.pop %v1715
    %v1717 = vadd.f32 %v1713, %v1716
    %v1718 = vrcp.pop %v1717
    %v1719 = vmul.f32 %v1713, %v1718
    %v1720 = vmul.f32 %v1716, %v1718
    %vm1721 = vcmask 31744
    %v1723 = vsel %vm1721, %v1719, 0
    %v1726 = vsel %vm1721, %v1720, 0
    %v1729 = vsel %vm1474, %v1520, 0
    %1731 = vmatpush.msra.mxu0 0.0
    %1732 = vmatpush.msra.mxu0 0.0
    %1733 = vmatpush.msra.mxu0 0.0
    %1734 = vmatpush.msra.mxu0 0.0
    %1735 = vmatpush.msra.mxu0 0.0
    %1736 = vmatpush.msra.mxu0 0.0
    %1737 = vmatpush.msra.mxu0 0.0
    %1738 = vmatpush.msra.mxu0 0.0
    %1739 = vmatpush.msra.mxu0 0.0
    %1740 = vmatpush.msra.mxu0 0.0
    %1741 = vmatpush.msra.mxu0 0.0
    %1742 = vmatpush.msra.mxu0 0.0
    %1743 = vmatpush.msra.mxu0 0.0
    %1744 = vmatpush.msra.mxu0 0.0
    %1745 = vmatpush.msra.mxu0 0.0
    %1746 = vmatpush.msra.mxu0 %v1729
    %1747 = vmatmul.f32.gmra.mxu0 %v1723
    %v1748 = vpop.f32.mrf.mxu0
    %v1749 = vadd.f32 0.0, %v1748
    %1750 = vmatmul.f32.gmra.mxu0 %v1726
    %v1751 = vpop.f32.mrf.mxu0
    %v1752 = vadd.f32 0.0, %v1751
    %1753 = vdwg.mxu0
    %v1754 = vmul.f32 %v1749, %v1674
    %v1755 = vmul.f32 %v1752, %v1677
    %v1756 = vadd.f32 %v1754, %v1755
    %v1757 = vmul.f32 %v1608, %v1639
    %v1758 = vmul.f32 %v1608, %v1642
    %v1760 = vsel %vm1521, %v1757, 0
    %v1763 = vsel %vm1521, %v1758, 0
    %1765 = vmatpush.msra.mxu0 0.0
    %1766 = vmatpush.msra.mxu0 0.0
    %1767 = vmatpush.msra.mxu0 0.0
    %1768 = vmatpush.msra.mxu0 0.0
    %1769 = vmatpush.msra.mxu0 0.0
    %1770 = vmatpush.msra.mxu0 0.0
    %1771 = vmatpush.msra.mxu0 0.0
    %1772 = vmatpush.msra.mxu0 0.0
    %1773 = vmatpush.msra.mxu0 %v1519
    %1774 = vmatpush.msra.mxu0 %v1518
    %1775 = vmatpush.msra.mxu0 %v1517
    %1776 = vmatpush.msra.mxu0 %v1516
    %1777 = vmatpush.msra.mxu0 %v1515
    %1778 = vmatpush.msra.mxu0 %v1514
    %1779 = vmatpush.msra.mxu0 %v1513
    %1780 = vmatpush.msra.mxu0 %v1512
    %1781 = vmatmul.f32.gmra.mxu0 %v1760
    %v1782 = vpop.f32.mrf.mxu0
    %v1783 = vadd.f32 0.0, %v1782
    %1784 = vmatmul.f32.gmra.mxu0 %v1763
    %v1785 = vpop.f32.mrf.mxu0
    %v1786 = vadd.f32 0.0, %v1785
    %1787 = vdwg.mxu0
    %v1788 = vmax.f32 %v1783, %v1786
    %v1789 = vsub.f32 %v1783, %v1788
    %v1790 = vmul.f32 %v1789, 1.442695
    %v1791 = vpow.pop %v1790
    %v1792 = vsub.f32 %v1786, %v1788
    %v1793 = vmul.f32 %v1792, 1.442695
    %v1794 = vpow.pop %v1793
    %v1795 = vadd.f32 %v1791, %v1794
    %v1796 = vrcp.pop %v1795
    %v1797 = vmul.f32 %v1791, %v1796
    %v1798 = vmul.f32 %v1794, %v1796
    %v1800 = vsel %vm1721, %v1797, 0
    %v1803 = vsel %vm1721, %v1798, 0
    %1805 = vmatpush.msra.mxu0 0.0
    %1806 = vmatpush.msra.mxu0 0.0
    %1807 = vmatpush.msra.mxu0 0.0
    %1808 = vmatpush.msra.mxu0 0.0
    %1809 = vmatpush.msra.mxu0 0.0
    %1810 = vmatpush.msra.mxu0 0.0
    %1811 = vmatpush.msra.mxu0 0.0
    %1812 = vmatpush.msra.mxu0 0.0
    %1813 = vmatpush.msra.mxu0 0.0
    %1814 = vmatpush.msra.mxu0 0.0
    %1815 = vmatpush.msra.mxu0 0.0
    %1816 = vmatpush.msra.mxu0 0.0
    %1817 = vmatpush.msra.mxu0 0.0
    %1818 = vmatpush.msra.mxu0 0.0
    %1819 = vmatpush.msra.mxu0 0.0
    %1820 = vmatpush.msra.mxu0 %v1729
    %1821 = vmatmul.f32.gmra.mxu0 %v1800
    %v1822 = vpop.f32.mrf.mxu0
    %v1823 = vadd.f32 0.0, %v1822
    %1824 = vmatmul.f32.gmra.mxu0 %v1803
    %v1825 = vpop.f32.mrf.mxu0
    %v1826 = vadd.f32 0.0, %v1825
    %1827 = vdwg.mxu0
    %v1828 = vmul.f32 %v1823, %v1674
    %v1829 = vmul.f32 %v1826, %v1677
    %v1830 = vadd.f32 %v1828, %v1829
    %v1831 = vld [vmem:[%s17] sm:$0xff]
    %v1832 = vld [vmem:[%s17 + $0x8] sm:$0xff]
    %v1833 = vld [vmem:[%s17 + $0x10] sm:$0xff]
    %v1834 = vld [vmem:[%s17 + $0x18] sm:$0xff]
    %v1835 = vld [vmem:[%s17 + $0x20] sm:$0xff]
    %v1836 = vld [vmem:[%s17 + $0x28] sm:$0xff]
    %v1837 = vld [vmem:[%s17 + $0x30] sm:$0xff]
    %v1838 = vld [vmem:[%s17 + $0x38] sm:$0xff]
    %v1839 = vld [vmem:[#allocation18] sm:$0x1]
    %v1841 = vperm.slane %v1839, 0
    %v1844 = vsel %vm1521, %v1756, 0
    %v1847 = vsel %vm1521, %v1830, 0
    %1849 = vmatpush.msra.mxu0 0.0
    %1850 = vmatpush.msra.mxu0 0.0
    %1851 = vmatpush.msra.mxu0 0.0
    %1852 = vmatpush.msra.mxu0 0.0
    %1853 = vmatpush.msra.mxu0 0.0
    %1854 = vmatpush.msra.mxu0 0.0
    %1855 = vmatpush.msra.mxu0 0.0
    %1856 = vmatpush.msra.mxu0 0.0
    %1857 = vmatpush.msra.mxu0 %v1838
    %1858 = vmatpush.msra.mxu0 %v1837
    %1859 = vmatpush.msra.mxu0 %v1836
    %1860 = vmatpush.msra.mxu0 %v1835
    %1861 = vmatpush.msra.mxu0 %v1834
    %1862 = vmatpush.msra.mxu0 %v1833
    %1863 = vmatpush.msra.mxu0 %v1832
    %1864 = vmatpush.msra.mxu0 %v1831
    %1865 = vmatmul.f32.gmra.mxu0 %v1844
    %v1866 = vpop.f32.mrf.mxu0
    %v1867 = vadd.f32 %v1841, %v1866
    %1868 = vmatmul.f32.gmra.mxu0 %v1847
    %v1869 = vpop.f32.mrf.mxu0
    %v1870 = vadd.f32 %v1841, %v1869
    %1871 = vdwg.mxu0
    %v1872 = vadd.f32 %v1507, %v1867
    %v1873 = vadd.f32 %v1510, %v1870
    %v1874 = vsel %vm1521, %v1872, 0.0
    %1875 = vadd.xlane.f32.xlu0 %v1874
    %v1876 = vpop.xlane.xlu0 %1875
    %v1877 = vsel %vm1521, %v1873, 0.0
    %1878 = vadd.xlane.f32.xlu0 %v1877
    %v1879 = vpop.xlane.xlu0 %1878
    %v1880 = vmul.f32 %v1876, %v380
    %v1881 = vmul.f32 %v1879, %v380
    %v1882 = vsub.f32 %v1872, %v1880
    %v1883 = vsub.f32 %v1873, %v1881
    %v1884 = vmul.f32 %v1882, %v1882
    %v1885 = vmul.f32 %v1883, %v1883
    %v1886 = vsel %vm1521, %v1884, 0.0
    %1887 = vadd.xlane.f32.xlu0 %v1886
    %v1888 = vpop.xlane.xlu0 %1887
    %v1889 = vsel %vm1521, %v1885, 0.0
    %1890 = vadd.xlane.f32.xlu0 %v1889
    %v1891 = vpop.xlane.xlu0 %1890
    %v1892 = vmul.f32 %v1888, %v380
    %v1893 = vmul.f32 %v1891, %v380
    %v1894 = vadd.f32 %v1892, 1e-05
    %v1895 = vadd.f32 %v1893, 1e-05
    %v1896 = vrsqrt.pop %v1894
    %v1897 = vmul.f32 %v1896, %v1894
    %v1898 = vmul.f32 %v1897, %v1896
    %v1899 = vmul.f32 0.5, %v1898
    %v1900 = vsub.f32 1.5, %v1899
    %v1901 = vmul.f32 %v1896, %v1900
    %vm1902 = vweird.f32 %v1894
    %vm1903 = vweird.f32 %v1896
    %vm1904 = vmor %vm1902, %vm1903
    %v1905 = vsel %vm1904, %v1896, %v1901
    %v1906 = vrsqrt.pop %v1895
    %v1907 = vmul.f32 %v1906, %v1895
    %v1908 = vmul.f32 %v1907, %v1906
    %v1909 = vmul.f32 0.5, %v1908
    %v1910 = vsub.f32 1.5, %v1909
    %v1911 = vmul.f32 %v1906, %v1910
    %vm1912 = vweird.f32 %v1895
    %vm1913 = vweird.f32 %v1906
    %vm1914 = vmor %vm1912, %vm1913
    %v1915 = vsel %vm1914, %v1906, %v1911
    %v1916 = vmul.f32 %v1882, %v1905
    %v1917 = vmul.f32 %v1883, %v1915
    %v1918 = vld [vmem:[%s19] sm:$0xff]
    %v1919 = vld [vmem:[%s19 + $0x8] sm:$0xff]
    %v1920 = vld [vmem:[%s19 + $0x10] sm:$0xff]
    %v1921 = vld [vmem:[%s19 + $0x18] sm:$0xff]
    %v1922 = vld [vmem:[%s19 + $0x20] sm:$0xff]
    %v1923 = vld [vmem:[%s19 + $0x28] sm:$0xff]
    %v1924 = vld [vmem:[%s19 + $0x30] sm:$0xff]
    %v1925 = vld [vmem:[%s19 + $0x38] sm:$0xff]
    %v1926 = vld [vmem:[#allocation20] sm:$0x1]
    %v1928 = vperm.slane %v1926, 0
    %v1931 = vsel %vm1521, %v1916, 0
    %v1934 = vsel %vm1521, %v1917, 0
    %1936 = vmatpush.msra.mxu0 0.0
    %1937 = vmatpush.msra.mxu0 0.0
    %1938 = vmatpush.msra.mxu0 0.0
    %1939 = vmatpush.msra.mxu0 0.0
    %1940 = vmatpush.msra.mxu0 0.0
    %1941 = vmatpush.msra.mxu0 0.0
    %1942 = vmatpush.msra.mxu0 0.0
    %1943 = vmatpush.msra.mxu0 0.0
    %1944 = vmatpush.msra.mxu0 %v1925
    %1945 = vmatpush.msra.mxu0 %v1924
    %1946 = vmatpush.msra.mxu0 %v1923
    %1947 = vmatpush.msra.mxu0 %v1922
    %1948 = vmatpush.msra.mxu0 %v1921
    %1949 = vmatpush.msra.mxu0 %v1920
    %1950 = vmatpush.msra.mxu0 %v1919
    %1951 = vmatpush.msra.mxu0 %v1918
    %1952 = vmatmul.f32.gmra.mxu0 %v1931
    %v1953 = vpop.f32.mrf.mxu0
    %v1954 = vadd.f32 %v1928, %v1953
    %1955 = vmatmul.f32.gmra.mxu0 %v1934
    %v1956 = vpop.f32.mrf.mxu0
    %v1957 = vadd.f32 %v1928, %v1956
    %1958 = vdwg.mxu0
    %v1959 = vmax.f32 %v1954, 0.0
    %v1960 = vmax.f32 %v1957, 0.0
    %v1961 = vadd.f32 %v1959, %v1507
    %v1962 = vadd.f32 %v1960, %v1510
    %v1963 = vsel %vm1521, %v1961, 0.0
    %1964 = vadd.xlane.f32.xlu0 %v1963
    %v1965 = vpop.xlane.xlu0 %1964
    %v1966 = vsel %vm1521, %v1962, 0.0
    %1967 = vadd.xlane.f32.xlu0 %v1966
    %v1968 = vpop.xlane.xlu0 %1967
    %v1969 = vmul.f32 %v1965, %v380
    %v1970 = vmul.f32 %v1968, %v380
    %v1971 = vsub.f32 %v1961, %v1969
    %v1972 = vsub.f32 %v1962, %v1970
    %v1973 = vmul.f32 %v1971, %v1971
    %v1974 = vmul.f32 %v1972, %v1972
    %v1975 = vsel %vm1521, %v1973, 0.0
    %1976 = vadd.xlane.f32.xlu0 %v1975
    %v1977 = vpop.xlane.xlu0 %1976
    %v1978 = vsel %vm1521, %v1974, 0.0
    %1979 = vadd.xlane.f32.xlu0 %v1978
    %v1980 = vpop.xlane.xlu0 %1979
    %v1981 = vmul.f32 %v1977, %v380
    %v1982 = vmul.f32 %v1980, %v380
    %v1983 = vadd.f32 %v1981, 1e-05
    %v1984 = vadd.f32 %v1982, 1e-05
    %v1985 = vrsqrt.pop %v1983
    %v1986 = vmul.f32 %v1985, %v1983
    %v1987 = vmul.f32 %v1986, %v1985
    %v1988 = vmul.f32 0.5, %v1987
    %v1989 = vsub.f32 1.5, %v1988
    %v1990 = vmul.f32 %v1985, %v1989
    %vm1991 = vweird.f32 %v1983
    %vm1992 = vweird.f32 %v1985
    %vm1993 = vmor %vm1991, %vm1992
    %v1994 = vsel %vm1993, %v1985, %v1990
    %v1995 = vrsqrt.pop %v1984
    %v1996 = vmul.f32 %v1995, %v1984
    %v1997 = vmul.f32 %v1996, %v1995
    %v1998 = vmul.f32 0.5, %v1997
    %v1999 = vsub.f32 1.5, %v1998
    %v2000 = vmul.f32 %v1995, %v1999
    %vm2001 = vweird.f32 %v1984
    %vm2002 = vweird.f32 %v1995
    %vm2003 = vmor %vm2001, %vm2002
    %v2004 = vsel %vm2003, %v1995, %v2000
    %v2005 = vmul.f32 %v1971, %v1994
    %v2006 = vmul.f32 %v1972, %v2004
    %s2007 = scalar_lea.vmem %s11, 64
    %v2008 = vld [vmem:[%s2007] sm:$0xff]
    %v2009 = vld [vmem:[%s2007 + $0x8] sm:$0xff]
    %v2010 = vld [vmem:[%s2007 + $0x10] sm:$0xff]
    %v2011 = vld [vmem:[%s2007 + $0x18] sm:$0xff]
    %v2012 = vld [vmem:[%s2007 + $0x20] sm:$0xff]
    %v2013 = vld [vmem:[%s2007 + $0x28] sm:$0xff]
    %v2014 = vld [vmem:[%s2007 + $0x30] sm:$0xff]
    %v2015 = vld [vmem:[%s2007 + $0x38] sm:$0xff]
    %s2016 = scalar_lea.vmem %s12, 1
    %v2017 = vld [vmem:[%s2016] sm:$0x1]
    %v2019 = vperm.slane %v2017, 0
    %v2022 = vsel %vm1521, %v2005, 0
    %v2025 = vsel %vm1521, %v2006, 0
    %2027 = vmatpush.msra.mxu0 0.0
    %2028 = vmatpush.msra.mxu0 0.0
    %2029 = vmatpush.msra.mxu0 0.0
    %2030 = vmatpush.msra.mxu0 0.0
    %2031 = vmatpush.msra.mxu0 0.0
    %2032 = vmatpush.msra.mxu0 0.0
    %2033 = vmatpush.msra.mxu0 0.0
    %2034 = vmatpush.msra.mxu0 0.0
    %2035 = vmatpush.msra.mxu0 %v2015
    %2036 = vmatpush.msra.mxu0 %v2014
    %2037 = vmatpush.msra.mxu0 %v2013
    %2038 = vmatpush.msra.mxu0 %v2012
    %2039 = vmatpush.msra.mxu0 %v2011
    %2040 = vmatpush.msra.mxu0 %v2010
    %2041 = vmatpush.msra.mxu0 %v2009
    %2042 = vmatpush.msra.mxu0 %v2008
    %2043 = vmatmul.f32.gmra.mxu0 %v2022
    %v2044 = vpop.f32.mrf.mxu0
    %v2045 = vadd.f32 %v2019, %v2044
    %2046 = vmatmul.f32.gmra.mxu0 %v2025
    %v2047 = vpop.f32.mrf.mxu0
    %v2048 = vadd.f32 %v2019, %v2047
    %2049 = vdwg.mxu0
    %v2050 = vmul.f32 %v2045, 0.25
    %v2051 = vmul.f32 %v2048, 0.25
    %s2052 = scalar_lea.vmem %s13, 64
    %v2053 = vld [vmem:[%s2052] sm:$0xff]
    %v2054 = vld [vmem:[%s2052 + $0x8] sm:$0xff]
    %v2055 = vld [vmem:[%s2052 + $0x10] sm:$0xff]
    %v2056 = vld [vmem:[%s2052 + $0x18] sm:$0xff]
    %v2057 = vld [vmem:[%s2052 + $0x20] sm:$0xff]
    %v2058 = vld [vmem:[%s2052 + $0x28] sm:$0xff]
    %v2059 = vld [vmem:[%s2052 + $0x30] sm:$0xff]
    %v2060 = vld [vmem:[%s2052 + $0x38] sm:$0xff]
    %s2061 = scalar_lea.vmem [#allocation15], 1
    %v2062 = vld [vmem:[%s2061] sm:$0x1]
    %v2064 = vperm.slane %v2062, 0
    %2066 = vmatpush.msra.mxu0 0.0
    %2067 = vmatpush.msra.mxu0 0.0
    %2068 = vmatpush.msra.mxu0 0.0
    %2069 = vmatpush.msra.mxu0 0.0
    %2070 = vmatpush.msra.mxu0 0.0
    %2071 = vmatpush.msra.mxu0 0.0
    %2072 = vmatpush.msra.mxu0 0.0
    %2073 = vmatpush.msra.mxu0 0.0
    %2074 = vmatpush.msra.mxu0 %v2060
    %2075 = vmatpush.msra.mxu0 %v2059
    %2076 = vmatpush.msra.mxu0 %v2058
    %2077 = vmatpush.msra.mxu0 %v2057
    %2078 = vmatpush.msra.mxu0 %v2056
    %2079 = vmatpush.msra.mxu0 %v2055
    %2080 = vmatpush.msra.mxu0 %v2054
    %2081 = vmatpush.msra.mxu0 %v2053
    %2082 = vmatmul.f32.gmra.mxu0 %v2022
    %v2083 = vpop.f32.mrf.mxu0
    %v2084 = vadd.f32 %v2064, %v2083
    %2085 = vmatmul.f32.gmra.mxu0 %v2025
    %v2086 = vpop.f32.mrf.mxu0
    %v2087 = vadd.f32 %v2064, %v2086
    %2088 = vdwg.mxu0
    %s2089 = scalar_lea.vmem %s15, 64
    %v2090 = vld [vmem:[%s2089] sm:$0xff]
    %v2091 = vld [vmem:[%s2089 + $0x8] sm:$0xff]
    %v2092 = vld [vmem:[%s2089 + $0x10] sm:$0xff]
    %v2093 = vld [vmem:[%s2089 + $0x18] sm:$0xff]
    %v2094 = vld [vmem:[%s2089 + $0x20] sm:$0xff]
    %v2095 = vld [vmem:[%s2089 + $0x28] sm:$0xff]
    %v2096 = vld [vmem:[%s2089 + $0x30] sm:$0xff]
    %v2097 = vld [vmem:[%s2089 + $0x38] sm:$0xff]
    %s2098 = scalar_lea.vmem [#allocation17], 1
    %v2099 = vld [vmem:[%s2098] sm:$0x1]
    %v2101 = vperm.slane %v2099, 0
    %2103 = vmatpush.msra.mxu0 0.0
    %2104 = vmatpush.msra.mxu0 0.0
    %2105 = vmatpush.msra.mxu0 0.0
    %2106 = vmatpush.msra.mxu0 0.0
    %2107 = vmatpush.msra.mxu0 0.0
    %2108 = vmatpush.msra.mxu0 0.0
    %2109 = vmatpush.msra.mxu0 0.0
    %2110 = vmatpush.msra.mxu0 0.0
    %2111 = vmatpush.msra.mxu0 %v2097
    %2112 = vmatpush.msra.mxu0 %v2096
    %2113 = vmatpush.msra.mxu0 %v2095
    %2114 = vmatpush.msra.mxu0 %v2094
    %2115 = vmatpush.msra.mxu0 %v2093
    %2116 = vmatpush.msra.mxu0 %v2092
    %2117 = vmatpush.msra.mxu0 %v2091
    %2118 = vmatpush.msra.mxu0 %v2090
    %2119 = vmatmul.f32.gmra.mxu0 %v2022
    %v2120 = vpop.f32.mrf.mxu0
    %v2121 = vadd.f32 %v2101, %v2120
    %2122 = vmatmul.f32.gmra.mxu0 %v2025
    %v2123 = vpop.f32.mrf.mxu0
    %v2124 = vadd.f32 %v2101, %v2123
    %2125 = vdwg.mxu0
    %v2126 = vmul.f32 %v2050, %v2084
    %v2127 = vmul.f32 %v2050, %v2087
    %v2129 = vsel %vm1521, %v2126, 0
    %v2132 = vsel %vm1521, %v2127, 0
    %2134 = vmatpush.msra.mxu0 0.0
    %2135 = vmatpush.msra.mxu0 0.0
    %2136 = vmatpush.msra.mxu0 0.0
    %2137 = vmatpush.msra.mxu0 0.0
    %2138 = vmatpush.msra.mxu0 0.0
    %2139 = vmatpush.msra.mxu0 0.0
    %2140 = vmatpush.msra.mxu0 0.0
    %2141 = vmatpush.msra.mxu0 0.0
    %2142 = vmatpush.msra.mxu0 %v1519
    %2143 = vmatpush.msra.mxu0 %v1518
    %2144 = vmatpush.msra.mxu0 %v1517
    %2145 = vmatpush.msra.mxu0 %v1516
    %2146 = vmatpush.msra.mxu0 %v1515
    %2147 = vmatpush.msra.mxu0 %v1514
    %2148 = vmatpush.msra.mxu0 %v1513
    %2149 = vmatpush.msra.mxu0 %v1512
    %2150 = vmatmul.f32.gmra.mxu0 %v2129
    %v2151 = vpop.f32.mrf.mxu0
    %v2152 = vadd.f32 0.0, %v2151
    %2153 = vmatmul.f32.gmra.mxu0 %v2132
    %v2154 = vpop.f32.mrf.mxu0
    %v2155 = vadd.f32 0.0, %v2154
    %2156 = vdwg.mxu0
    %v2157 = vmax.f32 %v2152, %v2155
    %v2158 = vsub.f32 %v2152, %v2157
    %v2159 = vmul.f32 %v2158, 1.442695
    %v2160 = vpow.pop %v2159
    %v2161 = vsub.f32 %v2155, %v2157
    %v2162 = vmul.f32 %v2161, 1.442695
    %v2163 = vpow.pop %v2162
    %v2164 = vadd.f32 %v2160, %v2163
    %v2165 = vrcp.pop %v2164
    %v2166 = vmul.f32 %v2160, %v2165
    %v2167 = vmul.f32 %v2163, %v2165
    %v2169 = vsel %vm1721, %v2166, 0
    %v2172 = vsel %vm1721, %v2167, 0
    %2174 = vmatpush.msra.mxu0 0.0
    %2175 = vmatpush.msra.mxu0 0.0
    %2176 = vmatpush.msra.mxu0 0.0
    %2177 = vmatpush.msra.mxu0 0.0
    %2178 = vmatpush.msra.mxu0 0.0
    %2179 = vmatpush.msra.mxu0 0.0
    %2180 = vmatpush.msra.mxu0 0.0
    %2181 = vmatpush.msra.mxu0 0.0
    %2182 = vmatpush.msra.mxu0 0.0
    %2183 = vmatpush.msra.mxu0 0.0
    %2184 = vmatpush.msra.mxu0 0.0
    %2185 = vmatpush.msra.mxu0 0.0
    %2186 = vmatpush.msra.mxu0 0.0
    %2187 = vmatpush.msra.mxu0 0.0
    %2188 = vmatpush.msra.mxu0 0.0
    %2189 = vmatpush.msra.mxu0 %v1729
    %2190 = vmatmul.f32.gmra.mxu0 %v2169
    %v2191 = vpop.f32.mrf.mxu0
    %v2192 = vadd.f32 0.0, %v2191
    %2193 = vmatmul.f32.gmra.mxu0 %v2172
    %v2194 = vpop.f32.mrf.mxu0
    %v2195 = vadd.f32 0.0, %v2194
    %2196 = vdwg.mxu0
    %v2197 = vmul.f32 %v2192, %v2121
    %v2198 = vmul.f32 %v2195, %v2124
    %v2199 = vadd.f32 %v2197, %v2198
    %v2200 = vmul.f32 %v2051, %v2084
    %v2201 = vmul.f32 %v2051, %v2087
    %v2203 = vsel %vm1521, %v2200, 0
    %v2206 = vsel %vm1521, %v2201, 0
    %2208 = vmatpush.msra.mxu0 0.0
    %2209 = vmatpush.msra.mxu0 0.0
    %2210 = vmatpush.msra.mxu0 0.0
    %2211 = vmatpush.msra.mxu0 0.0
    %2212 = vmatpush.msra.mxu0 0.0
    %2213 = vmatpush.msra.mxu0 0.0
    %2214 = vmatpush.msra.mxu0 0.0
    %2215 = vmatpush.msra.mxu0 0.0
    %2216 = vmatpush.msra.mxu0 %v1519
    %2217 = vmatpush.msra.mxu0 %v1518
    %2218 = vmatpush.msra.mxu0 %v1517
    %2219 = vmatpush.msra.mxu0 %v1516
    %2220 = vmatpush.msra.mxu0 %v1515
    %2221 = vmatpush.msra.mxu0 %v1514
    %2222 = vmatpush.msra.mxu0 %v1513
    %2223 = vmatpush.msra.mxu0 %v1512
    %2224 = vmatmul.f32.gmra.mxu0 %v2203
    %v2225 = vpop.f32.mrf.mxu0
    %v2226 = vadd.f32 0.0, %v2225
    %2227 = vmatmul.f32.gmra.mxu0 %v2206
    %v2228 = vpop.f32.mrf.mxu0
    %v2229 = vadd.f32 0.0, %v2228
    %2230 = vdwg.mxu0
    %v2231 = vmax.f32 %v2226, %v2229
    %v2232 = vsub.f32 %v2226, %v2231
    %v2233 = vmul.f32 %v2232, 1.442695
    %v2234 = vpow.pop %v2233
    %v2235 = vsub.f32 %v2229, %v2231
    %v2236 = vmul.f32 %v2235, 1.442695
    %v2237 = vpow.pop %v2236
    %v2238 = vadd.f32 %v2234, %v2237
    %v2239 = vrcp.pop %v2238
    %v2240 = vmul.f32 %v2234, %v2239
    %v2241 = vmul.f32 %v2237, %v2239
    %v2243 = vsel %vm1721, %v2240, 0
    %v2246 = vsel %vm1721, %v2241, 0
    %2248 = vmatpush.msra.mxu0 0.0
    %2249 = vmatpush.msra.mxu0 0.0
    %2250 = vmatpush.msra.mxu0 0.0
    %2251 = vmatpush.msra.mxu0 0.0
    %2252 = vmatpush.msra.mxu0 0.0
    %2253 = vmatpush.msra.mxu0 0.0
    %2254 = vmatpush.msra.mxu0 0.0
    %2255 = vmatpush.msra.mxu0 0.0
    %2256 = vmatpush.msra.mxu0 0.0
    %2257 = vmatpush.msra.mxu0 0.0
    %2258 = vmatpush.msra.mxu0 0.0
    %2259 = vmatpush.msra.mxu0 0.0
    %2260 = vmatpush.msra.mxu0 0.0
    %2261 = vmatpush.msra.mxu0 0.0
    %2262 = vmatpush.msra.mxu0 0.0
    %2263 = vmatpush.msra.mxu0 %v1729
    %2264 = vmatmul.f32.gmra.mxu0 %v2243
    %v2265 = vpop.f32.mrf.mxu0
    %v2266 = vadd.f32 0.0, %v2265
    %2267 = vmatmul.f32.gmra.mxu0 %v2246
    %v2268 = vpop.f32.mrf.mxu0
    %v2269 = vadd.f32 0.0, %v2268
    %2270 = vdwg.mxu0
    %v2271 = vmul.f32 %v2266, %v2121
    %v2272 = vmul.f32 %v2269, %v2124
    %v2273 = vadd.f32 %v2271, %v2272
    %s2274 = scalar_lea.vmem %s17, 64
    %v2275 = vld [vmem:[%s2274] sm:$0xff]
    %v2276 = vld [vmem:[%s2274 + $0x8] sm:$0xff]
    %v2277 = vld [vmem:[%s2274 + $0x10] sm:$0xff]
    %v2278 = vld [vmem:[%s2274 + $0x18] sm:$0xff]
    %v2279 = vld [vmem:[%s2274 + $0x20] sm:$0xff]
    %v2280 = vld [vmem:[%s2274 + $0x28] sm:$0xff]
    %v2281 = vld [vmem:[%s2274 + $0x30] sm:$0xff]
    %v2282 = vld [vmem:[%s2274 + $0x38] sm:$0xff]
    %s2283 = scalar_lea.vmem [#allocation18], 1
    %v2284 = vld [vmem:[%s2283] sm:$0x1]
    %v2286 = vperm.slane %v2284, 0
    %v2289 = vsel %vm1521, %v2199, 0
    %v2292 = vsel %vm1521, %v2273, 0
    %2294 = vmatpush.msra.mxu0 0.0
    %2295 = vmatpush.msra.mxu0 0.0
    %2296 = vmatpush.msra.mxu0 0.0
    %2297 = vmatpush.msra.mxu0 0.0
    %2298 = vmatpush.msra.mxu0 0.0
    %2299 = vmatpush.msra.mxu0 0.0
    %2300 = vmatpush.msra.mxu0 0.0
    %2301 = vmatpush.msra.mxu0 0.0
    %2302 = vmatpush.msra.mxu0 %v2282
    %2303 = vmatpush.msra.mxu0 %v2281
    %2304 = vmatpush.msra.mxu0 %v2280
    %2305 = vmatpush.msra.mxu0 %v2279
    %2306 = vmatpush.msra.mxu0 %v2278
    %2307 = vmatpush.msra.mxu0 %v2277
    %2308 = vmatpush.msra.mxu0 %v2276
    %2309 = vmatpush.msra.mxu0 %v2275
    %2310 = vmatmul.f32.gmra.mxu0 %v2289
    %v2311 = vpop.f32.mrf.mxu0
    %v2312 = vadd.f32 %v2286, %v2311
    %2313 = vmatmul.f32.gmra.mxu0 %v2292
    %v2314 = vpop.f32.mrf.mxu0
    %v2315 = vadd.f32 %v2286, %v2314
    %2316 = vdwg.mxu0
    %v2317 = vadd.f32 %v1961, %v2312
    %v2318 = vadd.f32 %v1962, %v2315
    %v2319 = vsel %vm1521, %v2317, 0.0
    %2320 = vadd.xlane.f32.xlu0 %v2319
    %v2321 = vpop.xlane.xlu0 %2320
    %v2322 = vsel %vm1521, %v2318, 0.0
    %2323 = vadd.xlane.f32.xlu0 %v2322
    %v2324 = vpop.xlane.xlu0 %2323
    %v2325 = vmul.f32 %v2321, %v380
    %v2326 = vmul.f32 %v2324, %v380
    %v2327 = vsub.f32 %v2317, %v2325
    %v2328 = vsub.f32 %v2318, %v2326
    %v2329 = vmul.f32 %v2327, %v2327
    %v2330 = vmul.f32 %v2328, %v2328
    %v2331 = vsel %vm1521, %v2329, 0.0
    %2332 = vadd.xlane.f32.xlu0 %v2331
    %v2333 = vpop.xlane.xlu0 %2332
    %v2334 = vsel %vm1521, %v2330, 0.0
    %2335 = vadd.xlane.f32.xlu0 %v2334
    %v2336 = vpop.xlane.xlu0 %2335
    %v2337 = vmul.f32 %v2333, %v380
    %v2338 = vmul.f32 %v2336, %v380
    %v2339 = vadd.f32 %v2337, 1e-05
    %v2340 = vadd.f32 %v2338, 1e-05
    %v2341 = vrsqrt.pop %v2339
    %v2342 = vmul.f32 %v2341, %v2339
    %v2343 = vmul.f32 %v2342, %v2341
    %v2344 = vmul.f32 0.5, %v2343
    %v2345 = vsub.f32 1.5, %v2344
    %v2346 = vmul.f32 %v2341, %v2345
    %vm2347 = vweird.f32 %v2339
    %vm2348 = vweird.f32 %v2341
    %vm2349 = vmor %vm2347, %vm2348
    %v2350 = vsel %vm2349, %v2341, %v2346
    %v2351 = vrsqrt.pop %v2340
    %v2352 = vmul.f32 %v2351, %v2340
    %v2353 = vmul.f32 %v2352, %v2351
    %v2354 = vmul.f32 0.5, %v2353
    %v2355 = vsub.f32 1.5, %v2354
    %v2356 = vmul.f32 %v2351, %v2355
    %vm2357 = vweird.f32 %v2340
    %vm2358 = vweird.f32 %v2351
    %vm2359 = vmor %vm2357, %vm2358
    %v2360 = vsel %vm2359, %v2351, %v2356
    %v2361 = vmul.f32 %v2327, %v2350
    %v2362 = vmul.f32 %v2328, %v2360
    %s2363 = scalar_lea.vmem %s19, 64
    %v2364 = vld [vmem:[%s2363] sm:$0xff]
    %v2365 = vld [vmem:[%s2363 + $0x8] sm:$0xff]
    %v2366 = vld [vmem:[%s2363 + $0x10] sm:$0xff]
    %v2367 = vld [vmem:[%s2363 + $0x18] sm:$0xff]
    %v2368 = vld [vmem:[%s2363 + $0x20] sm:$0xff]
    %v2369 = vld [vmem:[%s2363 + $0x28] sm:$0xff]
    %v2370 = vld [vmem:[%s2363 + $0x30] sm:$0xff]
    %v2371 = vld [vmem:[%s2363 + $0x38] sm:$0xff]
    %s2372 = scalar_lea.vmem [#allocation20], 1
    %v2373 = vld [vmem:[%s2372] sm:$0x1]
    %v2375 = vperm.slane %v2373, 0
    %v2378 = vsel %vm1521, %v2361, 0
    %v2381 = vsel %vm1521, %v2362, 0
    %2383 = vmatpush.msra.mxu0 0.0
    %2384 = vmatpush.msra.mxu0 0.0
    %2385 = vmatpush.msra.mxu0 0.0
    %2386 = vmatpush.msra.mxu0 0.0
    %2387 = vmatpush.msra.mxu0 0.0
    %2388 = vmatpush.msra.mxu0 0.0
    %2389 = vmatpush.msra.mxu0 0.0
    %2390 = vmatpush.msra.mxu0 0.0
    %2391 = vmatpush.msra.mxu0 %v2371
    %2392 = vmatpush.msra.mxu0 %v2370
    %2393 = vmatpush.msra.mxu0 %v2369
    %2394 = vmatpush.msra.mxu0 %v2368
    %2395 = vmatpush.msra.mxu0 %v2367
    %2396 = vmatpush.msra.mxu0 %v2366
    %2397 = vmatpush.msra.mxu0 %v2365
    %2398 = vmatpush.msra.mxu0 %v2364
    %2399 = vmatmul.f32.gmra.mxu0 %v2378
    %v2400 = vpop.f32.mrf.mxu0
    %v2401 = vadd.f32 %v2375, %v2400
    %2402 = vmatmul.f32.gmra.mxu0 %v2381
    %v2403 = vpop.f32.mrf.mxu0
    %v2404 = vadd.f32 %v2375, %v2403
    %2405 = vdwg.mxu0
    %v2406 = vmax.f32 %v2401, 0.0
    %v2407 = vmax.f32 %v2404, 0.0
    %v2408 = vadd.f32 %v2406, %v1961
    %v2409 = vadd.f32 %v2407, %v1962
    %v2410 = vsel %vm1521, %v2408, 0.0
    %2411 = vadd.xlane.f32.xlu0 %v2410
    %v2412 = vpop.xlane.xlu0 %2411
    %v2413 = vsel %vm1521, %v2409, 0.0
    %2414 = vadd.xlane.f32.xlu0 %v2413
    %v2415 = vpop.xlane.xlu0 %2414
    %v2416 = vmul.f32 %v2412, %v380
    %v2417 = vmul.f32 %v2415, %v380
    %v2418 = vsub.f32 %v2408, %v2416
    %v2419 = vsub.f32 %v2409, %v2417
    %v2420 = vmul.f32 %v2418, %v2418
    %v2421 = vmul.f32 %v2419, %v2419
    %v2422 = vsel %vm1521, %v2420, 0.0
    %2423 = vadd.xlane.f32.xlu0 %v2422
    %v2424 = vpop.xlane.xlu0 %2423
    %v2425 = vsel %vm1521, %v2421, 0.0
    %2426 = vadd.xlane.f32.xlu0 %v2425
    %v2427 = vpop.xlane.xlu0 %2426
    %v2428 = vmul.f32 %v2424, %v380
    %v2429 = vmul.f32 %v2427, %v380
    %v2430 = vadd.f32 %v2428, 1e-05
    %v2431 = vadd.f32 %v2429, 1e-05
    %v2432 = vrsqrt.pop %v2430
    %v2433 = vmul.f32 %v2432, %v2430
    %v2434 = vmul.f32 %v2433, %v2432
    %v2435 = vmul.f32 0.5, %v2434
    %v2436 = vsub.f32 1.5, %v2435
    %v2437 = vmul.f32 %v2432, %v2436
    %vm2438 = vweird.f32 %v2430
    %vm2439 = vweird.f32 %v2432
    %vm2440 = vmor %vm2438, %vm2439
    %v2441 = vsel %vm2440, %v2432, %v2437
    %v2442 = vrsqrt.pop %v2431
    %v2443 = vmul.f32 %v2442, %v2431
    %v2444 = vmul.f32 %v2443, %v2442
    %v2445 = vmul.f32 0.5, %v2444
    %v2446 = vsub.f32 1.5, %v2445
    %v2447 = vmul.f32 %v2442, %v2446
    %vm2448 = vweird.f32 %v2431
    %vm2449 = vweird.f32 %v2442
    %vm2450 = vmor %vm2448, %vm2449
    %v2451 = vsel %vm2450, %v2442, %v2447
    %v2452 = vmul.f32 %v2418, %v2441
    %v2453 = vmul.f32 %v2419, %v2451
    %s2454 = scalar_lea.vmem %s11, 128
    %v2455 = vld [vmem:[%s2454] sm:$0xff]
    %v2456 = vld [vmem:[%s2454 + $0x8] sm:$0xff]
    %v2457 = vld [vmem:[%s2454 + $0x10] sm:$0xff]
    %v2458 = vld [vmem:[%s2454 + $0x18] sm:$0xff]
    %v2459 = vld [vmem:[%s2454 + $0x20] sm:$0xff]
    %v2460 = vld [vmem:[%s2454 + $0x28] sm:$0xff]
    %v2461 = vld [vmem:[%s2454 + $0x30] sm:$0xff]
    %v2462 = vld [vmem:[%s2454 + $0x38] sm:$0xff]
    %s2463 = scalar_lea.vmem %s12, 2
    %v2464 = vld [vmem:[%s2463] sm:$0x1]
    %v2466 = vperm.slane %v2464, 0
    %v2469 = vsel %vm1521, %v2452, 0
    %v2472 = vsel %vm1521, %v2453, 0
    %2474 = vmatpush.msra.mxu0 0.0
    %2475 = vmatpush.msra.mxu0 0.0
    %2476 = vmatpush.msra.mxu0 0.0
    %2477 = vmatpush.msra.mxu0 0.0
    %2478 = vmatpush.msra.mxu0 0.0
    %2479 = vmatpush.msra.mxu0 0.0
    %2480 = vmatpush.msra.mxu0 0.0
    %2481 = vmatpush.msra.mxu0 0.0
    %2482 = vmatpush.msra.mxu0 %v2462
    %2483 = vmatpush.msra.mxu0 %v2461
    %2484 = vmatpush.msra.mxu0 %v2460
    %2485 = vmatpush.msra.mxu0 %v2459
    %2486 = vmatpush.msra.mxu0 %v2458
    %2487 = vmatpush.msra.mxu0 %v2457
    %2488 = vmatpush.msra.mxu0 %v2456
    %2489 = vmatpush.msra.mxu0 %v2455
    %2490 = vmatmul.f32.gmra.mxu0 %v2469
    %v2491 = vpop.f32.mrf.mxu0
    %v2492 = vadd.f32 %v2466, %v2491
    %2493 = vmatmul.f32.gmra.mxu0 %v2472
    %v2494 = vpop.f32.mrf.mxu0
    %v2495 = vadd.f32 %v2466, %v2494
    %2496 = vdwg.mxu0
    %v2497 = vmul.f32 %v2492, 0.25
    %v2498 = vmul.f32 %v2495, 0.25
    %s2499 = scalar_lea.vmem %s13, 128
    %v2500 = vld [vmem:[%s2499] sm:$0xff]
    %v2501 = vld [vmem:[%s2499 + $0x8] sm:$0xff]
    %v2502 = vld [vmem:[%s2499 + $0x10] sm:$0xff]
    %v2503 = vld [vmem:[%s2499 + $0x18] sm:$0xff]
    %v2504 = vld [vmem:[%s2499 + $0x20] sm:$0xff]
    %v2505 = vld [vmem:[%s2499 + $0x28] sm:$0xff]
    %v2506 = vld [vmem:[%s2499 + $0x30] sm:$0xff]
    %v2507 = vld [vmem:[%s2499 + $0x38] sm:$0xff]
    %s2508 = scalar_lea.vmem [#allocation15], 2
    %v2509 = vld [vmem:[%s2508] sm:$0x1]
    %v2511 = vperm.slane %v2509, 0
    %2513 = vmatpush.msra.mxu0 0.0
    %2514 = vmatpush.msra.mxu0 0.0
    %2515 = vmatpush.msra.mxu0 0.0
    %2516 = vmatpush.msra.mxu0 0.0
    %2517 = vmatpush.msra.mxu0 0.0
    %2518 = vmatpush.msra.mxu0 0.0
    %2519 = vmatpush.msra.mxu0 0.0
    %2520 = vmatpush.msra.mxu0 0.0
    %2521 = vmatpush.msra.mxu0 %v2507
    %2522 = vmatpush.msra.mxu0 %v2506
    %2523 = vmatpush.msra.mxu0 %v2505
    %2524 = vmatpush.msra.mxu0 %v2504
    %2525 = vmatpush.msra.mxu0 %v2503
    %2526 = vmatpush.msra.mxu0 %v2502
    %2527 = vmatpush.msra.mxu0 %v2501
    %2528 = vmatpush.msra.mxu0 %v2500
    %2529 = vmatmul.f32.gmra.mxu0 %v2469
    %v2530 = vpop.f32.mrf.mxu0
    %v2531 = vadd.f32 %v2511, %v2530
    %2532 = vmatmul.f32.gmra.mxu0 %v2472
    %v2533 = vpop.f32.mrf.mxu0
    %v2534 = vadd.f32 %v2511, %v2533
    %2535 = vdwg.mxu0
    %s2536 = scalar_lea.vmem %s15, 128
    %v2537 = vld [vmem:[%s2536] sm:$0xff]
    %v2538 = vld [vmem:[%s2536 + $0x8] sm:$0xff]
    %v2539 = vld [vmem:[%s2536 + $0x10] sm:$0xff]
    %v2540 = vld [vmem:[%s2536 + $0x18] sm:$0xff]
    %v2541 = vld [vmem:[%s2536 + $0x20] sm:$0xff]
    %v2542 = vld [vmem:[%s2536 + $0x28] sm:$0xff]
    %v2543 = vld [vmem:[%s2536 + $0x30] sm:$0xff]
    %v2544 = vld [vmem:[%s2536 + $0x38] sm:$0xff]
    %s2545 = scalar_lea.vmem [#allocation17], 2
    %v2546 = vld [vmem:[%s2545] sm:$0x1]
    %v2548 = vperm.slane %v2546, 0
    %2550 = vmatpush.msra.mxu0 0.0
    %2551 = vmatpush.msra.mxu0 0.0
    %2552 = vmatpush.msra.mxu0 0.0
    %2553 = vmatpush.msra.mxu0 0.0
    %2554 = vmatpush.msra.mxu0 0.0
    %2555 = vmatpush.msra.mxu0 0.0
    %2556 = vmatpush.msra.mxu0 0.0
    %2557 = vmatpush.msra.mxu0 0.0
    %2558 = vmatpush.msra.mxu0 %v2544
    %2559 = vmatpush.msra.mxu0 %v2543
    %2560 = vmatpush.msra.mxu0 %v2542
    %2561 = vmatpush.msra.mxu0 %v2541
    %2562 = vmatpush.msra.mxu0 %v2540
    %2563 = vmatpush.msra.mxu0 %v2539
    %2564 = vmatpush.msra.mxu0 %v2538
    %2565 = vmatpush.msra.mxu0 %v2537
    %2566 = vmatmul.f32.gmra.mxu0 %v2469
    %v2567 = vpop.f32.mrf.mxu0
    %v2568 = vadd.f32 %v2548, %v2567
    %2569 = vmatmul.f32.gmra.mxu0 %v2472
    %v2570 = vpop.f32.mrf.mxu0
    %v2571 = vadd.f32 %v2548, %v2570
    %2572 = vdwg.mxu0
    %v2573 = vmul.f32 %v2497, %v2531
    %v2574 = vmul.f32 %v2497, %v2534
    %v2576 = vsel %vm1521, %v2573, 0
    %v2579 = vsel %vm1521, %v2574, 0
    %2581 = vmatpush.msra.mxu0 0.0
    %2582 = vmatpush.msra.mxu0 0.0
    %2583 = vmatpush.msra.mxu0 0.0
    %2584 = vmatpush.msra.mxu0 0.0
    %2585 = vmatpush.msra.mxu0 0.0
    %2586 = vmatpush.msra.mxu0 0.0
    %2587 = vmatpush.msra.mxu0 0.0
    %2588 = vmatpush.msra.mxu0 0.0
    %2589 = vmatpush.msra.mxu0 %v1519
    %2590 = vmatpush.msra.mxu0 %v1518
    %2591 = vmatpush.msra.mxu0 %v1517
    %2592 = vmatpush.msra.mxu0 %v1516
    %2593 = vmatpush.msra.mxu0 %v1515
    %2594 = vmatpush.msra.mxu0 %v1514
    %2595 = vmatpush.msra.mxu0 %v1513
    %2596 = vmatpush.msra.mxu0 %v1512
    %2597 = vmatmul.f32.gmra.mxu0 %v2576
    %v2598 = vpop.f32.mrf.mxu0
    %v2599 = vadd.f32 0.0, %v2598
    %2600 = vmatmul.f32.gmra.mxu0 %v2579
    %v2601 = vpop.f32.mrf.mxu0
    %v2602 = vadd.f32 0.0, %v2601
    %2603 = vdwg.mxu0
    %v2604 = vmax.f32 %v2599, %v2602
    %v2605 = vsub.f32 %v2599, %v2604
    %v2606 = vmul.f32 %v2605, 1.442695
    %v2607 = vpow.pop %v2606
    %v2608 = vsub.f32 %v2602, %v2604
    %v2609 = vmul.f32 %v2608, 1.442695
    %v2610 = vpow.pop %v2609
    %v2611 = vadd.f32 %v2607, %v2610
    %v2612 = vrcp.pop %v2611
    %v2613 = vmul.f32 %v2607, %v2612
    %v2614 = vmul.f32 %v2610, %v2612
    %v2616 = vsel %vm1721, %v2613, 0
    %v2619 = vsel %vm1721, %v2614, 0
    %2621 = vmatpush.msra.mxu0 0.0
    %2622 = vmatpush.msra.mxu0 0.0
    %2623 = vmatpush.msra.mxu0 0.0
    %2624 = vmatpush.msra.mxu0 0.0
    %2625 = vmatpush.msra.mxu0 0.0
    %2626 = vmatpush.msra.mxu0 0.0
    %2627 = vmatpush.msra.mxu0 0.0
    %2628 = vmatpush.msra.mxu0 0.0
    %2629 = vmatpush.msra.mxu0 0.0
    %2630 = vmatpush.msra.mxu0 0.0
    %2631 = vmatpush.msra.mxu0 0.0
    %2632 = vmatpush.msra.mxu0 0.0
    %2633 = vmatpush.msra.mxu0 0.0
    %2634 = vmatpush.msra.mxu0 0.0
    %2635 = vmatpush.msra.mxu0 0.0
    %2636 = vmatpush.msra.mxu0 %v1729
    %2637 = vmatmul.f32.gmra.mxu0 %v2616
    %v2638 = vpop.f32.mrf.mxu0
    %v2639 = vadd.f32 0.0, %v2638
    %2640 = vmatmul.f32.gmra.mxu0 %v2619
    %v2641 = vpop.f32.mrf.mxu0
    %v2642 = vadd.f32 0.0, %v2641
    %2643 = vdwg.mxu0
    %v2644 = vmul.f32 %v2639, %v2568
    %v2645 = vmul.f32 %v2642, %v2571
    %v2646 = vadd.f32 %v2644, %v2645
    %v2647 = vmul.f32 %v2498, %v2531
    %v2648 = vmul.f32 %v2498, %v2534
    %v2650 = vsel %vm1521, %v2647, 0
    %v2653 = vsel %vm1521, %v2648, 0
    %2655 = vmatpush.msra.mxu0 0.0
    %2656 = vmatpush.msra.mxu0 0.0
    %2657 = vmatpush.msra.mxu0 0.0
    %2658 = vmatpush.msra.mxu0 0.0
    %2659 = vmatpush.msra.mxu0 0.0
    %2660 = vmatpush.msra.mxu0 0.0
    %2661 = vmatpush.msra.mxu0 0.0
    %2662 = vmatpush.msra.mxu0 0.0
    %2663 = vmatpush.msra.mxu0 %v1519
    %2664 = vmatpush.msra.mxu0 %v1518
    %2665 = vmatpush.msra.mxu0 %v1517
    %2666 = vmatpush.msra.mxu0 %v1516
    %2667 = vmatpush.msra.mxu0 %v1515
    %2668 = vmatpush.msra.mxu0 %v1514
    %2669 = vmatpush.msra.mxu0 %v1513
    %2670 = vmatpush.msra.mxu0 %v1512
    %2671 = vmatmul.f32.gmra.mxu0 %v2650
    %v2672 = vpop.f32.mrf.mxu0
    %v2673 = vadd.f32 0.0, %v2672
    %2674 = vmatmul.f32.gmra.mxu0 %v2653
    %v2675 = vpop.f32.mrf.mxu0
    %v2676 = vadd.f32 0.0, %v2675
    %2677 = vdwg.mxu0
    %v2678 = vmax.f32 %v2673, %v2676
    %v2679 = vsub.f32 %v2673, %v2678
    %v2680 = vmul.f32 %v2679, 1.442695
    %v2681 = vpow.pop %v2680
    %v2682 = vsub.f32 %v2676, %v2678
    %v2683 = vmul.f32 %v2682, 1.442695
    %v2684 = vpow.pop %v2683
    %v2685 = vadd.f32 %v2681, %v2684
    %v2686 = vrcp.pop %v2685
    %v2687 = vmul.f32 %v2681, %v2686
    %v2688 = vmul.f32 %v2684, %v2686
    %v2690 = vsel %vm1721, %v2687, 0
    %v2693 = vsel %vm1721, %v2688, 0
    %2695 = vmatpush.msra.mxu0 0.0
    %2696 = vmatpush.msra.mxu0 0.0
    %2697 = vmatpush.msra.mxu0 0.0
    %2698 = vmatpush.msra.mxu0 0.0
    %2699 = vmatpush.msra.mxu0 0.0
    %2700 = vmatpush.msra.mxu0 0.0
    %2701 = vmatpush.msra.mxu0 0.0
    %2702 = vmatpush.msra.mxu0 0.0
    %2703 = vmatpush.msra.mxu0 0.0
    %2704 = vmatpush.msra.mxu0 0.0
    %2705 = vmatpush.msra.mxu0 0.0
    %2706 = vmatpush.msra.mxu0 0.0
    %2707 = vmatpush.msra.mxu0 0.0
    %2708 = vmatpush.msra.mxu0 0.0
    %2709 = vmatpush.msra.mxu0 0.0
    %2710 = vmatpush.msra.mxu0 %v1729
    %2711 = vmatmul.f32.gmra.mxu0 %v2690
    %v2712 = vpop.f32.mrf.mxu0
    %v2713 = vadd.f32 0.0, %v2712
    %2714 = vmatmul.f32.gmra.mxu0 %v2693
    %v2715 = vpop.f32.mrf.mxu0
    %v2716 = vadd.f32 0.0, %v2715
    %2717 = vdwg.mxu0
    %v2718 = vmul.f32 %v2713, %v2568
    %v2719 = vmul.f32 %v2716, %v2571
    %v2720 = vadd.f32 %v2718, %v2719
    %s2721 = scalar_lea.vmem %s17, 128
    %v2722 = vld [vmem:[%s2721] sm:$0xff]
    %v2723 = vld [vmem:[%s2721 + $0x8] sm:$0xff]
    %v2724 = vld [vmem:[%s2721 + $0x10] sm:$0xff]
    %v2725 = vld [vmem:[%s2721 + $0x18] sm:$0xff]
    %v2726 = vld [vmem:[%s2721 + $0x20] sm:$0xff]
    %v2727 = vld [vmem:[%s2721 + $0x28] sm:$0xff]
    %v2728 = vld [vmem:[%s2721 + $0x30] sm:$0xff]
    %v2729 = vld [vmem:[%s2721 + $0x38] sm:$0xff]
    %s2730 = scalar_lea.vmem [#allocation18], 2
    %v2731 = vld [vmem:[%s2730] sm:$0x1]
    %v2733 = vperm.slane %v2731, 0
    %v2736 = vsel %vm1521, %v2646, 0
    %v2739 = vsel %vm1521, %v2720, 0
    %2741 = vmatpush.msra.mxu0 0.0
    %2742 = vmatpush.msra.mxu0 0.0
    %2743 = vmatpush.msra.mxu0 0.0
    %2744 = vmatpush.msra.mxu0 0.0
    %2745 = vmatpush.msra.mxu0 0.0
    %2746 = vmatpush.msra.mxu0 0.0
    %2747 = vmatpush.msra.mxu0 0.0
    %2748 = vmatpush.msra.mxu0 0.0
    %2749 = vmatpush.msra.mxu0 %v2729
    %2750 = vmatpush.msra.mxu0 %v2728
    %2751 = vmatpush.msra.mxu0 %v2727
    %2752 = vmatpush.msra.mxu0 %v2726
    %2753 = vmatpush.msra.mxu0 %v2725
    %2754 = vmatpush.msra.mxu0 %v2724
    %2755 = vmatpush.msra.mxu0 %v2723
    %2756 = vmatpush.msra.mxu0 %v2722
    %2757 = vmatmul.f32.gmra.mxu0 %v2736
    %v2758 = vpop.f32.mrf.mxu0
    %v2759 = vadd.f32 %v2733, %v2758
    %2760 = vmatmul.f32.gmra.mxu0 %v2739
    %v2761 = vpop.f32.mrf.mxu0
    %v2762 = vadd.f32 %v2733, %v2761
    %2763 = vdwg.mxu0
    %v2764 = vadd.f32 %v2408, %v2759
    %v2765 = vadd.f32 %v2409, %v2762
    %v2766 = vsel %vm1521, %v2764, 0.0
    %2767 = vadd.xlane.f32.xlu0 %v2766
    %v2768 = vpop.xlane.xlu0 %2767
    %v2769 = vsel %vm1521, %v2765, 0.0
    %2770 = vadd.xlane.f32.xlu0 %v2769
    %v2771 = vpop.xlane.xlu0 %2770
    %v2772 = vmul.f32 %v2768, %v380
    %v2773 = vmul.f32 %v2771, %v380
    %v2774 = vsub.f32 %v2764, %v2772
    %v2775 = vsub.f32 %v2765, %v2773
    %v2776 = vmul.f32 %v2774, %v2774
    %v2777 = vmul.f32 %v2775, %v2775
    %v2778 = vsel %vm1521, %v2776, 0.0
    %2779 = vadd.xlane.f32.xlu0 %v2778
    %v2780 = vpop.xlane.xlu0 %2779
    %v2781 = vsel %vm1521, %v2777, 0.0
    %2782 = vadd.xlane.f32.xlu0 %v2781
    %v2783 = vpop.xlane.xlu0 %2782
    %v2784 = vmul.f32 %v2780, %v380
    %v2785 = vmul.f32 %v2783, %v380
    %v2786 = vadd.f32 %v2784, 1e-05
    %v2787 = vadd.f32 %v2785, 1e-05
    %v2788 = vrsqrt.pop %v2786
    %v2789 = vmul.f32 %v2788, %v2786
    %v2790 = vmul.f32 %v2789, %v2788
    %v2791 = vmul.f32 0.5, %v2790
    %v2792 = vsub.f32 1.5, %v2791
    %v2793 = vmul.f32 %v2788, %v2792
    %vm2794 = vweird.f32 %v2786
    %vm2795 = vweird.f32 %v2788
    %vm2796 = vmor %vm2794, %vm2795
    %v2797 = vsel %vm2796, %v2788, %v2793
    %v2798 = vrsqrt.pop %v2787
    %v2799 = vmul.f32 %v2798, %v2787
    %v2800 = vmul.f32 %v2799, %v2798
    %v2801 = vmul.f32 0.5, %v2800
    %v2802 = vsub.f32 1.5, %v2801
    %v2803 = vmul.f32 %v2798, %v2802
    %vm2804 = vweird.f32 %v2787
    %vm2805 = vweird.f32 %v2798
    %vm2806 = vmor %vm2804, %vm2805
    %v2807 = vsel %vm2806, %v2798, %v2803
    %v2808 = vmul.f32 %v2774, %v2797
    %v2809 = vmul.f32 %v2775, %v2807
    %s2810 = scalar_lea.vmem %s19, 128
    %v2811 = vld [vmem:[%s2810] sm:$0xff]
    %v2812 = vld [vmem:[%s2810 + $0x8] sm:$0xff]
    %v2813 = vld [vmem:[%s2810 + $0x10] sm:$0xff]
    %v2814 = vld [vmem:[%s2810 + $0x18] sm:$0xff]
    %v2815 = vld [vmem:[%s2810 + $0x20] sm:$0xff]
    %v2816 = vld [vmem:[%s2810 + $0x28] sm:$0xff]
    %v2817 = vld [vmem:[%s2810 + $0x30] sm:$0xff]
    %v2818 = vld [vmem:[%s2810 + $0x38] sm:$0xff]
    %s2819 = scalar_lea.vmem [#allocation20], 2
    %v2820 = vld [vmem:[%s2819] sm:$0x1]
    %v2822 = vperm.slane %v2820, 0
    %v2825 = vsel %vm1521, %v2808, 0
    %v2828 = vsel %vm1521, %v2809, 0
    %2830 = vmatpush.msra.mxu0 0.0
    %2831 = vmatpush.msra.mxu0 0.0
    %2832 = vmatpush.msra.mxu0 0.0
    %2833 = vmatpush.msra.mxu0 0.0
    %2834 = vmatpush.msra.mxu0 0.0
    %2835 = vmatpush.msra.mxu0 0.0
    %2836 = vmatpush.msra.mxu0 0.0
    %2837 = vmatpush.msra.mxu0 0.0
    %2838 = vmatpush.msra.mxu0 %v2818
    %2839 = vmatpush.msra.mxu0 %v2817
    %2840 = vmatpush.msra.mxu0 %v2816
    %2841 = vmatpush.msra.mxu0 %v2815
    %2842 = vmatpush.msra.mxu0 %v2814
    %2843 = vmatpush.msra.mxu0 %v2813
    %2844 = vmatpush.msra.mxu0 %v2812
    %2845 = vmatpush.msra.mxu0 %v2811
    %2846 = vmatmul.f32.gmra.mxu0 %v2825
    %v2847 = vpop.f32.mrf.mxu0
    %v2848 = vadd.f32 %v2822, %v2847
    %2849 = vmatmul.f32.gmra.mxu0 %v2828
    %v2850 = vpop.f32.mrf.mxu0
    %v2851 = vadd.f32 %v2822, %v2850
    %2852 = vdwg.mxu0
    %v2853 = vmax.f32 %v2848, 0.0
    %v2854 = vmax.f32 %v2851, 0.0
    %v2855 = vadd.f32 %v2853, %v2408
    %v2856 = vadd.f32 %v2854, %v2409
    %v2857 = vsel %vm1521, %v2855, 0.0
    %2858 = vadd.xlane.f32.xlu0 %v2857
    %v2859 = vpop.xlane.xlu0 %2858
    %v2860 = vsel %vm1521, %v2856, 0.0
    %2861 = vadd.xlane.f32.xlu0 %v2860
    %v2862 = vpop.xlane.xlu0 %2861
    %v2863 = vmul.f32 %v2859, %v380
    %v2864 = vmul.f32 %v2862, %v380
    %v2865 = vsub.f32 %v2855, %v2863
    %v2866 = vsub.f32 %v2856, %v2864
    %v2867 = vmul.f32 %v2865, %v2865
    %v2868 = vmul.f32 %v2866, %v2866
    %v2869 = vsel %vm1521, %v2867, 0.0
    %2870 = vadd.xlane.f32.xlu0 %v2869
    %v2871 = vpop.xlane.xlu0 %2870
    %v2872 = vsel %vm1521, %v2868, 0.0
    %2873 = vadd.xlane.f32.xlu0 %v2872
    %v2874 = vpop.xlane.xlu0 %2873
    %v2875 = vmul.f32 %v2871, %v380
    %v2876 = vmul.f32 %v2874, %v380
    %v2877 = vadd.f32 %v2875, 1e-05
    %v2878 = vadd.f32 %v2876, 1e-05
    %v2879 = vrsqrt.pop %v2877
    %v2880 = vmul.f32 %v2879, %v2877
    %v2881 = vmul.f32 %v2880, %v2879
    %v2882 = vmul.f32 0.5, %v2881
    %v2883 = vsub.f32 1.5, %v2882
    %v2884 = vmul.f32 %v2879, %v2883
    %vm2885 = vweird.f32 %v2877
    %vm2886 = vweird.f32 %v2879
    %vm2887 = vmor %vm2885, %vm2886
    %v2888 = vsel %vm2887, %v2879, %v2884
    %v2889 = vrsqrt.pop %v2878
    %v2890 = vmul.f32 %v2889, %v2878
    %v2891 = vmul.f32 %v2890, %v2889
    %v2892 = vmul.f32 0.5, %v2891
    %v2893 = vsub.f32 1.5, %v2892
    %v2894 = vmul.f32 %v2889, %v2893
    %vm2895 = vweird.f32 %v2878
    %vm2896 = vweird.f32 %v2889
    %vm2897 = vmor %vm2895, %vm2896
    %v2898 = vsel %vm2897, %v2889, %v2894
    %v2899 = vmul.f32 %v2865, %v2888
    %v2900 = vmul.f32 %v2866, %v2898
    %s2901 = scalar_lea.vmem %s11, 192
    %v2902 = vld [vmem:[%s2901] sm:$0xff]
    %v2903 = vld [vmem:[%s2901 + $0x8] sm:$0xff]
    %v2904 = vld [vmem:[%s2901 + $0x10] sm:$0xff]
    %v2905 = vld [vmem:[%s2901 + $0x18] sm:$0xff]
    %v2906 = vld [vmem:[%s2901 + $0x20] sm:$0xff]
    %v2907 = vld [vmem:[%s2901 + $0x28] sm:$0xff]
    %v2908 = vld [vmem:[%s2901 + $0x30] sm:$0xff]
    %v2909 = vld [vmem:[%s2901 + $0x38] sm:$0xff]
    %s2910 = scalar_lea.vmem %s12, 3
    %v2911 = vld [vmem:[%s2910] sm:$0x1]
    %v2913 = vperm.slane %v2911, 0
    %v2916 = vsel %vm1521, %v2899, 0
    %v2919 = vsel %vm1521, %v2900, 0
    %2921 = vmatpush.msra.mxu0 0.0
    %2922 = vmatpush.msra.mxu0 0.0
    %2923 = vmatpush.msra.mxu0 0.0
    %2924 = vmatpush.msra.mxu0 0.0
    %2925 = vmatpush.msra.mxu0 0.0
    %2926 = vmatpush.msra.mxu0 0.0
    %2927 = vmatpush.msra.mxu0 0.0
    %2928 = vmatpush.msra.mxu0 0.0
    %2929 = vmatpush.msra.mxu0 %v2909
    %2930 = vmatpush.msra.mxu0 %v2908
    %2931 = vmatpush.msra.mxu0 %v2907
    %2932 = vmatpush.msra.mxu0 %v2906
    %2933 = vmatpush.msra.mxu0 %v2905
    %2934 = vmatpush.msra.mxu0 %v2904
    %2935 = vmatpush.msra.mxu0 %v2903
    %2936 = vmatpush.msra.mxu0 %v2902
    %2937 = vmatmul.f32.gmra.mxu0 %v2916
    %v2938 = vpop.f32.mrf.mxu0
    %v2939 = vadd.f32 %v2913, %v2938
    %2940 = vmatmul.f32.gmra.mxu0 %v2919
    %v2941 = vpop.f32.mrf.mxu0
    %v2942 = vadd.f32 %v2913, %v2941
    %2943 = vdwg.mxu0
    %v2944 = vmul.f32 %v2939, 0.25
    %v2945 = vmul.f32 %v2942, 0.25
    %s2946 = scalar_lea.vmem %s13, 192
    %v2947 = vld [vmem:[%s2946] sm:$0xff]
    %v2948 = vld [vmem:[%s2946 + $0x8] sm:$0xff]
    %v2949 = vld [vmem:[%s2946 + $0x10] sm:$0xff]
    %v2950 = vld [vmem:[%s2946 + $0x18] sm:$0xff]
    %v2951 = vld [vmem:[%s2946 + $0x20] sm:$0xff]
    %v2952 = vld [vmem:[%s2946 + $0x28] sm:$0xff]
    %v2953 = vld [vmem:[%s2946 + $0x30] sm:$0xff]
    %v2954 = vld [vmem:[%s2946 + $0x38] sm:$0xff]
    %s2955 = scalar_lea.vmem [#allocation15], 3
    %v2956 = vld [vmem:[%s2955] sm:$0x1]
    %v2958 = vperm.slane %v2956, 0
    %2960 = vmatpush.msra.mxu0 0.0
    %2961 = vmatpush.msra.mxu0 0.0
    %2962 = vmatpush.msra.mxu0 0.0
    %2963 = vmatpush.msra.mxu0 0.0
    %2964 = vmatpush.msra.mxu0 0.0
    %2965 = vmatpush.msra.mxu0 0.0
    %2966 = vmatpush.msra.mxu0 0.0
    %2967 = vmatpush.msra.mxu0 0.0
    %2968 = vmatpush.msra.mxu0 %v2954
    %2969 = vmatpush.msra.mxu0 %v2953
    %2970 = vmatpush.msra.mxu0 %v2952
    %2971 = vmatpush.msra.mxu0 %v2951
    %2972 = vmatpush.msra.mxu0 %v2950
    %2973 = vmatpush.msra.mxu0 %v2949
    %2974 = vmatpush.msra.mxu0 %v2948
    %2975 = vmatpush.msra.mxu0 %v2947
    %2976 = vmatmul.f32.gmra.mxu0 %v2916
    %v2977 = vpop.f32.mrf.mxu0
    %v2978 = vadd.f32 %v2958, %v2977
    %2979 = vmatmul.f32.gmra.mxu0 %v2919
    %v2980 = vpop.f32.mrf.mxu0
    %v2981 = vadd.f32 %v2958, %v2980
    %2982 = vdwg.mxu0
    %s2983 = scalar_lea.vmem %s15, 192
    %v2984 = vld [vmem:[%s2983] sm:$0xff]
    %v2985 = vld [vmem:[%s2983 + $0x8] sm:$0xff]
    %v2986 = vld [vmem:[%s2983 + $0x10] sm:$0xff]
    %v2987 = vld [vmem:[%s2983 + $0x18] sm:$0xff]
    %v2988 = vld [vmem:[%s2983 + $0x20] sm:$0xff]
    %v2989 = vld [vmem:[%s2983 + $0x28] sm:$0xff]
    %v2990 = vld [vmem:[%s2983 + $0x30] sm:$0xff]
    %v2991 = vld [vmem:[%s2983 + $0x38] sm:$0xff]
    %s2992 = scalar_lea.vmem [#allocation17], 3
    %v2993 = vld [vmem:[%s2992] sm:$0x1]
    %v2995 = vperm.slane %v2993, 0
    %2997 = vmatpush.msra.mxu0 0.0
    %2998 = vmatpush.msra.mxu0 0.0
    %2999 = vmatpush.msra.mxu0 0.0
    %3000 = vmatpush.msra.mxu0 0.0
    %3001 = vmatpush.msra.mxu0 0.0
    %3002 = vmatpush.msra.mxu0 0.0
    %3003 = vmatpush.msra.mxu0 0.0
    %3004 = vmatpush.msra.mxu0 0.0
    %3005 = vmatpush.msra.mxu0 %v2991
    %3006 = vmatpush.msra.mxu0 %v2990
    %3007 = vmatpush.msra.mxu0 %v2989
    %3008 = vmatpush.msra.mxu0 %v2988
    %3009 = vmatpush.msra.mxu0 %v2987
    %3010 = vmatpush.msra.mxu0 %v2986
    %3011 = vmatpush.msra.mxu0 %v2985
    %3012 = vmatpush.msra.mxu0 %v2984
    %3013 = vmatmul.f32.gmra.mxu0 %v2916
    %v3014 = vpop.f32.mrf.mxu0
    %v3015 = vadd.f32 %v2995, %v3014
    %3016 = vmatmul.f32.gmra.mxu0 %v2919
    %v3017 = vpop.f32.mrf.mxu0
    %v3018 = vadd.f32 %v2995, %v3017
    %3019 = vdwg.mxu0
    %v3020 = vmul.f32 %v2944, %v2978
    %v3021 = vmul.f32 %v2944, %v2981
    %v3023 = vsel %vm1521, %v3020, 0
    %v3026 = vsel %vm1521, %v3021, 0
    %3028 = vmatpush.msra.mxu0 0.0
    %3029 = vmatpush.msra.mxu0 0.0
    %3030 = vmatpush.msra.mxu0 0.0
    %3031 = vmatpush.msra.mxu0 0.0
    %3032 = vmatpush.msra.mxu0 0.0
    %3033 = vmatpush.msra.mxu0 0.0
    %3034 = vmatpush.msra.mxu0 0.0
    %3035 = vmatpush.msra.mxu0 0.0
    %3036 = vmatpush.msra.mxu0 %v1519
    %3037 = vmatpush.msra.mxu0 %v1518
    %3038 = vmatpush.msra.mxu0 %v1517
    %3039 = vmatpush.msra.mxu0 %v1516
    %3040 = vmatpush.msra.mxu0 %v1515
    %3041 = vmatpush.msra.mxu0 %v1514
    %3042 = vmatpush.msra.mxu0 %v1513
    %3043 = vmatpush.msra.mxu0 %v1512
    %3044 = vmatmul.f32.gmra.mxu0 %v3023
    %v3045 = vpop.f32.mrf.mxu0
    %v3046 = vadd.f32 0.0, %v3045
    %3047 = vmatmul.f32.gmra.mxu0 %v3026
    %v3048 = vpop.f32.mrf.mxu0
    %v3049 = vadd.f32 0.0, %v3048
    %3050 = vdwg.mxu0
    %v3051 = vmax.f32 %v3046, %v3049
    %v3052 = vsub.f32 %v3046, %v3051
    %v3053 = vmul.f32 %v3052, 1.442695
    %v3054 = vpow.pop %v3053
    %v3055 = vsub.f32 %v3049, %v3051
    %v3056 = vmul.f32 %v3055, 1.442695
    %v3057 = vpow.pop %v3056
    %v3058 = vadd.f32 %v3054, %v3057
    %v3059 = vrcp.pop %v3058
    %v3060 = vmul.f32 %v3054, %v3059
    %v3061 = vmul.f32 %v3057, %v3059
    %v3063 = vsel %vm1721, %v3060, 0
    %v3066 = vsel %vm1721, %v3061, 0
    %3068 = vmatpush.msra.mxu0 0.0
    %3069 = vmatpush.msra.mxu0 0.0
    %3070 = vmatpush.msra.mxu0 0.0
    %3071 = vmatpush.msra.mxu0 0.0
    %3072 = vmatpush.msra.mxu0 0.0
    %3073 = vmatpush.msra.mxu0 0.0
    %3074 = vmatpush.msra.mxu0 0.0
    %3075 = vmatpush.msra.mxu0 0.0
    %3076 = vmatpush.msra.mxu0 0.0
    %3077 = vmatpush.msra.mxu0 0.0
    %3078 = vmatpush.msra.mxu0 0.0
    %3079 = vmatpush.msra.mxu0 0.0
    %3080 = vmatpush.msra.mxu0 0.0
    %3081 = vmatpush.msra.mxu0 0.0
    %3082 = vmatpush.msra.mxu0 0.0
    %3083 = vmatpush.msra.mxu0 %v1729
    %3084 = vmatmul.f32.gmra.mxu0 %v3063
    %v3085 = vpop.f32.mrf.mxu0
    %v3086 = vadd.f32 0.0, %v3085
    %3087 = vmatmul.f32.gmra.mxu0 %v3066
    %v3088 = vpop.f32.mrf.mxu0
    %v3089 = vadd.f32 0.0, %v3088
    %3090 = vdwg.mxu0
    %v3091 = vmul.f32 %v3086, %v3015
    %v3092 = vmul.f32 %v3089, %v3018
    %v3093 = vadd.f32 %v3091, %v3092
    %v3094 = vmul.f32 %v2945, %v2978
    %v3095 = vmul.f32 %v2945, %v2981
    %v3097 = vsel %vm1521, %v3094, 0
    %v3100 = vsel %vm1521, %v3095, 0
    %3102 = vmatpush.msra.mxu0 0.0
    %3103 = vmatpush.msra.mxu0 0.0
    %3104 = vmatpush.msra.mxu0 0.0
    %3105 = vmatpush.msra.mxu0 0.0
    %3106 = vmatpush.msra.mxu0 0.0
    %3107 = vmatpush.msra.mxu0 0.0
    %3108 = vmatpush.msra.mxu0 0.0
    %3109 = vmatpush.msra.mxu0 0.0
    %3110 = vmatpush.msra.mxu0 %v1519
    %3111 = vmatpush.msra.mxu0 %v1518
    %3112 = vmatpush.msra.mxu0 %v1517
    %3113 = vmatpush.msra.mxu0 %v1516
    %3114 = vmatpush.msra.mxu0 %v1515
    %3115 = vmatpush.msra.mxu0 %v1514
    %3116 = vmatpush.msra.mxu0 %v1513
    %3117 = vmatpush.msra.mxu0 %v1512
    %3118 = vmatmul.f32.gmra.mxu0 %v3097
    %v3119 = vpop.f32.mrf.mxu0
    %v3120 = vadd.f32 0.0, %v3119
    %3121 = vmatmul.f32.gmra.mxu0 %v3100
    %v3122 = vpop.f32.mrf.mxu0
    %v3123 = vadd.f32 0.0, %v3122
    %3124 = vdwg.mxu0
    %v3125 = vmax.f32 %v3120, %v3123
    %v3126 = vsub.f32 %v3120, %v3125
    %v3127 = vmul.f32 %v3126, 1.442695
    %v3128 = vpow.pop %v3127
    %v3129 = vsub.f32 %v3123, %v3125
    %v3130 = vmul.f32 %v3129, 1.442695
    %v3131 = vpow.pop %v3130
    %v3132 = vadd.f32 %v3128, %v3131
    %v3133 = vrcp.pop %v3132
    %v3134 = vmul.f32 %v3128, %v3133
    %v3135 = vmul.f32 %v3131, %v3133
    %v3137 = vsel %vm1721, %v3134, 0
    %v3140 = vsel %vm1721, %v3135, 0
    %3142 = vmatpush.msra.mxu0 0.0
    %3143 = vmatpush.msra.mxu0 0.0
    %3144 = vmatpush.msra.mxu0 0.0
    %3145 = vmatpush.msra.mxu0 0.0
    %3146 = vmatpush.msra.mxu0 0.0
    %3147 = vmatpush.msra.mxu0 0.0
    %3148 = vmatpush.msra.mxu0 0.0
    %3149 = vmatpush.msra.mxu0 0.0
    %3150 = vmatpush.msra.mxu0 0.0
    %3151 = vmatpush.msra.mxu0 0.0
    %3152 = vmatpush.msra.mxu0 0.0
    %3153 = vmatpush.msra.mxu0 0.0
    %3154 = vmatpush.msra.mxu0 0.0
    %3155 = vmatpush.msra.mxu0 0.0
    %3156 = vmatpush.msra.mxu0 0.0
    %3157 = vmatpush.msra.mxu0 %v1729
    %3158 = vmatmul.f32.gmra.mxu0 %v3137
    %v3159 = vpop.f32.mrf.mxu0
    %v3160 = vadd.f32 0.0, %v3159
    %3161 = vmatmul.f32.gmra.mxu0 %v3140
    %v3162 = vpop.f32.mrf.mxu0
    %v3163 = vadd.f32 0.0, %v3162
    %3164 = vdwg.mxu0
    %v3165 = vmul.f32 %v3160, %v3015
    %v3166 = vmul.f32 %v3163, %v3018
    %v3167 = vadd.f32 %v3165, %v3166
    %s3168 = scalar_lea.vmem %s17, 192
    %v3169 = vld [vmem:[%s3168] sm:$0xff]
    %v3170 = vld [vmem:[%s3168 + $0x8] sm:$0xff]
    %v3171 = vld [vmem:[%s3168 + $0x10] sm:$0xff]
    %v3172 = vld [vmem:[%s3168 + $0x18] sm:$0xff]
    %v3173 = vld [vmem:[%s3168 + $0x20] sm:$0xff]
    %v3174 = vld [vmem:[%s3168 + $0x28] sm:$0xff]
    %v3175 = vld [vmem:[%s3168 + $0x30] sm:$0xff]
    %v3176 = vld [vmem:[%s3168 + $0x38] sm:$0xff]
    %s3177 = scalar_lea.vmem [#allocation18], 3
    %v3178 = vld [vmem:[%s3177] sm:$0x1]
    %v3180 = vperm.slane %v3178, 0
    %v3183 = vsel %vm1521, %v3093, 0
    %v3186 = vsel %vm1521, %v3167, 0
    %3188 = vmatpush.msra.mxu0 0.0
    %3189 = vmatpush.msra.mxu0 0.0
    %3190 = vmatpush.msra.mxu0 0.0
    %3191 = vmatpush.msra.mxu0 0.0
    %3192 = vmatpush.msra.mxu0 0.0
    %3193 = vmatpush.msra.mxu0 0.0
    %3194 = vmatpush.msra.mxu0 0.0
    %3195 = vmatpush.msra.mxu0 0.0
    %3196 = vmatpush.msra.mxu0 %v3176
    %3197 = vmatpush.msra.mxu0 %v3175
    %3198 = vmatpush.msra.mxu0 %v3174
    %3199 = vmatpush.msra.mxu0 %v3173
    %3200 = vmatpush.msra.mxu0 %v3172
    %3201 = vmatpush.msra.mxu0 %v3171
    %3202 = vmatpush.msra.mxu0 %v3170
    %3203 = vmatpush.msra.mxu0 %v3169
    %3204 = vmatmul.f32.gmra.mxu0 %v3183
    %v3205 = vpop.f32.mrf.mxu0
    %v3206 = vadd.f32 %v3180, %v3205
    %3207 = vmatmul.f32.gmra.mxu0 %v3186
    %v3208 = vpop.f32.mrf.mxu0
    %v3209 = vadd.f32 %v3180, %v3208
    %3210 = vdwg.mxu0
    %v3211 = vadd.f32 %v2855, %v3206
    %v3212 = vadd.f32 %v2856, %v3209
    %v3213 = vsel %vm1521, %v3211, 0.0
    %3214 = vadd.xlane.f32.xlu0 %v3213
    %v3215 = vpop.xlane.xlu0 %3214
    %v3216 = vsel %vm1521, %v3212, 0.0
    %3217 = vadd.xlane.f32.xlu0 %v3216
    %v3218 = vpop.xlane.xlu0 %3217
    %v3219 = vmul.f32 %v3215, %v380
    %v3220 = vmul.f32 %v3218, %v380
    %v3221 = vsub.f32 %v3211, %v3219
    %v3222 = vsub.f32 %v3212, %v3220
    %v3223 = vmul.f32 %v3221, %v3221
    %v3224 = vmul.f32 %v3222, %v3222
    %v3225 = vsel %vm1521, %v3223, 0.0
    %3226 = vadd.xlane.f32.xlu0 %v3225
    %v3227 = vpop.xlane.xlu0 %3226
    %v3228 = vsel %vm1521, %v3224, 0.0
    %3229 = vadd.xlane.f32.xlu0 %v3228
    %v3230 = vpop.xlane.xlu0 %3229
    %v3231 = vmul.f32 %v3227, %v380
    %v3232 = vmul.f32 %v3230, %v380
    %v3233 = vadd.f32 %v3231, 1e-05
    %v3234 = vadd.f32 %v3232, 1e-05
    %v3235 = vrsqrt.pop %v3233
    %v3236 = vmul.f32 %v3235, %v3233
    %v3237 = vmul.f32 %v3236, %v3235
    %v3238 = vmul.f32 0.5, %v3237
    %v3239 = vsub.f32 1.5, %v3238
    %v3240 = vmul.f32 %v3235, %v3239
    %vm3241 = vweird.f32 %v3233
    %vm3242 = vweird.f32 %v3235
    %vm3243 = vmor %vm3241, %vm3242
    %v3244 = vsel %vm3243, %v3235, %v3240
    %v3245 = vrsqrt.pop %v3234
    %v3246 = vmul.f32 %v3245, %v3234
    %v3247 = vmul.f32 %v3246, %v3245
    %v3248 = vmul.f32 0.5, %v3247
    %v3249 = vsub.f32 1.5, %v3248
    %v3250 = vmul.f32 %v3245, %v3249
    %vm3251 = vweird.f32 %v3234
    %vm3252 = vweird.f32 %v3245
    %vm3253 = vmor %vm3251, %vm3252
    %v3254 = vsel %vm3253, %v3245, %v3250
    %v3255 = vmul.f32 %v3221, %v3244
    %v3256 = vmul.f32 %v3222, %v3254
    %s3257 = scalar_lea.vmem %s19, 192
    %v3258 = vld [vmem:[%s3257] sm:$0xff]
    %v3259 = vld [vmem:[%s3257 + $0x8] sm:$0xff]
    %v3260 = vld [vmem:[%s3257 + $0x10] sm:$0xff]
    %v3261 = vld [vmem:[%s3257 + $0x18] sm:$0xff]
    %v3262 = vld [vmem:[%s3257 + $0x20] sm:$0xff]
    %v3263 = vld [vmem:[%s3257 + $0x28] sm:$0xff]
    %v3264 = vld [vmem:[%s3257 + $0x30] sm:$0xff]
    %v3265 = vld [vmem:[%s3257 + $0x38] sm:$0xff]
    %s3266 = scalar_lea.vmem [#allocation20], 3
    %v3267 = vld [vmem:[%s3266] sm:$0x1]
    %v3269 = vperm.slane %v3267, 0
    %v3272 = vsel %vm1521, %v3255, 0
    %v3275 = vsel %vm1521, %v3256, 0
    %3277 = vmatpush.msra.mxu0 0.0
    %3278 = vmatpush.msra.mxu0 0.0
    %3279 = vmatpush.msra.mxu0 0.0
    %3280 = vmatpush.msra.mxu0 0.0
    %3281 = vmatpush.msra.mxu0 0.0
    %3282 = vmatpush.msra.mxu0 0.0
    %3283 = vmatpush.msra.mxu0 0.0
    %3284 = vmatpush.msra.mxu0 0.0
    %3285 = vmatpush.msra.mxu0 %v3265
    %3286 = vmatpush.msra.mxu0 %v3264
    %3287 = vmatpush.msra.mxu0 %v3263
    %3288 = vmatpush.msra.mxu0 %v3262
    %3289 = vmatpush.msra.mxu0 %v3261
    %3290 = vmatpush.msra.mxu0 %v3260
    %3291 = vmatpush.msra.mxu0 %v3259
    %3292 = vmatpush.msra.mxu0 %v3258
    %3293 = vmatmul.f32.gmra.mxu0 %v3272
    %v3294 = vpop.f32.mrf.mxu0
    %v3295 = vadd.f32 %v3269, %v3294
    %3296 = vmatmul.f32.gmra.mxu0 %v3275
    %v3297 = vpop.f32.mrf.mxu0
    %v3298 = vadd.f32 %v3269, %v3297
    %3299 = vdwg.mxu0
    %v3300 = vmax.f32 %v3295, 0.0
    %v3301 = vmax.f32 %v3298, 0.0
    %v3302 = vadd.f32 %v3300, %v2855
    %v3303 = vadd.f32 %v3301, %v2856
    %v3304 = vld [vmem:[#allocation23] sm:$0xff]
    %v3305 = vld [vmem:[#allocation23 + $0x8] sm:$0xff]
    %v3306 = vld [vmem:[#allocation23 + $0x10] sm:$0xff]
    %v3307 = vld [vmem:[#allocation23 + $0x18] sm:$0xff]
    %v3308 = vld [vmem:[#allocation23 + $0x20] sm:$0xff]
    %v3309 = vld [vmem:[#allocation23 + $0x28] sm:$0xff]
    %v3310 = vld [vmem:[#allocation23 + $0x30] sm:$0xff]
    %v3311 = vld [vmem:[#allocation23 + $0x38] sm:$0xff]
    %v3312 = vld [vmem:[#allocation23 + $0x40] sm:$0xff]
    %v3313 = vld [vmem:[#allocation23 + $0x48] sm:$0xff]
    %v3314 = vld [vmem:[#allocation23 + $0x50] sm:$0xff]
    %v3315 = vld [vmem:[#allocation23 + $0x58] sm:$0xff]
    %v3316 = vld [vmem:[#allocation23 + $0x60] sm:$0xff]
    %v3317 = vld [vmem:[#allocation23 + $0x68] sm:$0xff]
    %v3318 = vld [vmem:[#allocation23 + $0x70] sm:$0xff]
    %v3319 = vld [vmem:[#allocation23 + $0x78] sm:$0xff]
    %v3320 = vld [vmem:[#allocation24] sm:$0x1]
    %v3322 = vperm.slane %v3320, 0
    %3324 = vmatpush.msra.mxu0 %v3319
    %3325 = vmatpush.msra.mxu0 %v3318
    %3326 = vmatpush.msra.mxu0 %v3317
    %3327 = vmatpush.msra.mxu0 %v3316
    %3328 = vmatpush.msra.mxu0 %v3315
    %3329 = vmatpush.msra.mxu0 %v3314
    %3330 = vmatpush.msra.mxu0 %v3313
    %3331 = vmatpush.msra.mxu0 %v3312
    %3332 = vmatpush.msra.mxu0 %v3311
    %3333 = vmatpush.msra.mxu0 %v3310
    %3334 = vmatpush.msra.mxu0 %v3309
    %3335 = vmatpush.msra.mxu0 %v3308
    %3336 = vmatpush.msra.mxu0 %v3307
    %3337 = vmatpush.msra.mxu0 %v3306
    %3338 = vmatpush.msra.mxu0 %v3305
    %3339 = vmatpush.msra.mxu0 %v3304
    %3340 = vmatmul.f32.gmra.mxu0 %v1120
    %v3341 = vpop.f32.mrf.mxu0
    %v3342 = vadd.f32 %v3322, %v3341
    %3343 = vdwg.mxu0
    %v3344 = vld [vmem:[#allocation14] sm:$0xff]
    %v3345 = vld [vmem:[#allocation14 + $0x8] sm:$0xff]
    %v3347 = vsel %vm455, %v3344, 0
    %v3350 = vsel %vm455, %v3345, 0
    %3352 = vmatpush.msra.mxu0 0.0
    %3353 = vmatpush.msra.mxu0 0.0
    %3354 = vmatpush.msra.mxu0 0.0
    %3355 = vmatpush.msra.mxu0 0.0
    %3356 = vmatpush.msra.mxu0 0.0
    %3357 = vmatpush.msra.mxu0 0.0
    %3358 = vmatpush.msra.mxu0 0.0
    %3359 = vmatpush.msra.mxu0 0.0
    %3360 = vmatpush.msra.mxu0 0.0
    %3361 = vmatpush.msra.mxu0 0.0
    %3362 = vmatpush.msra.mxu0 0.0
    %3363 = vmatpush.msra.mxu0 0.0
    %3364 = vmatpush.msra.mxu0 0.0
    %3365 = vmatpush.msra.mxu0 0.0
    %3366 = vmatpush.msra.mxu0 %v3303
    %3367 = vmatpush.msra.mxu0 %v3302
    %3368 = vmatmul.f32.gmra.mxu0 %v3347
    %v3369 = vpop.f32.mrf.mxu0
    %v3370 = vadd.f32 0.0, %v3369
    %3371 = vmatmul.f32.gmra.mxu0 %v3350
    %v3372 = vpop.f32.mrf.mxu0
    %v3373 = vadd.f32 0.0, %v3372
    %3374 = vdwg.mxu0
    %v3375 = vld [vmem:[%s24] sm:$0xff]
    %v3376 = vld [vmem:[%s24 + $0x8] sm:$0xff]
    %v3377 = vld [vmem:[%s24 + $0x10] sm:$0xff]
    %v3378 = vld [vmem:[%s24 + $0x18] sm:$0xff]
    %v3379 = vld [vmem:[%s24 + $0x20] sm:$0xff]
    %v3380 = vld [vmem:[%s24 + $0x28] sm:$0xff]
    %v3381 = vld [vmem:[%s24 + $0x30] sm:$0xff]
    %v3382 = vld [vmem:[%s24 + $0x38] sm:$0xff]
    %v3384 = vsel %vm1521, %v3370, 0
    %3386 = vmatpush.msra.mxu0 0.0
    %3387 = vmatpush.msra.mxu0 0.0
    %3388 = vmatpush.msra.mxu0 0.0
    %3389 = vmatpush.msra.mxu0 0.0
    %3390 = vmatpush.msra.mxu0 0.0
    %3391 = vmatpush.msra.mxu0 0.0
    %3392 = vmatpush.msra.mxu0 0.0
    %3393 = vmatpush.msra.mxu0 0.0
    %3394 = vmatpush.msra.mxu0 %v3382
    %3395 = vmatpush.msra.mxu0 %v3381
    %3396 = vmatpush.msra.mxu0 %v3380
    %3397 = vmatpush.msra.mxu0 %v3379
    %3398 = vmatpush.msra.mxu0 %v3378
    %3399 = vmatpush.msra.mxu0 %v3377
    %3400 = vmatpush.msra.mxu0 %v3376
    %3401 = vmatpush.msra.mxu0 %v3375
    %3402 = vmatmul.f32.gmra.mxu0 %v3384
    %v3403 = vpop.f32.mrf.mxu0
    %v3404 = vadd.f32 0.0, %v3403
    %3405 = vdwg.mxu0
    %v3406 = vadd.f32 %v3342, %v3404
    %s3407 = scalar_lea.vmem %s24, 64
    %v3408 = vld [vmem:[%s3407] sm:$0xff]
    %v3409 = vld [vmem:[%s3407 + $0x8] sm:$0xff]
    %v3410 = vld [vmem:[%s3407 + $0x10] sm:$0xff]
    %v3411 = vld [vmem:[%s3407 + $0x18] sm:$0xff]
    %v3412 = vld [vmem:[%s3407 + $0x20] sm:$0xff]
    %v3413 = vld [vmem:[%s3407 + $0x28] sm:$0xff]
    %v3414 = vld [vmem:[%s3407 + $0x30] sm:$0xff]
    %v3415 = vld [vmem:[%s3407 + $0x38] sm:$0xff]
    %v3416 = vrot.slane %v3370, 2
    %v3417 = vsel %vm1521, %v3416, 0
    %3419 = vmatpush.msra.mxu0 0.0
    %3420 = vmatpush.msra.mxu0 0.0
    %3421 = vmatpush.msra.mxu0 0.0
    %3422 = vmatpush.msra.mxu0 0.0
    %3423 = vmatpush.msra.mxu0 0.0
    %3424 = vmatpush.msra.mxu0 0.0
    %3425 = vmatpush.msra.mxu0 0.0
    %3426 = vmatpush.msra.mxu0 0.0
    %3427 = vmatpush.msra.mxu0 %v3415
    %3428 = vmatpush.msra.mxu0 %v3414
    %3429 = vmatpush.msra.mxu0 %v3413
    %3430 = vmatpush.msra.mxu0 %v3412
    %3431 = vmatpush.msra.mxu0 %v3411
    %3432 = vmatpush.msra.mxu0 %v3410
    %3433 = vmatpush.msra.mxu0 %v3409
    %3434 = vmatpush.msra.mxu0 %v3408
    %3435 = vmatmul.f32.gmra.mxu0 %v3417
    %v3436 = vpop.f32.mrf.mxu0
    %v3437 = vadd.f32 0.0, %v3436
    %3438 = vdwg.mxu0
    %v3439 = vadd.f32 %v3406, %v3437
    %s3440 = scalar_lea.vmem %s24, 128
    %v3441 = vld [vmem:[%s3440] sm:$0xff]
    %v3442 = vld [vmem:[%s3440 + $0x8] sm:$0xff]
    %v3443 = vld [vmem:[%s3440 + $0x10] sm:$0xff]
    %v3444 = vld [vmem:[%s3440 + $0x18] sm:$0xff]
    %v3445 = vld [vmem:[%s3440 + $0x20] sm:$0xff]
    %v3446 = vld [vmem:[%s3440 + $0x28] sm:$0xff]
    %v3447 = vld [vmem:[%s3440 + $0x30] sm:$0xff]
    %v3448 = vld [vmem:[%s3440 + $0x38] sm:$0xff]
    %v3449 = vrot.slane %v3370, 4
    %v3450 = vsel %vm1521, %v3449, 0
    %3452 = vmatpush.msra.mxu0 0.0
    %3453 = vmatpush.msra.mxu0 0.0
    %3454 = vmatpush.msra.mxu0 0.0
    %3455 = vmatpush.msra.mxu0 0.0
    %3456 = vmatpush.msra.mxu0 0.0
    %3457 = vmatpush.msra.mxu0 0.0
    %3458 = vmatpush.msra.mxu0 0.0
    %3459 = vmatpush.msra.mxu0 0.0
    %3460 = vmatpush.msra.mxu0 %v3448
    %3461 = vmatpush.msra.mxu0 %v3447
    %3462 = vmatpush.msra.mxu0 %v3446
    %3463 = vmatpush.msra.mxu0 %v3445
    %3464 = vmatpush.msra.mxu0 %v3444
    %3465 = vmatpush.msra.mxu0 %v3443
    %3466 = vmatpush.msra.mxu0 %v3442
    %3467 = vmatpush.msra.mxu0 %v3441
    %3468 = vmatmul.f32.gmra.mxu0 %v3450
    %v3469 = vpop.f32.mrf.mxu0
    %v3470 = vadd.f32 0.0, %v3469
    %3471 = vdwg.mxu0
    %v3472 = vadd.f32 %v3439, %v3470
    %s3473 = scalar_lea.vmem %s24, 192
    %v3474 = vld [vmem:[%s3473] sm:$0xff]
    %v3475 = vld [vmem:[%s3473 + $0x8] sm:$0xff]
    %v3476 = vld [vmem:[%s3473 + $0x10] sm:$0xff]
    %v3477 = vld [vmem:[%s3473 + $0x18] sm:$0xff]
    %v3478 = vld [vmem:[%s3473 + $0x20] sm:$0xff]
    %v3479 = vld [vmem:[%s3473 + $0x28] sm:$0xff]
    %v3480 = vld [vmem:[%s3473 + $0x30] sm:$0xff]
    %v3481 = vld [vmem:[%s3473 + $0x38] sm:$0xff]
    %v3482 = vrot.slane %v3370, 6
    %v3483 = vsel %vm1521, %v3482, 0
    %3485 = vmatpush.msra.mxu0 0.0
    %3486 = vmatpush.msra.mxu0 0.0
    %3487 = vmatpush.msra.mxu0 0.0
    %3488 = vmatpush.msra.mxu0 0.0
    %3489 = vmatpush.msra.mxu0 0.0
    %3490 = vmatpush.msra.mxu0 0.0
    %3491 = vmatpush.msra.mxu0 0.0
    %3492 = vmatpush.msra.mxu0 0.0
    %3493 = vmatpush.msra.mxu0 %v3481
    %3494 = vmatpush.msra.mxu0 %v3480
    %3495 = vmatpush.msra.mxu0 %v3479
    %3496 = vmatpush.msra.mxu0 %v3478
    %3497 = vmatpush.msra.mxu0 %v3477
    %3498 = vmatpush.msra.mxu0 %v3476
    %3499 = vmatpush.msra.mxu0 %v3475
    %3500 = vmatpush.msra.mxu0 %v3474
    %3501 = vmatmul.f32.gmra.mxu0 %v3483
    %v3502 = vpop.f32.mrf.mxu0
    %v3503 = vadd.f32 0.0, %v3502
    %3504 = vdwg.mxu0
    %v3505 = vadd.f32 %v3472, %v3503
    %s3506 = scalar_lea.vmem %s24, 256
    %v3507 = vld [vmem:[%s3506] sm:$0xff]
    %v3508 = vld [vmem:[%s3506 + $0x8] sm:$0xff]
    %v3509 = vld [vmem:[%s3506 + $0x10] sm:$0xff]
    %v3510 = vld [vmem:[%s3506 + $0x18] sm:$0xff]
    %v3511 = vld [vmem:[%s3506 + $0x20] sm:$0xff]
    %v3512 = vld [vmem:[%s3506 + $0x28] sm:$0xff]
    %v3513 = vld [vmem:[%s3506 + $0x30] sm:$0xff]
    %v3514 = vld [vmem:[%s3506 + $0x38] sm:$0xff]
    %v3516 = vsel %vm1521, %v3373, 0
    %3518 = vmatpush.msra.mxu0 0.0
    %3519 = vmatpush.msra.mxu0 0.0
    %3520 = vmatpush.msra.mxu0 0.0
    %3521 = vmatpush.msra.mxu0 0.0
    %3522 = vmatpush.msra.mxu0 0.0
    %3523 = vmatpush.msra.mxu0 0.0
    %3524 = vmatpush.msra.mxu0 0.0
    %3525 = vmatpush.msra.mxu0 0.0
    %3526 = vmatpush.msra.mxu0 %v3514
    %3527 = vmatpush.msra.mxu0 %v3513
    %3528 = vmatpush.msra.mxu0 %v3512
    %3529 = vmatpush.msra.mxu0 %v3511
    %3530 = vmatpush.msra.mxu0 %v3510
    %3531 = vmatpush.msra.mxu0 %v3509
    %3532 = vmatpush.msra.mxu0 %v3508
    %3533 = vmatpush.msra.mxu0 %v3507
    %3534 = vmatmul.f32.gmra.mxu0 %v3516
    %v3535 = vpop.f32.mrf.mxu0
    %v3536 = vadd.f32 0.0, %v3535
    %3537 = vdwg.mxu0
    %v3538 = vadd.f32 %v3505, %v3536
    %s3539 = scalar_lea.vmem %s24, 320
    %v3540 = vld [vmem:[%s3539] sm:$0xff]
    %v3541 = vld [vmem:[%s3539 + $0x8] sm:$0xff]
    %v3542 = vld [vmem:[%s3539 + $0x10] sm:$0xff]
    %v3543 = vld [vmem:[%s3539 + $0x18] sm:$0xff]
    %v3544 = vld [vmem:[%s3539 + $0x20] sm:$0xff]
    %v3545 = vld [vmem:[%s3539 + $0x28] sm:$0xff]
    %v3546 = vld [vmem:[%s3539 + $0x30] sm:$0xff]
    %v3547 = vld [vmem:[%s3539 + $0x38] sm:$0xff]
    %v3548 = vrot.slane %v3373, 2
    %v3549 = vsel %vm1521, %v3548, 0
    %3551 = vmatpush.msra.mxu0 0.0
    %3552 = vmatpush.msra.mxu0 0.0
    %3553 = vmatpush.msra.mxu0 0.0
    %3554 = vmatpush.msra.mxu0 0.0
    %3555 = vmatpush.msra.mxu0 0.0
    %3556 = vmatpush.msra.mxu0 0.0
    %3557 = vmatpush.msra.mxu0 0.0
    %3558 = vmatpush.msra.mxu0 0.0
    %3559 = vmatpush.msra.mxu0 %v3547
    %3560 = vmatpush.msra.mxu0 %v3546
    %3561 = vmatpush.msra.mxu0 %v3545
    %3562 = vmatpush.msra.mxu0 %v3544
    %3563 = vmatpush.msra.mxu0 %v3543
    %3564 = vmatpush.msra.mxu0 %v3542
    %3565 = vmatpush.msra.mxu0 %v3541
    %3566 = vmatpush.msra.mxu0 %v3540
    %3567 = vmatmul.f32.gmra.mxu0 %v3549
    %v3568 = vpop.f32.mrf.mxu0
    %v3569 = vadd.f32 0.0, %v3568
    %3570 = vdwg.mxu0
    %v3571 = vadd.f32 %v3538, %v3569
    %s3572 = scalar_lea.vmem %s24, 384
    %v3573 = vld [vmem:[%s3572] sm:$0xff]
    %v3574 = vld [vmem:[%s3572 + $0x8] sm:$0xff]
    %v3575 = vld [vmem:[%s3572 + $0x10] sm:$0xff]
    %v3576 = vld [vmem:[%s3572 + $0x18] sm:$0xff]
    %v3577 = vld [vmem:[%s3572 + $0x20] sm:$0xff]
    %v3578 = vld [vmem:[%s3572 + $0x28] sm:$0xff]
    %v3579 = vld [vmem:[%s3572 + $0x30] sm:$0xff]
    %v3580 = vld [vmem:[%s3572 + $0x38] sm:$0xff]
    %v3581 = vrot.slane %v3373, 4
    %v3582 = vsel %vm1521, %v3581, 0
    %3584 = vmatpush.msra.mxu0 0.0
    %3585 = vmatpush.msra.mxu0 0.0
    %3586 = vmatpush.msra.mxu0 0.0
    %3587 = vmatpush.msra.mxu0 0.0
    %3588 = vmatpush.msra.mxu0 0.0
    %3589 = vmatpush.msra.mxu0 0.0
    %3590 = vmatpush.msra.mxu0 0.0
    %3591 = vmatpush.msra.mxu0 0.0
    %3592 = vmatpush.msra.mxu0 %v3580
    %3593 = vmatpush.msra.mxu0 %v3579
    %3594 = vmatpush.msra.mxu0 %v3578
    %3595 = vmatpush.msra.mxu0 %v3577
    %3596 = vmatpush.msra.mxu0 %v3576
    %3597 = vmatpush.msra.mxu0 %v3575
    %3598 = vmatpush.msra.mxu0 %v3574
    %3599 = vmatpush.msra.mxu0 %v3573
    %3600 = vmatmul.f32.gmra.mxu0 %v3582
    %v3601 = vpop.f32.mrf.mxu0
    %v3602 = vadd.f32 0.0, %v3601
    %3603 = vdwg.mxu0
    %v3604 = vadd.f32 %v3571, %v3602
    %s3605 = scalar_lea.vmem %s24, 448
    %v3606 = vld [vmem:[%s3605] sm:$0xff]
    %v3607 = vld [vmem:[%s3605 + $0x8] sm:$0xff]
    %v3608 = vld [vmem:[%s3605 + $0x10] sm:$0xff]
    %v3609 = vld [vmem:[%s3605 + $0x18] sm:$0xff]
    %v3610 = vld [vmem:[%s3605 + $0x20] sm:$0xff]
    %v3611 = vld [vmem:[%s3605 + $0x28] sm:$0xff]
    %v3612 = vld [vmem:[%s3605 + $0x30] sm:$0xff]
    %v3613 = vld [vmem:[%s3605 + $0x38] sm:$0xff]
    %v3614 = vrot.slane %v3373, 6
    %v3615 = vsel %vm1521, %v3614, 0
    %3617 = vmatpush.msra.mxu0 0.0
    %3618 = vmatpush.msra.mxu0 0.0
    %3619 = vmatpush.msra.mxu0 0.0
    %3620 = vmatpush.msra.mxu0 0.0
    %3621 = vmatpush.msra.mxu0 0.0
    %3622 = vmatpush.msra.mxu0 0.0
    %3623 = vmatpush.msra.mxu0 0.0
    %3624 = vmatpush.msra.mxu0 0.0
    %3625 = vmatpush.msra.mxu0 %v3613
    %3626 = vmatpush.msra.mxu0 %v3612
    %3627 = vmatpush.msra.mxu0 %v3611
    %3628 = vmatpush.msra.mxu0 %v3610
    %3629 = vmatpush.msra.mxu0 %v3609
    %3630 = vmatpush.msra.mxu0 %v3608
    %3631 = vmatpush.msra.mxu0 %v3607
    %3632 = vmatpush.msra.mxu0 %v3606
    %3633 = vmatmul.f32.gmra.mxu0 %v3615
    %v3634 = vpop.f32.mrf.mxu0
    %v3635 = vadd.f32 0.0, %v3634
    %3636 = vdwg.mxu0
    %v3637 = vadd.f32 %v3604, %v3635
    %v3638 = vmax.f32 %v3637, 0.0
    %v3639 = vld [vmem:[%s26] sm:$0xff]
    %v3640 = vld [vmem:[%s26 + $0x8] sm:$0xff]
    %v3641 = vld [vmem:[%s26 + $0x10] sm:$0xff]
    %v3642 = vld [vmem:[%s26 + $0x18] sm:$0xff]
    %v3643 = vld [vmem:[%s26 + $0x20] sm:$0xff]
    %v3644 = vld [vmem:[%s26 + $0x28] sm:$0xff]
    %v3645 = vld [vmem:[%s26 + $0x30] sm:$0xff]
    %v3646 = vld [vmem:[%s26 + $0x38] sm:$0xff]
    %v3647 = vld [vmem:[%s26 + $0x40] sm:$0xff]
    %v3648 = vld [vmem:[%s26 + $0x48] sm:$0xff]
    %v3649 = vld [vmem:[%s26 + $0x50] sm:$0xff]
    %v3650 = vld [vmem:[%s26 + $0x58] sm:$0xff]
    %v3651 = vld [vmem:[%s26 + $0x60] sm:$0xff]
    %v3652 = vld [vmem:[%s26 + $0x68] sm:$0xff]
    %v3653 = vld [vmem:[%s26 + $0x70] sm:$0xff]
    %v3654 = vld [vmem:[%s26 + $0x78] sm:$0xff]
    %v3655 = vld [vmem:[#allocation26] sm:$0x1]
    %v3657 = vperm.slane %v3655, 0
    %3659 = vmatpush.msra.mxu0 %v3654
    %3660 = vmatpush.msra.mxu0 %v3653
    %3661 = vmatpush.msra.mxu0 %v3652
    %3662 = vmatpush.msra.mxu0 %v3651
    %3663 = vmatpush.msra.mxu0 %v3650
    %3664 = vmatpush.msra.mxu0 %v3649
    %3665 = vmatpush.msra.mxu0 %v3648
    %3666 = vmatpush.msra.mxu0 %v3647
    %3667 = vmatpush.msra.mxu0 %v3646
    %3668 = vmatpush.msra.mxu0 %v3645
    %3669 = vmatpush.msra.mxu0 %v3644
    %3670 = vmatpush.msra.mxu0 %v3643
    %3671 = vmatpush.msra.mxu0 %v3642
    %3672 = vmatpush.msra.mxu0 %v3641
    %3673 = vmatpush.msra.mxu0 %v3640
    %3674 = vmatpush.msra.mxu0 %v3639
    %3675 = vmatmul.f32.gmra.mxu0 %v3638
    %v3676 = vpop.f32.mrf.mxu0
    %v3677 = vadd.f32 %v3657, %v3676
    %3678 = vdwg.mxu0
    %vm3679 = vcmask 25600
    %3680 = vst.msk [vmem:[#allocation27] sm:$0x3] %vm3679, %v3677
    // Predicated region
    $region174: #{hybrid_forward.1} parent=1 // pred_check
      _
    $region175: #{hybrid_forward.1} parent=1 // pred_check_branch
      %3682 = sbr.rel (0) target = $region177
    $region176: #{hybrid_forward.1} parent=1 // pred_region
      %3684 = vsyncadd [#allocation5], 0
      %s3686 = sshll.u32 [#allocation27], 4
      %s3687 = int_to_ptr.vmem [resolvable:$true] %s3686
      %s3688 = sshll.u32 %s28, 4
      %s3689 = int_to_ptr.hbm [resolvable:$true] %s3688
      %3691 = dma.vmem_to_hbm [thread:$0]  %s3687, 32, %s3689, [#allocation5]
    $region177: #{hybrid_forward.1} parent=1 // pred_fallthru
      _
    // Predicated region
    $region178: #{hybrid_forward.1} parent=1 // pred_check
      _
    $region179: #{hybrid_forward.1} parent=1 // pred_check_branch
      %3693 = sbr.rel (0) target = $region181
    $region180: #{hybrid_forward.1} parent=1 // pred_region
      %3695 = dma.done [#allocation5], 32
    $region181: #{hybrid_forward.1} parent=1 // pred_fallthru
      _
    %3696 = vsyncpa [#allocation4], 1
    %3697 = vsyncpa [#allocation7], 1
    %3698 = vsyncpa [#allocation10], 1
    %3699 = vsyncpa [#allocation13], 1
    %3700 = vsyncpa [#allocation16], 1
    %3701 = vsyncpa [#allocation19], 1
    %3702 = vsyncpa [#allocation22], 1
    %3703 = vsyncpa [#allocation25], 1
    %3704 = vsyncpa [#allocation5], 1

</llo_original>
